<compile_context>
chip_gen: v6e
topology: v6e:2x2x1
jax: 0.10.0
libtpu: 0.0.40
codegen_flags: <defaults>
</compile_context>

<pallas_src>
import jax
import jax.numpy as jnp
import numpy as np
from jax.experimental import pallas as pl
from jax.experimental.pallas import tpu as pltpu

# ---- problem sizes: DilationBlock(in=4, out=8, k=7, stride=4, dilation=2, 'LeakyReLU') ----
B = 2          # batch
CIN = 4        # in_filters
COUT = 8       # out_filters
CP = 8         # input channels padded to COUT so all matmuls share (8, 8) weights
K = 7          # kernel_size
STRIDE = 4     # stride
DIL = 2        # dilation
L = 16         # input length

P1 = (K - 1) // 2                 # padding of the strided convs (branch1, branch2 conv b)
P2 = DIL * (K - 1) // 2           # padding of the dilated conv (branch2 conv a)
LPAD2 = L + 2 * P2                # padded input length per batch element (= 28)
L_OUT = (L + 2 * P1 - (K - 1) - 1) // STRIDE + 1   # strided-conv output length (= 4)
L_FULL = L + 2 * P1 - (K - 1)                      # stride-1 output length (= 16)
L_MID = L + 2 * P2 - DIL * (K - 1)                 # dilated conv output length (= 16)
NEG_SLOPE = 0.01                  # nn.LeakyReLU default


def _leaky(x):
    return jnp.where(x >= 0, x, NEG_SLOPE * x)


def _dilation_block_kernel(x_ref, w_ref, b_ref, o_ref):
    # x_ref: (B * LPAD2, CP)  -- both batch elements stacked on sublanes,
    #                            each individually zero-padded by P2 in length
    #                            and zero-padded to CP channels.
    # w_ref: (3, K, CP, COUT) -- [w1, w2a, w2b], Cin zero-padded to CP.
    # b_ref: (3, 1, COUT)
    # o_ref: (B * L_OUT, COUT)

    # One-hot decimation matrix: picks stride-1 rows 0, STRIDE, 2*STRIDE, ...
    row = jax.lax.broadcasted_iota(jnp.int32, (L_OUT, L_FULL), 0)
    col = jax.lax.broadcasted_iota(jnp.int32, (L_OUT, L_FULL), 1)
    sel = (col == row * STRIDE).astype(jnp.float32)          # (L_OUT, L_FULL)

    outs = []
    for b in range(B):                                        # static unroll (B=2)
        base = b * LPAD2

        # ---- branch1: Conv1d(CIN->COUT, k=K, stride=STRIDE, pad=P1) + LeakyReLU ----
        # evaluated at stride 1 over L_FULL rows (same MXU cost), decimated below.
        acc1 = jnp.zeros((L_FULL, COUT), jnp.float32)
        for t in range(K):
            xs = x_ref[pl.ds(base + (P2 - P1) + t, L_FULL), :]       # (L_FULL, CP)
            acc1 = acc1 + jnp.dot(xs, w_ref[0, t],
                                  preferred_element_type=jnp.float32)
        x1_full = _leaky(acc1 + b_ref[0])

        # ---- branch2 conv a: Conv1d(CIN->COUT, k=K, dilation=DIL, pad=P2) + LeakyReLU ----
        acc2 = jnp.zeros((L_MID, COUT), jnp.float32)
        for t in range(K):
            xs = x_ref[pl.ds(base + t * DIL, L_MID), :]              # (L_MID, CP)
            acc2 = acc2 + jnp.dot(xs, w_ref[1, t],
                                  preferred_element_type=jnp.float32)
        y = _leaky(acc2 + b_ref[1])                                  # (L_MID, COUT)

        # zero-pad y in registers (no VMEM scratch round trip)
        zpad = jnp.zeros((P1, COUT), jnp.float32)
        ypad = jnp.concatenate([zpad, y, zpad], axis=0)              # (L_MID+2*P1, COUT)

        # ---- branch2 conv b: Conv1d(COUT->COUT, k=K, stride=STRIDE, pad=P1) + LeakyReLU ----
        acc3 = jnp.zeros((L_FULL, COUT), jnp.float32)
        for t in range(K):
            acc3 = acc3 + jnp.dot(ypad[t:t + L_FULL, :], w_ref[2, t],
                                  preferred_element_type=jnp.float32)
        x2_full = _leaky(acc3 + b_ref[2])

        # ---- sum branches, decimate by STRIDE with the one-hot matmul ----
        outs.append(jnp.dot(sel, x1_full + x2_full,
                            preferred_element_type=jnp.float32))     # (L_OUT, COUT)

    o_ref[...] = jnp.concatenate(outs, axis=0).astype(o_ref.dtype)   # single full store


@jax.jit
def dilation_block(x, params):
    """x: (B, CIN, L) float32 (PyTorch NCL).  Returns (B, COUT, L_OUT)."""
    xt = jnp.transpose(x, (0, 2, 1))                                  # (B, L, CIN)
    # pad length by P2 on both sides and channels CIN -> CP with zeros
    xp = jnp.pad(xt, ((0, 0), (P2, P2), (0, CP - CIN)))               # (B, LPAD2, CP)
    x_packed = xp.reshape(B * LPAD2, CP)

    # PyTorch Conv1d weight (Cout, Cin, K) -> (K, Cin, Cout), pad Cin to CP
    w1 = jnp.pad(jnp.transpose(params["w1"], (2, 1, 0)), ((0, 0), (0, CP - CIN), (0, 0)))
    w2a = jnp.pad(jnp.transpose(params["w2a"], (2, 1, 0)), ((0, 0), (0, CP - CIN), (0, 0)))
    w2b = jnp.transpose(params["w2b"], (2, 1, 0))                     # (K, COUT, COUT)
    w_all = jnp.stack([w1, w2a, w2b], axis=0)                         # (3, K, CP, COUT)

    b_all = jnp.stack([params["b1"], params["b2a"], params["b2b"]], axis=0)
    b_all = b_all.reshape(3, 1, COUT)

    out2d = pl.pallas_call(
        _dilation_block_kernel,
        out_shape=jax.ShapeDtypeStruct((B * L_OUT, COUT), jnp.float32),
        in_specs=[
            pl.BlockSpec(memory_space=pltpu.MemorySpace.VMEM),
            pl.BlockSpec(memory_space=pltpu.MemorySpace.VMEM),
            pl.BlockSpec(memory_space=pltpu.MemorySpace.VMEM),
        ],
        out_specs=pl.BlockSpec(memory_space=pltpu.MemorySpace.VMEM),
    )(x_packed, w_all, b_all)

    out = out2d.reshape(B, L_OUT, COUT)
    return jnp.transpose(out, (0, 2, 1))                              # (B, COUT, L_OUT)


# ---------------- pure-JAX reference (mirrors torch.nn.Conv1d semantics) ----------------
def _ref_conv1d(x, w, b, stride, dilation, pad):
    out = jax.lax.conv_general_dilated(
        x, w, window_strides=(stride,), padding=[(pad, pad)],
        rhs_dilation=(dilation,), dimension_numbers=("NCH", "OIH", "NCH"),
        precision=jax.lax.Precision.HIGHEST)
    return out + b[None, :, None]


def ref_dilation_block(x, p):
    x1 = _leaky(_ref_conv1d(x, p["w1"], p["b1"], STRIDE, 1, P1))
    y = _leaky(_ref_conv1d(x, p["w2a"], p["b2a"], 1, DIL, P2))
    x2 = _leaky(_ref_conv1d(y, p["w2b"], p["b2b"], STRIDE, 1, P1))
    return x1 + x2


if __name__ == "__main__":
    key = jax.random.PRNGKey(0)
    kx, k1, k2, k3, k4, k5, k6 = jax.random.split(key, 7)

    x = jax.random.normal(kx, (B, CIN, L), jnp.float32)
    params = {
        "w1": 0.2 * jax.random.normal(k1, (COUT, CIN, K), jnp.float32),
        "b1": 0.1 * jax.random.normal(k2, (COUT,), jnp.float32),
        "w2a": 0.2 * jax.random.normal(k3, (COUT, CIN, K), jnp.float32),
        "b2a": 0.1 * jax.random.normal(k4, (COUT,), jnp.float32),
        "w2b": 0.2 * jax.random.normal(k5, (COUT, COUT, K), jnp.float32),
        "b2b": 0.1 * jax.random.normal(k6, (COUT,), jnp.float32),
    }

    out = jax.block_until_ready(dilation_block(x, params))
    ref = jax.block_until_ready(ref_dilation_block(x, params))

    assert out.shape == (B, COUT, L_OUT), out.shape
    np.testing.assert_allclose(np.asarray(out), np.asarray(ref), rtol=2e-2, atol=2e-2)
    print("KERNEL_OK")
</pallas_src>

<mosaic_0001>
module attributes {stable_mosaic.version = 11 : i64} {
  func.func @_dilation_block_kernel(%arg0: memref<56x8xf32, #tpu.memory_space<vmem>>, %arg1: memref<3x7x8x8xf32, #tpu.memory_space<vmem>>, %arg2: memref<3x1x8xf32, #tpu.memory_space<vmem>>, %arg3: memref<8x8xf32, #tpu.memory_space<vmem>>) attributes {dimension_semantics = [], scalar_prefetch = 0 : i64, scratch_operands = 0 : i64, tpu.core_type = #tpu.core_type<tc>} {
    %0 = tpu.iota {dimensions = array<i32: 0>} : vector<4x16xi32>
    %1 = tpu.iota {dimensions = array<i32: 1>} : vector<4x16xi32>
    %c4_i32 = arith.constant 4 : i32
    %2 = vector.broadcast %c4_i32 : i32 to vector<4x16xi32>
    %3 = arith.muli %0, %2 : vector<4x16xi32>
    %4 = arith.cmpi eq, %1, %3 : vector<4x16xi32>
    %5 = arith.extui %4 : vector<4x16xi1> to vector<4x16xi32>
    %6 = arith.sitofp %5 : vector<4x16xi32> to vector<4x16xf32>
    %cst = arith.constant 0.000000e+00 : f32
    %7 = vector.broadcast %cst : f32 to vector<16x8xf32>
    %c3 = arith.constant 3 : index
    %c0 = arith.constant 0 : index
    %8 = vector.load %arg0[%c3, %c0] : memref<56x8xf32, #tpu.memory_space<vmem>>, vector<16x8xf32>
    %c0_0 = arith.constant 0 : index
    %c0_1 = arith.constant 0 : index
    %c0_2 = arith.constant 0 : index
    %c0_3 = arith.constant 0 : index
    %9 = vector.load %arg1[%c0_0, %c0_1, %c0_2, %c0_3] : memref<3x7x8x8xf32, #tpu.memory_space<vmem>>, vector<1x1x8x8xf32>
    %10 = vector.shape_cast %9 : vector<1x1x8x8xf32> to vector<8x8xf32>
    %cst_4 = arith.constant dense<0.000000e+00> : vector<16x8xf32>
    %11 = tpu.matmul %8, %10, %cst_4 {dimension_numbers = #tpu.dot_dimension_numbers<[1], [0], [0], [1], [0, 0, 1, 1], [], []>} : vector<16x8xf32>, vector<8x8xf32>, vector<16x8xf32> -> vector<16x8xf32>
    %12 = arith.addf %7, %11 : vector<16x8xf32>
    %c4 = arith.constant 4 : index
    %c0_5 = arith.constant 0 : index
    %13 = vector.load %arg0[%c4, %c0_5] : memref<56x8xf32, #tpu.memory_space<vmem>>, vector<16x8xf32>
    %c0_6 = arith.constant 0 : index
    %c1 = arith.constant 1 : index
    %c0_7 = arith.constant 0 : index
    %c0_8 = arith.constant 0 : index
    %14 = vector.load %arg1[%c0_6, %c1, %c0_7, %c0_8] : memref<3x7x8x8xf32, #tpu.memory_space<vmem>>, vector<1x1x8x8xf32>
    %15 = vector.shape_cast %14 : vector<1x1x8x8xf32> to vector<8x8xf32>
    %cst_9 = arith.constant dense<0.000000e+00> : vector<16x8xf32>
    %16 = tpu.matmul %13, %15, %cst_9 {dimension_numbers = #tpu.dot_dimension_numbers<[1], [0], [0], [1], [0, 0, 1, 1], [], []>} : vector<16x8xf32>, vector<8x8xf32>, vector<16x8xf32> -> vector<16x8xf32>
    %17 = arith.addf %12, %16 : vector<16x8xf32>
    %c5 = arith.constant 5 : index
    %c0_10 = arith.constant 0 : index
    %18 = vector.load %arg0[%c5, %c0_10] : memref<56x8xf32, #tpu.memory_space<vmem>>, vector<16x8xf32>
    %c0_11 = arith.constant 0 : index
    %c2 = arith.constant 2 : index
    %c0_12 = arith.constant 0 : index
    %c0_13 = arith.constant 0 : index
    %19 = vector.load %arg1[%c0_11, %c2, %c0_12, %c0_13] : memref<3x7x8x8xf32, #tpu.memory_space<vmem>>, vector<1x1x8x8xf32>
    %20 = vector.shape_cast %19 : vector<1x1x8x8xf32> to vector<8x8xf32>
    %cst_14 = arith.constant dense<0.000000e+00> : vector<16x8xf32>
    %21 = tpu.matmul %18, %20, %cst_14 {dimension_numbers = #tpu.dot_dimension_numbers<[1], [0], [0], [1], [0, 0, 1, 1], [], []>} : vector<16x8xf32>, vector<8x8xf32>, vector<16x8xf32> -> vector<16x8xf32>
    %22 = arith.addf %17, %21 : vector<16x8xf32>
    %c6 = arith.constant 6 : index
    %c0_15 = arith.constant 0 : index
    %23 = vector.load %arg0[%c6, %c0_15] : memref<56x8xf32, #tpu.memory_space<vmem>>, vector<16x8xf32>
    %c0_16 = arith.constant 0 : index
    %c3_17 = arith.constant 3 : index
    %c0_18 = arith.constant 0 : index
    %c0_19 = arith.constant 0 : index
    %24 = vector.load %arg1[%c0_16, %c3_17, %c0_18, %c0_19] : memref<3x7x8x8xf32, #tpu.memory_space<vmem>>, vector<1x1x8x8xf32>
    %25 = vector.shape_cast %24 : vector<1x1x8x8xf32> to vector<8x8xf32>
    %cst_20 = arith.constant dense<0.000000e+00> : vector<16x8xf32>
    %26 = tpu.matmul %23, %25, %cst_20 {dimension_numbers = #tpu.dot_dimension_numbers<[1], [0], [0], [1], [0, 0, 1, 1], [], []>} : vector<16x8xf32>, vector<8x8xf32>, vector<16x8xf32> -> vector<16x8xf32>
    %27 = arith.addf %22, %26 : vector<16x8xf32>
    %c7 = arith.constant 7 : index
    %c0_21 = arith.constant 0 : index
    %28 = vector.load %arg0[%c7, %c0_21] : memref<56x8xf32, #tpu.memory_space<vmem>>, vector<16x8xf32>
    %c0_22 = arith.constant 0 : index
    %c4_23 = arith.constant 4 : index
    %c0_24 = arith.constant 0 : index
    %c0_25 = arith.constant 0 : index
    %29 = vector.load %arg1[%c0_22, %c4_23, %c0_24, %c0_25] : memref<3x7x8x8xf32, #tpu.memory_space<vmem>>, vector<1x1x8x8xf32>
    %30 = vector.shape_cast %29 : vector<1x1x8x8xf32> to vector<8x8xf32>
    %cst_26 = arith.constant dense<0.000000e+00> : vector<16x8xf32>
    %31 = tpu.matmul %28, %30, %cst_26 {dimension_numbers = #tpu.dot_dimension_numbers<[1], [0], [0], [1], [0, 0, 1, 1], [], []>} : vector<16x8xf32>, vector<8x8xf32>, vector<16x8xf32> -> vector<16x8xf32>
    %32 = arith.addf %27, %31 : vector<16x8xf32>
    %c8 = arith.constant 8 : index
    %c0_27 = arith.constant 0 : index
    %33 = vector.load %arg0[%c8, %c0_27] : memref<56x8xf32, #tpu.memory_space<vmem>>, vector<16x8xf32>
    %c0_28 = arith.constant 0 : index
    %c5_29 = arith.constant 5 : index
    %c0_30 = arith.constant 0 : index
    %c0_31 = arith.constant 0 : index
    %34 = vector.load %arg1[%c0_28, %c5_29, %c0_30, %c0_31] : memref<3x7x8x8xf32, #tpu.memory_space<vmem>>, vector<1x1x8x8xf32>
    %35 = vector.shape_cast %34 : vector<1x1x8x8xf32> to vector<8x8xf32>
    %cst_32 = arith.constant dense<0.000000e+00> : vector<16x8xf32>
    %36 = tpu.matmul %33, %35, %cst_32 {dimension_numbers = #tpu.dot_dimension_numbers<[1], [0], [0], [1], [0, 0, 1, 1], [], []>} : vector<16x8xf32>, vector<8x8xf32>, vector<16x8xf32> -> vector<16x8xf32>
    %37 = arith.addf %32, %36 : vector<16x8xf32>
    %c9 = arith.constant 9 : index
    %c0_33 = arith.constant 0 : index
    %38 = vector.load %arg0[%c9, %c0_33] : memref<56x8xf32, #tpu.memory_space<vmem>>, vector<16x8xf32>
    %c0_34 = arith.constant 0 : index
    %c6_35 = arith.constant 6 : index
    %c0_36 = arith.constant 0 : index
    %c0_37 = arith.constant 0 : index
    %39 = vector.load %arg1[%c0_34, %c6_35, %c0_36, %c0_37] : memref<3x7x8x8xf32, #tpu.memory_space<vmem>>, vector<1x1x8x8xf32>
    %40 = vector.shape_cast %39 : vector<1x1x8x8xf32> to vector<8x8xf32>
    %cst_38 = arith.constant dense<0.000000e+00> : vector<16x8xf32>
    %41 = tpu.matmul %38, %40, %cst_38 {dimension_numbers = #tpu.dot_dimension_numbers<[1], [0], [0], [1], [0, 0, 1, 1], [], []>} : vector<16x8xf32>, vector<8x8xf32>, vector<16x8xf32> -> vector<16x8xf32>
    %42 = arith.addf %37, %41 : vector<16x8xf32>
    %c0_39 = arith.constant 0 : index
    %c0_40 = arith.constant 0 : index
    %c0_41 = arith.constant 0 : index
    %43 = vector.load %arg2[%c0_39, %c0_40, %c0_41] : memref<3x1x8xf32, #tpu.memory_space<vmem>>, vector<1x1x8xf32>
    %44 = vector.shape_cast %43 : vector<1x1x8xf32> to vector<1x8xf32>
    %45 = vector.broadcast %44 : vector<1x8xf32> to vector<16x8xf32>
    %46 = arith.addf %42, %45 : vector<16x8xf32>
    %cst_42 = arith.constant 0.000000e+00 : f32
    %47 = vector.broadcast %cst_42 : f32 to vector<16x8xf32>
    %48 = arith.cmpf oge, %46, %47 : vector<16x8xf32>
    %cst_43 = arith.constant 0.00999999977 : f32
    %49 = vector.broadcast %cst_43 : f32 to vector<16x8xf32>
    %50 = arith.mulf %49, %46 : vector<16x8xf32>
    %51 = arith.select %48, %46, %50 : vector<16x8xi1>, vector<16x8xf32>
    %cst_44 = arith.constant 0.000000e+00 : f32
    %52 = vector.broadcast %cst_44 : f32 to vector<16x8xf32>
    %c0_45 = arith.constant 0 : index
    %c0_46 = arith.constant 0 : index
    %53 = vector.load %arg0[%c0_45, %c0_46] : memref<56x8xf32, #tpu.memory_space<vmem>>, vector<16x8xf32>
    %c1_47 = arith.constant 1 : index
    %c0_48 = arith.constant 0 : index
    %c0_49 = arith.constant 0 : index
    %c0_50 = arith.constant 0 : index
    %54 = vector.load %arg1[%c1_47, %c0_48, %c0_49, %c0_50] : memref<3x7x8x8xf32, #tpu.memory_space<vmem>>, vector<1x1x8x8xf32>
    %55 = vector.shape_cast %54 : vector<1x1x8x8xf32> to vector<8x8xf32>
    %cst_51 = arith.constant dense<0.000000e+00> : vector<16x8xf32>
    %56 = tpu.matmul %53, %55, %cst_51 {dimension_numbers = #tpu.dot_dimension_numbers<[1], [0], [0], [1], [0, 0, 1, 1], [], []>} : vector<16x8xf32>, vector<8x8xf32>, vector<16x8xf32> -> vector<16x8xf32>
    %57 = arith.addf %52, %56 : vector<16x8xf32>
    %c2_52 = arith.constant 2 : index
    %c0_53 = arith.constant 0 : index
    %58 = vector.load %arg0[%c2_52, %c0_53] : memref<56x8xf32, #tpu.memory_space<vmem>>, vector<16x8xf32>
    %c1_54 = arith.constant 1 : index
    %c1_55 = arith.constant 1 : index
    %c0_56 = arith.constant 0 : index
    %c0_57 = arith.constant 0 : index
    %59 = vector.load %arg1[%c1_54, %c1_55, %c0_56, %c0_57] : memref<3x7x8x8xf32, #tpu.memory_space<vmem>>, vector<1x1x8x8xf32>
    %60 = vector.shape_cast %59 : vector<1x1x8x8xf32> to vector<8x8xf32>
    %cst_58 = arith.constant dense<0.000000e+00> : vector<16x8xf32>
    %61 = tpu.matmul %58, %60, %cst_58 {dimension_numbers = #tpu.dot_dimension_numbers<[1], [0], [0], [1], [0, 0, 1, 1], [], []>} : vector<16x8xf32>, vector<8x8xf32>, vector<16x8xf32> -> vector<16x8xf32>
    %62 = arith.addf %57, %61 : vector<16x8xf32>
    %c4_59 = arith.constant 4 : index
    %c0_60 = arith.constant 0 : index
    %63 = vector.load %arg0[%c4_59, %c0_60] : memref<56x8xf32, #tpu.memory_space<vmem>>, vector<16x8xf32>
    %c1_61 = arith.constant 1 : index
    %c2_62 = arith.constant 2 : index
    %c0_63 = arith.constant 0 : index
    %c0_64 = arith.constant 0 : index
    %64 = vector.load %arg1[%c1_61, %c2_62, %c0_63, %c0_64] : memref<3x7x8x8xf32, #tpu.memory_space<vmem>>, vector<1x1x8x8xf32>
    %65 = vector.shape_cast %64 : vector<1x1x8x8xf32> to vector<8x8xf32>
    %cst_65 = arith.constant dense<0.000000e+00> : vector<16x8xf32>
    %66 = tpu.matmul %63, %65, %cst_65 {dimension_numbers = #tpu.dot_dimension_numbers<[1], [0], [0], [1], [0, 0, 1, 1], [], []>} : vector<16x8xf32>, vector<8x8xf32>, vector<16x8xf32> -> vector<16x8xf32>
    %67 = arith.addf %62, %66 : vector<16x8xf32>
    %c6_66 = arith.constant 6 : index
    %c0_67 = arith.constant 0 : index
    %68 = vector.load %arg0[%c6_66, %c0_67] : memref<56x8xf32, #tpu.memory_space<vmem>>, vector<16x8xf32>
    %c1_68 = arith.constant 1 : index
    %c3_69 = arith.constant 3 : index
    %c0_70 = arith.constant 0 : index
    %c0_71 = arith.constant 0 : index
    %69 = vector.load %arg1[%c1_68, %c3_69, %c0_70, %c0_71] : memref<3x7x8x8xf32, #tpu.memory_space<vmem>>, vector<1x1x8x8xf32>
    %70 = vector.shape_cast %69 : vector<1x1x8x8xf32> to vector<8x8xf32>
    %cst_72 = arith.constant dense<0.000000e+00> : vector<16x8xf32>
    %71 = tpu.matmul %68, %70, %cst_72 {dimension_numbers = #tpu.dot_dimension_numbers<[1], [0], [0], [1], [0, 0, 1, 1], [], []>} : vector<16x8xf32>, vector<8x8xf32>, vector<16x8xf32> -> vector<16x8xf32>
    %72 = arith.addf %67, %71 : vector<16x8xf32>
    %c8_73 = arith.constant 8 : index
    %c0_74 = arith.constant 0 : index
    %73 = vector.load %arg0[%c8_73, %c0_74] : memref<56x8xf32, #tpu.memory_space<vmem>>, vector<16x8xf32>
    %c1_75 = arith.constant 1 : index
    %c4_76 = arith.constant 4 : index
    %c0_77 = arith.constant 0 : index
    %c0_78 = arith.constant 0 : index
    %74 = vector.load %arg1[%c1_75, %c4_76, %c0_77, %c0_78] : memref<3x7x8x8xf32, #tpu.memory_space<vmem>>, vector<1x1x8x8xf32>
    %75 = vector.shape_cast %74 : vector<1x1x8x8xf32> to vector<8x8xf32>
    %cst_79 = arith.constant dense<0.000000e+00> : vector<16x8xf32>
    %76 = tpu.matmul %73, %75, %cst_79 {dimension_numbers = #tpu.dot_dimension_numbers<[1], [0], [0], [1], [0, 0, 1, 1], [], []>} : vector<16x8xf32>, vector<8x8xf32>, vector<16x8xf32> -> vector<16x8xf32>
    %77 = arith.addf %72, %76 : vector<16x8xf32>
    %c10 = arith.constant 10 : index
    %c0_80 = arith.constant 0 : index
    %78 = vector.load %arg0[%c10, %c0_80] : memref<56x8xf32, #tpu.memory_space<vmem>>, vector<16x8xf32>
    %c1_81 = arith.constant 1 : index
    %c5_82 = arith.constant 5 : index
    %c0_83 = arith.constant 0 : index
    %c0_84 = arith.constant 0 : index
    %79 = vector.load %arg1[%c1_81, %c5_82, %c0_83, %c0_84] : memref<3x7x8x8xf32, #tpu.memory_space<vmem>>, vector<1x1x8x8xf32>
    %80 = vector.shape_cast %79 : vector<1x1x8x8xf32> to vector<8x8xf32>
    %cst_85 = arith.constant dense<0.000000e+00> : vector<16x8xf32>
    %81 = tpu.matmul %78, %80, %cst_85 {dimension_numbers = #tpu.dot_dimension_numbers<[1], [0], [0], [1], [0, 0, 1, 1], [], []>} : vector<16x8xf32>, vector<8x8xf32>, vector<16x8xf32> -> vector<16x8xf32>
    %82 = arith.addf %77, %81 : vector<16x8xf32>
    %c12 = arith.constant 12 : index
    %c0_86 = arith.constant 0 : index
    %83 = vector.load %arg0[%c12, %c0_86] : memref<56x8xf32, #tpu.memory_space<vmem>>, vector<16x8xf32>
    %c1_87 = arith.constant 1 : index
    %c6_88 = arith.constant 6 : index
    %c0_89 = arith.constant 0 : index
    %c0_90 = arith.constant 0 : index
    %84 = vector.load %arg1[%c1_87, %c6_88, %c0_89, %c0_90] : memref<3x7x8x8xf32, #tpu.memory_space<vmem>>, vector<1x1x8x8xf32>
    %85 = vector.shape_cast %84 : vector<1x1x8x8xf32> to vector<8x8xf32>
    %cst_91 = arith.constant dense<0.000000e+00> : vector<16x8xf32>
    %86 = tpu.matmul %83, %85, %cst_91 {dimension_numbers = #tpu.dot_dimension_numbers<[1], [0], [0], [1], [0, 0, 1, 1], [], []>} : vector<16x8xf32>, vector<8x8xf32>, vector<16x8xf32> -> vector<16x8xf32>
    %87 = arith.addf %82, %86 : vector<16x8xf32>
    %c1_92 = arith.constant 1 : index
    %c0_93 = arith.constant 0 : index
    %c0_94 = arith.constant 0 : index
    %88 = vector.load %arg2[%c1_92, %c0_93, %c0_94] : memref<3x1x8xf32, #tpu.memory_space<vmem>>, vector<1x1x8xf32>
    %89 = vector.shape_cast %88 : vector<1x1x8xf32> to vector<1x8xf32>
    %90 = vector.broadcast %89 : vector<1x8xf32> to vector<16x8xf32>
    %91 = arith.addf %87, %90 : vector<16x8xf32>
    %cst_95 = arith.constant 0.000000e+00 : f32
    %92 = vector.broadcast %cst_95 : f32 to vector<16x8xf32>
    %93 = arith.cmpf oge, %91, %92 : vector<16x8xf32>
    %cst_96 = arith.constant 0.00999999977 : f32
    %94 = vector.broadcast %cst_96 : f32 to vector<16x8xf32>
    %95 = arith.mulf %94, %91 : vector<16x8xf32>
    %96 = arith.select %93, %91, %95 : vector<16x8xi1>, vector<16x8xf32>
    %cst_97 = arith.constant 0.000000e+00 : f32
    %97 = vector.broadcast %cst_97 : f32 to vector<3x8xf32>
    %98 = tpu.concatenate %97, %96, %97 in 0 : vector<3x8xf32>, vector<16x8xf32>, vector<3x8xf32> -> vector<22x8xf32>
    %cst_98 = arith.constant 0.000000e+00 : f32
    %99 = vector.broadcast %cst_98 : f32 to vector<16x8xf32>
    %100 = vector.extract_strided_slice %98 {offsets = [0, 0], sizes = [16, 8], strides = [1, 1]} : vector<22x8xf32> to vector<16x8xf32>
    %c2_99 = arith.constant 2 : index
    %c0_100 = arith.constant 0 : index
    %c0_101 = arith.constant 0 : index
    %c0_102 = arith.constant 0 : index
    %101 = vector.load %arg1[%c2_99, %c0_100, %c0_101, %c0_102] : memref<3x7x8x8xf32, #tpu.memory_space<vmem>>, vector<1x1x8x8xf32>
    %102 = vector.shape_cast %101 : vector<1x1x8x8xf32> to vector<8x8xf32>
    %cst_103 = arith.constant dense<0.000000e+00> : vector<16x8xf32>
    %103 = tpu.matmul %100, %102, %cst_103 {dimension_numbers = #tpu.dot_dimension_numbers<[1], [0], [0], [1], [0, 0, 1, 1], [], []>} : vector<16x8xf32>, vector<8x8xf32>, vector<16x8xf32> -> vector<16x8xf32>
    %104 = arith.addf %99, %103 : vector<16x8xf32>
    %105 = vector.extract_strided_slice %98 {offsets = [1, 0], sizes = [16, 8], strides = [1, 1]} : vector<22x8xf32> to vector<16x8xf32>
    %c2_104 = arith.constant 2 : index
    %c1_105 = arith.constant 1 : index
    %c0_106 = arith.constant 0 : index
    %c0_107 = arith.constant 0 : index
    %106 = vector.load %arg1[%c2_104, %c1_105, %c0_106, %c0_107] : memref<3x7x8x8xf32, #tpu.memory_space<vmem>>, vector<1x1x8x8xf32>
    %107 = vector.shape_cast %106 : vector<1x1x8x8xf32> to vector<8x8xf32>
    %cst_108 = arith.constant dense<0.000000e+00> : vector<16x8xf32>
    %108 = tpu.matmul %105, %107, %cst_108 {dimension_numbers = #tpu.dot_dimension_numbers<[1], [0], [0], [1], [0, 0, 1, 1], [], []>} : vector<16x8xf32>, vector<8x8xf32>, vector<16x8xf32> -> vector<16x8xf32>
    %109 = arith.addf %104, %108 : vector<16x8xf32>
    %110 = vector.extract_strided_slice %98 {offsets = [2, 0], sizes = [16, 8], strides = [1, 1]} : vector<22x8xf32> to vector<16x8xf32>
    %c2_109 = arith.constant 2 : index
    %c2_110 = arith.constant 2 : index
    %c0_111 = arith.constant 0 : index
    %c0_112 = arith.constant 0 : index
    %111 = vector.load %arg1[%c2_109, %c2_110, %c0_111, %c0_112] : memref<3x7x8x8xf32, #tpu.memory_space<vmem>>, vector<1x1x8x8xf32>
    %112 = vector.shape_cast %111 : vector<1x1x8x8xf32> to vector<8x8xf32>
    %cst_113 = arith.constant dense<0.000000e+00> : vector<16x8xf32>
    %113 = tpu.matmul %110, %112, %cst_113 {dimension_numbers = #tpu.dot_dimension_numbers<[1], [0], [0], [1], [0, 0, 1, 1], [], []>} : vector<16x8xf32>, vector<8x8xf32>, vector<16x8xf32> -> vector<16x8xf32>
    %114 = arith.addf %109, %113 : vector<16x8xf32>
    %115 = vector.extract_strided_slice %98 {offsets = [3, 0], sizes = [16, 8], strides = [1, 1]} : vector<22x8xf32> to vector<16x8xf32>
    %c2_114 = arith.constant 2 : index
    %c3_115 = arith.constant 3 : index
    %c0_116 = arith.constant 0 : index
    %c0_117 = arith.constant 0 : index
    %116 = vector.load %arg1[%c2_114, %c3_115, %c0_116, %c0_117] : memref<3x7x8x8xf32, #tpu.memory_space<vmem>>, vector<1x1x8x8xf32>
    %117 = vector.shape_cast %116 : vector<1x1x8x8xf32> to vector<8x8xf32>
    %cst_118 = arith.constant dense<0.000000e+00> : vector<16x8xf32>
    %118 = tpu.matmul %115, %117, %cst_118 {dimension_numbers = #tpu.dot_dimension_numbers<[1], [0], [0], [1], [0, 0, 1, 1], [], []>} : vector<16x8xf32>, vector<8x8xf32>, vector<16x8xf32> -> vector<16x8xf32>
    %119 = arith.addf %114, %118 : vector<16x8xf32>
    %120 = vector.extract_strided_slice %98 {offsets = [4, 0], sizes = [16, 8], strides = [1, 1]} : vector<22x8xf32> to vector<16x8xf32>
    %c2_119 = arith.constant 2 : index
    %c4_120 = arith.constant 4 : index
    %c0_121 = arith.constant 0 : index
    %c0_122 = arith.constant 0 : index
    %121 = vector.load %arg1[%c2_119, %c4_120, %c0_121, %c0_122] : memref<3x7x8x8xf32, #tpu.memory_space<vmem>>, vector<1x1x8x8xf32>
    %122 = vector.shape_cast %121 : vector<1x1x8x8xf32> to vector<8x8xf32>
    %cst_123 = arith.constant dense<0.000000e+00> : vector<16x8xf32>
    %123 = tpu.matmul %120, %122, %cst_123 {dimension_numbers = #tpu.dot_dimension_numbers<[1], [0], [0], [1], [0, 0, 1, 1], [], []>} : vector<16x8xf32>, vector<8x8xf32>, vector<16x8xf32> -> vector<16x8xf32>
    %124 = arith.addf %119, %123 : vector<16x8xf32>
    %125 = vector.extract_strided_slice %98 {offsets = [5, 0], sizes = [16, 8], strides = [1, 1]} : vector<22x8xf32> to vector<16x8xf32>
    %c2_124 = arith.constant 2 : index
    %c5_125 = arith.constant 5 : index
    %c0_126 = arith.constant 0 : index
    %c0_127 = arith.constant 0 : index
    %126 = vector.load %arg1[%c2_124, %c5_125, %c0_126, %c0_127] : memref<3x7x8x8xf32, #tpu.memory_space<vmem>>, vector<1x1x8x8xf32>
    %127 = vector.shape_cast %126 : vector<1x1x8x8xf32> to vector<8x8xf32>
    %cst_128 = arith.constant dense<0.000000e+00> : vector<16x8xf32>
    %128 = tpu.matmul %125, %127, %cst_128 {dimension_numbers = #tpu.dot_dimension_numbers<[1], [0], [0], [1], [0, 0, 1, 1], [], []>} : vector<16x8xf32>, vector<8x8xf32>, vector<16x8xf32> -> vector<16x8xf32>
    %129 = arith.addf %124, %128 : vector<16x8xf32>
    %130 = vector.extract_strided_slice %98 {offsets = [6, 0], sizes = [16, 8], strides = [1, 1]} : vector<22x8xf32> to vector<16x8xf32>
    %c2_129 = arith.constant 2 : index
    %c6_130 = arith.constant 6 : index
    %c0_131 = arith.constant 0 : index
    %c0_132 = arith.constant 0 : index
    %131 = vector.load %arg1[%c2_129, %c6_130, %c0_131, %c0_132] : memref<3x7x8x8xf32, #tpu.memory_space<vmem>>, vector<1x1x8x8xf32>
    %132 = vector.shape_cast %131 : vector<1x1x8x8xf32> to vector<8x8xf32>
    %cst_133 = arith.constant dense<0.000000e+00> : vector<16x8xf32>
    %133 = tpu.matmul %130, %132, %cst_133 {dimension_numbers = #tpu.dot_dimension_numbers<[1], [0], [0], [1], [0, 0, 1, 1], [], []>} : vector<16x8xf32>, vector<8x8xf32>, vector<16x8xf32> -> vector<16x8xf32>
    %134 = arith.addf %129, %133 : vector<16x8xf32>
    %c2_134 = arith.constant 2 : index
    %c0_135 = arith.constant 0 : index
    %c0_136 = arith.constant 0 : index
    %135 = vector.load %arg2[%c2_134, %c0_135, %c0_136] : memref<3x1x8xf32, #tpu.memory_space<vmem>>, vector<1x1x8xf32>
    %136 = vector.shape_cast %135 : vector<1x1x8xf32> to vector<1x8xf32>
    %137 = vector.broadcast %136 : vector<1x8xf32> to vector<16x8xf32>
    %138 = arith.addf %134, %137 : vector<16x8xf32>
    %cst_137 = arith.constant 0.000000e+00 : f32
    %139 = vector.broadcast %cst_137 : f32 to vector<16x8xf32>
    %140 = arith.cmpf oge, %138, %139 : vector<16x8xf32>
    %cst_138 = arith.constant 0.00999999977 : f32
    %141 = vector.broadcast %cst_138 : f32 to vector<16x8xf32>
    %142 = arith.mulf %141, %138 : vector<16x8xf32>
    %143 = arith.select %140, %138, %142 : vector<16x8xi1>, vector<16x8xf32>
    %144 = arith.addf %51, %143 : vector<16x8xf32>
    %cst_139 = arith.constant dense<0.000000e+00> : vector<4x8xf32>
    %145 = tpu.matmul %6, %144, %cst_139 {dimension_numbers = #tpu.dot_dimension_numbers<[1], [0], [0], [1], [0, 0, 1, 1], [], []>} : vector<4x16xf32>, vector<16x8xf32>, vector<4x8xf32> -> vector<4x8xf32>
    %cst_140 = arith.constant 0.000000e+00 : f32
    %146 = vector.broadcast %cst_140 : f32 to vector<16x8xf32>
    %c31 = arith.constant 31 : index
    %c0_141 = arith.constant 0 : index
    %147 = vector.load %arg0[%c31, %c0_141] : memref<56x8xf32, #tpu.memory_space<vmem>>, vector<16x8xf32>
    %c0_142 = arith.constant 0 : index
    %c0_143 = arith.constant 0 : index
    %c0_144 = arith.constant 0 : index
    %c0_145 = arith.constant 0 : index
    %148 = vector.load %arg1[%c0_142, %c0_143, %c0_144, %c0_145] : memref<3x7x8x8xf32, #tpu.memory_space<vmem>>, vector<1x1x8x8xf32>
    %149 = vector.shape_cast %148 : vector<1x1x8x8xf32> to vector<8x8xf32>
    %cst_146 = arith.constant dense<0.000000e+00> : vector<16x8xf32>
    %150 = tpu.matmul %147, %149, %cst_146 {dimension_numbers = #tpu.dot_dimension_numbers<[1], [0], [0], [1], [0, 0, 1, 1], [], []>} : vector<16x8xf32>, vector<8x8xf32>, vector<16x8xf32> -> vector<16x8xf32>
    %151 = arith.addf %146, %150 : vector<16x8xf32>
    %c32 = arith.constant 32 : index
    %c0_147 = arith.constant 0 : index
    %152 = vector.load %arg0[%c32, %c0_147] : memref<56x8xf32, #tpu.memory_space<vmem>>, vector<16x8xf32>
    %c0_148 = arith.constant 0 : index
    %c1_149 = arith.constant 1 : index
    %c0_150 = arith.constant 0 : index
    %c0_151 = arith.constant 0 : index
    %153 = vector.load %arg1[%c0_148, %c1_149, %c0_150, %c0_151] : memref<3x7x8x8xf32, #tpu.memory_space<vmem>>, vector<1x1x8x8xf32>
    %154 = vector.shape_cast %153 : vector<1x1x8x8xf32> to vector<8x8xf32>
    %cst_152 = arith.constant dense<0.000000e+00> : vector<16x8xf32>
    %155 = tpu.matmul %152, %154, %cst_152 {dimension_numbers = #tpu.dot_dimension_numbers<[1], [0], [0], [1], [0, 0, 1, 1], [], []>} : vector<16x8xf32>, vector<8x8xf32>, vector<16x8xf32> -> vector<16x8xf32>
    %156 = arith.addf %151, %155 : vector<16x8xf32>
    %c33 = arith.constant 33 : index
    %c0_153 = arith.constant 0 : index
    %157 = vector.load %arg0[%c33, %c0_153] : memref<56x8xf32, #tpu.memory_space<vmem>>, vector<16x8xf32>
    %c0_154 = arith.constant 0 : index
    %c2_155 = arith.constant 2 : index
    %c0_156 = arith.constant 0 : index
    %c0_157 = arith.constant 0 : index
    %158 = vector.load %arg1[%c0_154, %c2_155, %c0_156, %c0_157] : memref<3x7x8x8xf32, #tpu.memory_space<vmem>>, vector<1x1x8x8xf32>
    %159 = vector.shape_cast %158 : vector<1x1x8x8xf32> to vector<8x8xf32>
    %cst_158 = arith.constant dense<0.000000e+00> : vector<16x8xf32>
    %160 = tpu.matmul %157, %159, %cst_158 {dimension_numbers = #tpu.dot_dimension_numbers<[1], [0], [0], [1], [0, 0, 1, 1], [], []>} : vector<16x8xf32>, vector<8x8xf32>, vector<16x8xf32> -> vector<16x8xf32>
    %161 = arith.addf %156, %160 : vector<16x8xf32>
    %c34 = arith.constant 34 : index
    %c0_159 = arith.constant 0 : index
    %162 = vector.load %arg0[%c34, %c0_159] : memref<56x8xf32, #tpu.memory_space<vmem>>, vector<16x8xf32>
    %c0_160 = arith.constant 0 : index
    %c3_161 = arith.constant 3 : index
    %c0_162 = arith.constant 0 : index
    %c0_163 = arith.constant 0 : index
    %163 = vector.load %arg1[%c0_160, %c3_161, %c0_162, %c0_163] : memref<3x7x8x8xf32, #tpu.memory_space<vmem>>, vector<1x1x8x8xf32>
    %164 = vector.shape_cast %163 : vector<1x1x8x8xf32> to vector<8x8xf32>
    %cst_164 = arith.constant dense<0.000000e+00> : vector<16x8xf32>
    %165 = tpu.matmul %162, %164, %cst_164 {dimension_numbers = #tpu.dot_dimension_numbers<[1], [0], [0], [1], [0, 0, 1, 1], [], []>} : vector<16x8xf32>, vector<8x8xf32>, vector<16x8xf32> -> vector<16x8xf32>
    %166 = arith.addf %161, %165 : vector<16x8xf32>
    %c35 = arith.constant 35 : index
    %c0_165 = arith.constant 0 : index
    %167 = vector.load %arg0[%c35, %c0_165] : memref<56x8xf32, #tpu.memory_space<vmem>>, vector<16x8xf32>
    %c0_166 = arith.constant 0 : index
    %c4_167 = arith.constant 4 : index
    %c0_168 = arith.constant 0 : index
    %c0_169 = arith.constant 0 : index
    %168 = vector.load %arg1[%c0_166, %c4_167, %c0_168, %c0_169] : memref<3x7x8x8xf32, #tpu.memory_space<vmem>>, vector<1x1x8x8xf32>
    %169 = vector.shape_cast %168 : vector<1x1x8x8xf32> to vector<8x8xf32>
    %cst_170 = arith.constant dense<0.000000e+00> : vector<16x8xf32>
    %170 = tpu.matmul %167, %169, %cst_170 {dimension_numbers = #tpu.dot_dimension_numbers<[1], [0], [0], [1], [0, 0, 1, 1], [], []>} : vector<16x8xf32>, vector<8x8xf32>, vector<16x8xf32> -> vector<16x8xf32>
    %171 = arith.addf %166, %170 : vector<16x8xf32>
    %c36 = arith.constant 36 : index
    %c0_171 = arith.constant 0 : index
    %172 = vector.load %arg0[%c36, %c0_171] : memref<56x8xf32, #tpu.memory_space<vmem>>, vector<16x8xf32>
    %c0_172 = arith.constant 0 : index
    %c5_173 = arith.constant 5 : index
    %c0_174 = arith.constant 0 : index
    %c0_175 = arith.constant 0 : index
    %173 = vector.load %arg1[%c0_172, %c5_173, %c0_174, %c0_175] : memref<3x7x8x8xf32, #tpu.memory_space<vmem>>, vector<1x1x8x8xf32>
    %174 = vector.shape_cast %173 : vector<1x1x8x8xf32> to vector<8x8xf32>
    %cst_176 = arith.constant dense<0.000000e+00> : vector<16x8xf32>
    %175 = tpu.matmul %172, %174, %cst_176 {dimension_numbers = #tpu.dot_dimension_numbers<[1], [0], [0], [1], [0, 0, 1, 1], [], []>} : vector<16x8xf32>, vector<8x8xf32>, vector<16x8xf32> -> vector<16x8xf32>
    %176 = arith.addf %171, %175 : vector<16x8xf32>
    %c37 = arith.constant 37 : index
    %c0_177 = arith.constant 0 : index
    %177 = vector.load %arg0[%c37, %c0_177] : memref<56x8xf32, #tpu.memory_space<vmem>>, vector<16x8xf32>
    %c0_178 = arith.constant 0 : index
    %c6_179 = arith.constant 6 : index
    %c0_180 = arith.constant 0 : index
    %c0_181 = arith.constant 0 : index
    %178 = vector.load %arg1[%c0_178, %c6_179, %c0_180, %c0_181] : memref<3x7x8x8xf32, #tpu.memory_space<vmem>>, vector<1x1x8x8xf32>
    %179 = vector.shape_cast %178 : vector<1x1x8x8xf32> to vector<8x8xf32>
    %cst_182 = arith.constant dense<0.000000e+00> : vector<16x8xf32>
    %180 = tpu.matmul %177, %179, %cst_182 {dimension_numbers = #tpu.dot_dimension_numbers<[1], [0], [0], [1], [0, 0, 1, 1], [], []>} : vector<16x8xf32>, vector<8x8xf32>, vector<16x8xf32> -> vector<16x8xf32>
    %181 = arith.addf %176, %180 : vector<16x8xf32>
    %c0_183 = arith.constant 0 : index
    %c0_184 = arith.constant 0 : index
    %c0_185 = arith.constant 0 : index
    %182 = vector.load %arg2[%c0_183, %c0_184, %c0_185] : memref<3x1x8xf32, #tpu.memory_space<vmem>>, vector<1x1x8xf32>
    %183 = vector.shape_cast %182 : vector<1x1x8xf32> to vector<1x8xf32>
    %184 = vector.broadcast %183 : vector<1x8xf32> to vector<16x8xf32>
    %185 = arith.addf %181, %184 : vector<16x8xf32>
    %cst_186 = arith.constant 0.000000e+00 : f32
    %186 = vector.broadcast %cst_186 : f32 to vector<16x8xf32>
    %187 = arith.cmpf oge, %185, %186 : vector<16x8xf32>
    %cst_187 = arith.constant 0.00999999977 : f32
    %188 = vector.broadcast %cst_187 : f32 to vector<16x8xf32>
    %189 = arith.mulf %188, %185 : vector<16x8xf32>
    %190 = arith.select %187, %185, %189 : vector<16x8xi1>, vector<16x8xf32>
    %cst_188 = arith.constant 0.000000e+00 : f32
    %191 = vector.broadcast %cst_188 : f32 to vector<16x8xf32>
    %c28 = arith.constant 28 : index
    %c0_189 = arith.constant 0 : index
    %192 = vector.load %arg0[%c28, %c0_189] : memref<56x8xf32, #tpu.memory_space<vmem>>, vector<16x8xf32>
    %c1_190 = arith.constant 1 : index
    %c0_191 = arith.constant 0 : index
    %c0_192 = arith.constant 0 : index
    %c0_193 = arith.constant 0 : index
    %193 = vector.load %arg1[%c1_190, %c0_191, %c0_192, %c0_193] : memref<3x7x8x8xf32, #tpu.memory_space<vmem>>, vector<1x1x8x8xf32>
    %194 = vector.shape_cast %193 : vector<1x1x8x8xf32> to vector<8x8xf32>
    %cst_194 = arith.constant dense<0.000000e+00> : vector<16x8xf32>
    %195 = tpu.matmul %192, %194, %cst_194 {dimension_numbers = #tpu.dot_dimension_numbers<[1], [0], [0], [1], [0, 0, 1, 1], [], []>} : vector<16x8xf32>, vector<8x8xf32>, vector<16x8xf32> -> vector<16x8xf32>
    %196 = arith.addf %191, %195 : vector<16x8xf32>
    %c30 = arith.constant 30 : index
    %c0_195 = arith.constant 0 : index
    %197 = vector.load %arg0[%c30, %c0_195] : memref<56x8xf32, #tpu.memory_space<vmem>>, vector<16x8xf32>
    %c1_196 = arith.constant 1 : index
    %c1_197 = arith.constant 1 : index
    %c0_198 = arith.constant 0 : index
    %c0_199 = arith.constant 0 : index
    %198 = vector.load %arg1[%c1_196, %c1_197, %c0_198, %c0_199] : memref<3x7x8x8xf32, #tpu.memory_space<vmem>>, vector<1x1x8x8xf32>
    %199 = vector.shape_cast %198 : vector<1x1x8x8xf32> to vector<8x8xf32>
    %cst_200 = arith.constant dense<0.000000e+00> : vector<16x8xf32>
    %200 = tpu.matmul %197, %199, %cst_200 {dimension_numbers = #tpu.dot_dimension_numbers<[1], [0], [0], [1], [0, 0, 1, 1], [], []>} : vector<16x8xf32>, vector<8x8xf32>, vector<16x8xf32> -> vector<16x8xf32>
    %201 = arith.addf %196, %200 : vector<16x8xf32>
    %c32_201 = arith.constant 32 : index
    %c0_202 = arith.constant 0 : index
    %202 = vector.load %arg0[%c32_201, %c0_202] : memref<56x8xf32, #tpu.memory_space<vmem>>, vector<16x8xf32>
    %c1_203 = arith.constant 1 : index
    %c2_204 = arith.constant 2 : index
    %c0_205 = arith.constant 0 : index
    %c0_206 = arith.constant 0 : index
    %203 = vector.load %arg1[%c1_203, %c2_204, %c0_205, %c0_206] : memref<3x7x8x8xf32, #tpu.memory_space<vmem>>, vector<1x1x8x8xf32>
    %204 = vector.shape_cast %203 : vector<1x1x8x8xf32> to vector<8x8xf32>
    %cst_207 = arith.constant dense<0.000000e+00> : vector<16x8xf32>
    %205 = tpu.matmul %202, %204, %cst_207 {dimension_numbers = #tpu.dot_dimension_numbers<[1], [0], [0], [1], [0, 0, 1, 1], [], []>} : vector<16x8xf32>, vector<8x8xf32>, vector<16x8xf32> -> vector<16x8xf32>
    %206 = arith.addf %201, %205 : vector<16x8xf32>
    %c34_208 = arith.constant 34 : index
    %c0_209 = arith.constant 0 : index
    %207 = vector.load %arg0[%c34_208, %c0_209] : memref<56x8xf32, #tpu.memory_space<vmem>>, vector<16x8xf32>
    %c1_210 = arith.constant 1 : index
    %c3_211 = arith.constant 3 : index
    %c0_212 = arith.constant 0 : index
    %c0_213 = arith.constant 0 : index
    %208 = vector.load %arg1[%c1_210, %c3_211, %c0_212, %c0_213] : memref<3x7x8x8xf32, #tpu.memory_space<vmem>>, vector<1x1x8x8xf32>
    %209 = vector.shape_cast %208 : vector<1x1x8x8xf32> to vector<8x8xf32>
    %cst_214 = arith.constant dense<0.000000e+00> : vector<16x8xf32>
    %210 = tpu.matmul %207, %209, %cst_214 {dimension_numbers = #tpu.dot_dimension_numbers<[1], [0], [0], [1], [0, 0, 1, 1], [], []>} : vector<16x8xf32>, vector<8x8xf32>, vector<16x8xf32> -> vector<16x8xf32>
    %211 = arith.addf %206, %210 : vector<16x8xf32>
    %c36_215 = arith.constant 36 : index
    %c0_216 = arith.constant 0 : index
    %212 = vector.load %arg0[%c36_215, %c0_216] : memref<56x8xf32, #tpu.memory_space<vmem>>, vector<16x8xf32>
    %c1_217 = arith.constant 1 : index
    %c4_218 = arith.constant 4 : index
    %c0_219 = arith.constant 0 : index
    %c0_220 = arith.constant 0 : index
    %213 = vector.load %arg1[%c1_217, %c4_218, %c0_219, %c0_220] : memref<3x7x8x8xf32, #tpu.memory_space<vmem>>, vector<1x1x8x8xf32>
    %214 = vector.shape_cast %213 : vector<1x1x8x8xf32> to vector<8x8xf32>
    %cst_221 = arith.constant dense<0.000000e+00> : vector<16x8xf32>
    %215 = tpu.matmul %212, %214, %cst_221 {dimension_numbers = #tpu.dot_dimension_numbers<[1], [0], [0], [1], [0, 0, 1, 1], [], []>} : vector<16x8xf32>, vector<8x8xf32>, vector<16x8xf32> -> vector<16x8xf32>
    %216 = arith.addf %211, %215 : vector<16x8xf32>
    %c38 = arith.constant 38 : index
    %c0_222 = arith.constant 0 : index
    %217 = vector.load %arg0[%c38, %c0_222] : memref<56x8xf32, #tpu.memory_space<vmem>>, vector<16x8xf32>
    %c1_223 = arith.constant 1 : index
    %c5_224 = arith.constant 5 : index
    %c0_225 = arith.constant 0 : index
    %c0_226 = arith.constant 0 : index
    %218 = vector.load %arg1[%c1_223, %c5_224, %c0_225, %c0_226] : memref<3x7x8x8xf32, #tpu.memory_space<vmem>>, vector<1x1x8x8xf32>
    %219 = vector.shape_cast %218 : vector<1x1x8x8xf32> to vector<8x8xf32>
    %cst_227 = arith.constant dense<0.000000e+00> : vector<16x8xf32>
    %220 = tpu.matmul %217, %219, %cst_227 {dimension_numbers = #tpu.dot_dimension_numbers<[1], [0], [0], [1], [0, 0, 1, 1], [], []>} : vector<16x8xf32>, vector<8x8xf32>, vector<16x8xf32> -> vector<16x8xf32>
    %221 = arith.addf %216, %220 : vector<16x8xf32>
    %c40 = arith.constant 40 : index
    %c0_228 = arith.constant 0 : index
    %222 = vector.load %arg0[%c40, %c0_228] : memref<56x8xf32, #tpu.memory_space<vmem>>, vector<16x8xf32>
    %c1_229 = arith.constant 1 : index
    %c6_230 = arith.constant 6 : index
    %c0_231 = arith.constant 0 : index
    %c0_232 = arith.constant 0 : index
    %223 = vector.load %arg1[%c1_229, %c6_230, %c0_231, %c0_232] : memref<3x7x8x8xf32, #tpu.memory_space<vmem>>, vector<1x1x8x8xf32>
    %224 = vector.shape_cast %223 : vector<1x1x8x8xf32> to vector<8x8xf32>
    %cst_233 = arith.constant dense<0.000000e+00> : vector<16x8xf32>
    %225 = tpu.matmul %222, %224, %cst_233 {dimension_numbers = #tpu.dot_dimension_numbers<[1], [0], [0], [1], [0, 0, 1, 1], [], []>} : vector<16x8xf32>, vector<8x8xf32>, vector<16x8xf32> -> vector<16x8xf32>
    %226 = arith.addf %221, %225 : vector<16x8xf32>
    %c1_234 = arith.constant 1 : index
    %c0_235 = arith.constant 0 : index
    %c0_236 = arith.constant 0 : index
    %227 = vector.load %arg2[%c1_234, %c0_235, %c0_236] : memref<3x1x8xf32, #tpu.memory_space<vmem>>, vector<1x1x8xf32>
    %228 = vector.shape_cast %227 : vector<1x1x8xf32> to vector<1x8xf32>
    %229 = vector.broadcast %228 : vector<1x8xf32> to vector<16x8xf32>
    %230 = arith.addf %226, %229 : vector<16x8xf32>
    %cst_237 = arith.constant 0.000000e+00 : f32
    %231 = vector.broadcast %cst_237 : f32 to vector<16x8xf32>
    %232 = arith.cmpf oge, %230, %231 : vector<16x8xf32>
    %cst_238 = arith.constant 0.00999999977 : f32
    %233 = vector.broadcast %cst_238 : f32 to vector<16x8xf32>
    %234 = arith.mulf %233, %230 : vector<16x8xf32>
    %235 = arith.select %232, %230, %234 : vector<16x8xi1>, vector<16x8xf32>
    %cst_239 = arith.constant 0.000000e+00 : f32
    %236 = vector.broadcast %cst_239 : f32 to vector<3x8xf32>
    %237 = tpu.concatenate %236, %235, %236 in 0 : vector<3x8xf32>, vector<16x8xf32>, vector<3x8xf32> -> vector<22x8xf32>
    %cst_240 = arith.constant 0.000000e+00 : f32
    %238 = vector.broadcast %cst_240 : f32 to vector<16x8xf32>
    %239 = vector.extract_strided_slice %237 {offsets = [0, 0], sizes = [16, 8], strides = [1, 1]} : vector<22x8xf32> to vector<16x8xf32>
    %c2_241 = arith.constant 2 : index
    %c0_242 = arith.constant 0 : index
    %c0_243 = arith.constant 0 : index
    %c0_244 = arith.constant 0 : index
    %240 = vector.load %arg1[%c2_241, %c0_242, %c0_243, %c0_244] : memref<3x7x8x8xf32, #tpu.memory_space<vmem>>, vector<1x1x8x8xf32>
    %241 = vector.shape_cast %240 : vector<1x1x8x8xf32> to vector<8x8xf32>
    %cst_245 = arith.constant dense<0.000000e+00> : vector<16x8xf32>
    %242 = tpu.matmul %239, %241, %cst_245 {dimension_numbers = #tpu.dot_dimension_numbers<[1], [0], [0], [1], [0, 0, 1, 1], [], []>} : vector<16x8xf32>, vector<8x8xf32>, vector<16x8xf32> -> vector<16x8xf32>
    %243 = arith.addf %238, %242 : vector<16x8xf32>
    %244 = vector.extract_strided_slice %237 {offsets = [1, 0], sizes = [16, 8], strides = [1, 1]} : vector<22x8xf32> to vector<16x8xf32>
    %c2_246 = arith.constant 2 : index
    %c1_247 = arith.constant 1 : index
    %c0_248 = arith.constant 0 : index
    %c0_249 = arith.constant 0 : index
    %245 = vector.load %arg1[%c2_246, %c1_247, %c0_248, %c0_249] : memref<3x7x8x8xf32, #tpu.memory_space<vmem>>, vector<1x1x8x8xf32>
    %246 = vector.shape_cast %245 : vector<1x1x8x8xf32> to vector<8x8xf32>
    %cst_250 = arith.constant dense<0.000000e+00> : vector<16x8xf32>
    %247 = tpu.matmul %244, %246, %cst_250 {dimension_numbers = #tpu.dot_dimension_numbers<[1], [0], [0], [1], [0, 0, 1, 1], [], []>} : vector<16x8xf32>, vector<8x8xf32>, vector<16x8xf32> -> vector<16x8xf32>
    %248 = arith.addf %243, %247 : vector<16x8xf32>
    %249 = vector.extract_strided_slice %237 {offsets = [2, 0], sizes = [16, 8], strides = [1, 1]} : vector<22x8xf32> to vector<16x8xf32>
    %c2_251 = arith.constant 2 : index
    %c2_252 = arith.constant 2 : index
    %c0_253 = arith.constant 0 : index
    %c0_254 = arith.constant 0 : index
    %250 = vector.load %arg1[%c2_251, %c2_252, %c0_253, %c0_254] : memref<3x7x8x8xf32, #tpu.memory_space<vmem>>, vector<1x1x8x8xf32>
    %251 = vector.shape_cast %250 : vector<1x1x8x8xf32> to vector<8x8xf32>
    %cst_255 = arith.constant dense<0.000000e+00> : vector<16x8xf32>
    %252 = tpu.matmul %249, %251, %cst_255 {dimension_numbers = #tpu.dot_dimension_numbers<[1], [0], [0], [1], [0, 0, 1, 1], [], []>} : vector<16x8xf32>, vector<8x8xf32>, vector<16x8xf32> -> vector<16x8xf32>
    %253 = arith.addf %248, %252 : vector<16x8xf32>
    %254 = vector.extract_strided_slice %237 {offsets = [3, 0], sizes = [16, 8], strides = [1, 1]} : vector<22x8xf32> to vector<16x8xf32>
    %c2_256 = arith.constant 2 : index
    %c3_257 = arith.constant 3 : index
    %c0_258 = arith.constant 0 : index
    %c0_259 = arith.constant 0 : index
    %255 = vector.load %arg1[%c2_256, %c3_257, %c0_258, %c0_259] : memref<3x7x8x8xf32, #tpu.memory_space<vmem>>, vector<1x1x8x8xf32>
    %256 = vector.shape_cast %255 : vector<1x1x8x8xf32> to vector<8x8xf32>
    %cst_260 = arith.constant dense<0.000000e+00> : vector<16x8xf32>
    %257 = tpu.matmul %254, %256, %cst_260 {dimension_numbers = #tpu.dot_dimension_numbers<[1], [0], [0], [1], [0, 0, 1, 1], [], []>} : vector<16x8xf32>, vector<8x8xf32>, vector<16x8xf32> -> vector<16x8xf32>
    %258 = arith.addf %253, %257 : vector<16x8xf32>
    %259 = vector.extract_strided_slice %237 {offsets = [4, 0], sizes = [16, 8], strides = [1, 1]} : vector<22x8xf32> to vector<16x8xf32>
    %c2_261 = arith.constant 2 : index
    %c4_262 = arith.constant 4 : index
    %c0_263 = arith.constant 0 : index
    %c0_264 = arith.constant 0 : index
    %260 = vector.load %arg1[%c2_261, %c4_262, %c0_263, %c0_264] : memref<3x7x8x8xf32, #tpu.memory_space<vmem>>, vector<1x1x8x8xf32>
    %261 = vector.shape_cast %260 : vector<1x1x8x8xf32> to vector<8x8xf32>
    %cst_265 = arith.constant dense<0.000000e+00> : vector<16x8xf32>
    %262 = tpu.matmul %259, %261, %cst_265 {dimension_numbers = #tpu.dot_dimension_numbers<[1], [0], [0], [1], [0, 0, 1, 1], [], []>} : vector<16x8xf32>, vector<8x8xf32>, vector<16x8xf32> -> vector<16x8xf32>
    %263 = arith.addf %258, %262 : vector<16x8xf32>
    %264 = vector.extract_strided_slice %237 {offsets = [5, 0], sizes = [16, 8], strides = [1, 1]} : vector<22x8xf32> to vector<16x8xf32>
    %c2_266 = arith.constant 2 : index
    %c5_267 = arith.constant 5 : index
    %c0_268 = arith.constant 0 : index
    %c0_269 = arith.constant 0 : index
    %265 = vector.load %arg1[%c2_266, %c5_267, %c0_268, %c0_269] : memref<3x7x8x8xf32, #tpu.memory_space<vmem>>, vector<1x1x8x8xf32>
    %266 = vector.shape_cast %265 : vector<1x1x8x8xf32> to vector<8x8xf32>
    %cst_270 = arith.constant dense<0.000000e+00> : vector<16x8xf32>
    %267 = tpu.matmul %264, %266, %cst_270 {dimension_numbers = #tpu.dot_dimension_numbers<[1], [0], [0], [1], [0, 0, 1, 1], [], []>} : vector<16x8xf32>, vector<8x8xf32>, vector<16x8xf32> -> vector<16x8xf32>
    %268 = arith.addf %263, %267 : vector<16x8xf32>
    %269 = vector.extract_strided_slice %237 {offsets = [6, 0], sizes = [16, 8], strides = [1, 1]} : vector<22x8xf32> to vector<16x8xf32>
    %c2_271 = arith.constant 2 : index
    %c6_272 = arith.constant 6 : index
    %c0_273 = arith.constant 0 : index
    %c0_274 = arith.constant 0 : index
    %270 = vector.load %arg1[%c2_271, %c6_272, %c0_273, %c0_274] : memref<3x7x8x8xf32, #tpu.memory_space<vmem>>, vector<1x1x8x8xf32>
    %271 = vector.shape_cast %270 : vector<1x1x8x8xf32> to vector<8x8xf32>
    %cst_275 = arith.constant dense<0.000000e+00> : vector<16x8xf32>
    %272 = tpu.matmul %269, %271, %cst_275 {dimension_numbers = #tpu.dot_dimension_numbers<[1], [0], [0], [1], [0, 0, 1, 1], [], []>} : vector<16x8xf32>, vector<8x8xf32>, vector<16x8xf32> -> vector<16x8xf32>
    %273 = arith.addf %268, %272 : vector<16x8xf32>
    %c2_276 = arith.constant 2 : index
    %c0_277 = arith.constant 0 : index
    %c0_278 = arith.constant 0 : index
    %274 = vector.load %arg2[%c2_276, %c0_277, %c0_278] : memref<3x1x8xf32, #tpu.memory_space<vmem>>, vector<1x1x8xf32>
    %275 = vector.shape_cast %274 : vector<1x1x8xf32> to vector<1x8xf32>
    %276 = vector.broadcast %275 : vector<1x8xf32> to vector<16x8xf32>
    %277 = arith.addf %273, %276 : vector<16x8xf32>
    %cst_279 = arith.constant 0.000000e+00 : f32
    %278 = vector.broadcast %cst_279 : f32 to vector<16x8xf32>
    %279 = arith.cmpf oge, %277, %278 : vector<16x8xf32>
    %cst_280 = arith.constant 0.00999999977 : f32
    %280 = vector.broadcast %cst_280 : f32 to vector<16x8xf32>
    %281 = arith.mulf %280, %277 : vector<16x8xf32>
    %282 = arith.select %279, %277, %281 : vector<16x8xi1>, vector<16x8xf32>
    %283 = arith.addf %190, %282 : vector<16x8xf32>
    %cst_281 = arith.constant dense<0.000000e+00> : vector<4x8xf32>
    %284 = tpu.matmul %6, %283, %cst_281 {dimension_numbers = #tpu.dot_dimension_numbers<[1], [0], [0], [1], [0, 0, 1, 1], [], []>} : vector<4x16xf32>, vector<16x8xf32>, vector<4x8xf32> -> vector<4x8xf32>
    %285 = tpu.concatenate %145, %284 in 0 : vector<4x8xf32>, vector<4x8xf32> -> vector<8x8xf32>
    %c0_282 = arith.constant 0 : index
    %c0_283 = arith.constant 0 : index
    %286 = vector.load %arg3[%c0_282, %c0_283] : memref<8x8xf32, #tpu.memory_space<vmem>>, vector<8x8xf32>
    tpu.vector_store %arg3[%c0_282, %c0_283], %285 {strides = array<i32>} : memref<8x8xf32, #tpu.memory_space<vmem>>, vector<8x8xf32>,
    return
  }
}

</mosaic_0001>

<llo_original>
// kernel: dilation_block.1
$region0: #{dilation_block.1}
  #allocation0 [shape = 'u32[]', space=smem, size = 0x4, offset = 0x4, fixed_abs, tag = 'smem constant byte address 0x4 - core index']
  #allocation1 [shape = 'u32[144,128]{1,0:T(1,128)}', space=vmem, size = 0x12000, scoped, tag = 'internal scratch']
  %s0 = inlined_call_operand.vmem [shape: f32[56,8], index: 0, kind: input, shape index: {}]
  %s1 = inlined_call_operand.vmem [shape: f32[3,7,8,8], index: 1, kind: input, shape index: {}]
  %s2 = inlined_call_operand.vmem [shape: f32[3,1,8], index: 2, kind: input, shape index: {}]
  %s3 = inlined_call_operand.hbm [shape: f32[8,8], index: 3, kind: output, shape index: {}]
  %s4 = sld [smem:[#allocation0]]
  $region22: #{dilation_block.1} parent=0
    _
  %s6 = ssub.s32 1, %s4
  %s7 = scalar_select 0, %s6, %s4
  $region1: #{dilation_block.1} parent=0
    #allocation2 [shape = 'u8[4096]{0}', space=vmem, size = 0x1000, scoped, tag = 'output window, operand 0, single buffered']
    #allocation3 [shape = 's32[1]{0}', space=sflag, size = 0x4, scoped, tag = 'scoped memory for dilation_block.1']
    %8 = vsyncpa [#allocation3], 0
    // Predicated region
    $region2: #{dilation_block.1} parent=1 // pred_check
      _
    $region3: #{dilation_block.1} parent=1 // pred_check_branch
      %10 = sbr.rel (0) target = $region5
    $region4: #{dilation_block.1} parent=1 // pred_region
      _
    $region5: #{dilation_block.1} parent=1 // pred_fallthru
      _
    // Predicated region
    $region6: #{dilation_block.1} parent=1 // pred_check
      _
    $region7: #{dilation_block.1} parent=1 // pred_check_branch
      %12 = sbr.rel (0) target = $region9
    $region8: #{dilation_block.1} parent=1 // pred_region
      _
    $region9: #{dilation_block.1} parent=1 // pred_fallthru
      _
    // Predicated region
    $region10: #{dilation_block.1} parent=1 // pred_check
      _
    $region11: #{dilation_block.1} parent=1 // pred_check_branch
      %14 = sbr.rel (0) target = $region13
    $region12: #{dilation_block.1} parent=1 // pred_region
      _
    $region13: #{dilation_block.1} parent=1 // pred_fallthru
      _
    %v15 = vlaneseq
    %v16 = vshrl.u32 %v15, 7
    %v17 = vlaneseq
    %v18 = vand.u32 %v17, 127
    %v19 = vmul.u32 %v16, 4
    %vm20 = vcmp.eq.s32.totalorder %v18, %v19
    %v21 = vsel %vm20, 1, 0
    %v22 = vcvt.s32.f32 %v21
    %v23 = vld [vmem:[%s0 + $0x3] sm:$0xff]
    %v24 = vld [vmem:[%s0 + $0xb] sm:$0xff]
    %v25 = vld [vmem:[%s1] sm:$0xff]
    %v26 = vld [vmem:[%s0 + $0x4] sm:$0xff]
    %v27 = vld [vmem:[%s0 + $0xc] sm:$0xff]
    %s28 = scalar_lea.vmem %s1, 8
    %v29 = vld [vmem:[%s28] sm:$0xff]
    %vm30 = vcmask 64512
    %v32 = vsel %vm30, %v26, 0
    %v35 = vsel %vm30, %v27, 0
    %37 = vmatprep.subr.mxu0 0.0
    %38 = vmatpush1.msra.mxu0 0.0
    %39 = vmatprep.subr.mxu0 0.0
    %40 = vmatpush1.msra.mxu0 0.0
    %41 = vmatprep.subr.mxu0 0.0
    %42 = vmatpush1.msra.mxu0 0.0
    %43 = vmatprep.subr.mxu0 0.0
    %44 = vmatpush1.msra.mxu0 0.0
    %45 = vmatprep.subr.mxu0 0.0
    %46 = vmatpush1.msra.mxu0 0.0
    %47 = vmatprep.subr.mxu0 0.0
    %48 = vmatpush1.msra.mxu0 0.0
    %49 = vmatprep.subr.mxu0 0.0
    %50 = vmatpush1.msra.mxu0 0.0
    %51 = vmatprep.subr.mxu0 0.0
    %52 = vmatpush1.msra.mxu0 0.0
    %53 = vmatprep.subr.mxu0 0.0
    %54 = vmatpush1.msra.mxu0 0.0
    %55 = vmatprep.subr.mxu0 0.0
    %56 = vmatpush1.msra.mxu0 0.0
    %57 = vmatprep.subr.mxu0 0.0
    %58 = vmatpush1.msra.mxu0 0.0
    %59 = vmatprep.subr.mxu0 0.0
    %60 = vmatpush1.msra.mxu0 0.0
    %61 = vmatprep.subr.mxu0 0.0
    %62 = vmatpush1.msra.mxu0 0.0
    %63 = vmatprep.subr.mxu0 0.0
    %64 = vmatpush1.msra.mxu0 0.0
    %65 = vmatprep.subr.mxu0 0.0
    %66 = vmatpush1.msra.mxu0 0.0
    %67 = vmatprep.subr.mxu0 0.0
    %68 = vmatpush1.msra.mxu0 %v29
    %69 = vmatprep.subr.mxu0 0.0
    %70 = vmatpush2.msra.mxu0 0.0
    %71 = vmatprep.subr.mxu0 0.0
    %72 = vmatpush2.msra.mxu0 0.0
    %73 = vmatprep.subr.mxu0 0.0
    %74 = vmatpush2.msra.mxu0 0.0
    %75 = vmatprep.subr.mxu0 0.0
    %76 = vmatpush2.msra.mxu0 0.0
    %77 = vmatprep.subr.mxu0 0.0
    %78 = vmatpush2.msra.mxu0 0.0
    %79 = vmatprep.subr.mxu0 0.0
    %80 = vmatpush2.msra.mxu0 0.0
    %81 = vmatprep.subr.mxu0 0.0
    %82 = vmatpush2.msra.mxu0 0.0
    %83 = vmatprep.subr.mxu0 0.0
    %84 = vmatpush2.msra.mxu0 0.0
    %85 = vmatprep.subr.mxu0 0.0
    %86 = vmatpush2.msra.mxu0 0.0
    %87 = vmatprep.subr.mxu0 0.0
    %88 = vmatpush2.msra.mxu0 0.0
    %89 = vmatprep.subr.mxu0 0.0
    %90 = vmatpush2.msra.mxu0 0.0
    %91 = vmatprep.subr.mxu0 0.0
    %92 = vmatpush2.msra.mxu0 0.0
    %93 = vmatprep.subr.mxu0 0.0
    %94 = vmatpush2.msra.mxu0 0.0
    %95 = vmatprep.subr.mxu0 0.0
    %96 = vmatpush2.msra.mxu0 0.0
    %97 = vmatprep.subr.mxu0 0.0
    %98 = vmatpush2.msra.mxu0 0.0
    %99 = vmatprep.subr.mxu0 0.0
    %100 = vmatpush2.msra.mxu0 0.0
    %101 = vmatprep.mubr.f32.mxu0 0.0
    %102 = vmatmul.mubr.f32.gmra.mxu0 %v32
    %v103 = vpop.f32.mrf.mxu0
    %v104 = vadd.f32 0.0, %v103
    %v105 = vpop.f32.mrf.mxu0
    %106 = vmatprep.mubr.f32.mxu0 0.0
    %107 = vmatmul.mubr.f32.gmra.mxu0 %v35
    %v108 = vpop.f32.mrf.mxu0
    %v109 = vadd.f32 0.0, %v108
    %v110 = vpop.f32.mrf.mxu0
    %111 = vdwg.mxu0
    %v113 = vsel %vm30, %v23, 0
    %v116 = vsel %vm30, %v24, 0
    %118 = vmatprep.subr.mxu0 0.0
    %119 = vmatpush1.msra.mxu0 0.0
    %120 = vmatprep.subr.mxu0 0.0
    %121 = vmatpush1.msra.mxu0 0.0
    %122 = vmatprep.subr.mxu0 0.0
    %123 = vmatpush1.msra.mxu0 0.0
    %124 = vmatprep.subr.mxu0 0.0
    %125 = vmatpush1.msra.mxu0 0.0
    %126 = vmatprep.subr.mxu0 0.0
    %127 = vmatpush1.msra.mxu0 0.0
    %128 = vmatprep.subr.mxu0 0.0
    %129 = vmatpush1.msra.mxu0 0.0
    %130 = vmatprep.subr.mxu0 0.0
    %131 = vmatpush1.msra.mxu0 0.0
    %132 = vmatprep.subr.mxu0 0.0
    %133 = vmatpush1.msra.mxu0 0.0
    %134 = vmatprep.subr.mxu0 0.0
    %135 = vmatpush1.msra.mxu0 0.0
    %136 = vmatprep.subr.mxu0 0.0
    %137 = vmatpush1.msra.mxu0 0.0
    %138 = vmatprep.subr.mxu0 0.0
    %139 = vmatpush1.msra.mxu0 0.0
    %140 = vmatprep.subr.mxu0 0.0
    %141 = vmatpush1.msra.mxu0 0.0
    %142 = vmatprep.subr.mxu0 0.0
    %143 = vmatpush1.msra.mxu0 0.0
    %144 = vmatprep.subr.mxu0 0.0
    %145 = vmatpush1.msra.mxu0 0.0
    %146 = vmatprep.subr.mxu0 0.0
    %147 = vmatpush1.msra.mxu0 0.0
    %148 = vmatprep.subr.mxu0 0.0
    %149 = vmatpush1.msra.mxu0 %v25
    %150 = vmatprep.subr.mxu0 0.0
    %151 = vmatpush2.msra.mxu0 0.0
    %152 = vmatprep.subr.mxu0 0.0
    %153 = vmatpush2.msra.mxu0 0.0
    %154 = vmatprep.subr.mxu0 0.0
    %155 = vmatpush2.msra.mxu0 0.0
    %156 = vmatprep.subr.mxu0 0.0
    %157 = vmatpush2.msra.mxu0 0.0
    %158 = vmatprep.subr.mxu0 0.0
    %159 = vmatpush2.msra.mxu0 0.0
    %160 = vmatprep.subr.mxu0 0.0
    %161 = vmatpush2.msra.mxu0 0.0
    %162 = vmatprep.subr.mxu0 0.0
    %163 = vmatpush2.msra.mxu0 0.0
    %164 = vmatprep.subr.mxu0 0.0
    %165 = vmatpush2.msra.mxu0 0.0
    %166 = vmatprep.subr.mxu0 0.0
    %167 = vmatpush2.msra.mxu0 0.0
    %168 = vmatprep.subr.mxu0 0.0
    %169 = vmatpush2.msra.mxu0 0.0
    %170 = vmatprep.subr.mxu0 0.0
    %171 = vmatpush2.msra.mxu0 0.0
    %172 = vmatprep.subr.mxu0 0.0
    %173 = vmatpush2.msra.mxu0 0.0
    %174 = vmatprep.subr.mxu0 0.0
    %175 = vmatpush2.msra.mxu0 0.0
    %176 = vmatprep.subr.mxu0 0.0
    %177 = vmatpush2.msra.mxu0 0.0
    %178 = vmatprep.subr.mxu0 0.0
    %179 = vmatpush2.msra.mxu0 0.0
    %180 = vmatprep.subr.mxu0 0.0
    %181 = vmatpush2.msra.mxu0 0.0
    %182 = vmatprep.mubr.f32.mxu0 0.0
    %183 = vmatmul.mubr.f32.gmra.mxu0 %v113
    %v184 = vpop.f32.mrf.mxu0
    %v185 = vadd.f32 %v104, %v184
    %v186 = vpop.f32.mrf.mxu0
    %187 = vmatprep.mubr.f32.mxu0 0.0
    %188 = vmatmul.mubr.f32.gmra.mxu0 %v116
    %v189 = vpop.f32.mrf.mxu0
    %v190 = vadd.f32 %v109, %v189
    %v191 = vpop.f32.mrf.mxu0
    %192 = vdwg.mxu0
    %v193 = vld [vmem:[%s0 + $0x5] sm:$0xff]
    %v194 = vld [vmem:[%s0 + $0xd] sm:$0xff]
    %s195 = scalar_lea.vmem %s1, 16
    %v196 = vld [vmem:[%s195] sm:$0xff]
    %v198 = vsel %vm30, %v193, 0
    %v201 = vsel %vm30, %v194, 0
    %203 = vmatprep.subr.mxu0 0.0
    %204 = vmatpush1.msra.mxu0 0.0
    %205 = vmatprep.subr.mxu0 0.0
    %206 = vmatpush1.msra.mxu0 0.0
    %207 = vmatprep.subr.mxu0 0.0
    %208 = vmatpush1.msra.mxu0 0.0
    %209 = vmatprep.subr.mxu0 0.0
    %210 = vmatpush1.msra.mxu0 0.0
    %211 = vmatprep.subr.mxu0 0.0
    %212 = vmatpush1.msra.mxu0 0.0
    %213 = vmatprep.subr.mxu0 0.0
    %214 = vmatpush1.msra.mxu0 0.0
    %215 = vmatprep.subr.mxu0 0.0
    %216 = vmatpush1.msra.mxu0 0.0
    %217 = vmatprep.subr.mxu0 0.0
    %218 = vmatpush1.msra.mxu0 0.0
    %219 = vmatprep.subr.mxu0 0.0
    %220 = vmatpush1.msra.mxu0 0.0
    %221 = vmatprep.subr.mxu0 0.0
    %222 = vmatpush1.msra.mxu0 0.0
    %223 = vmatprep.subr.mxu0 0.0
    %224 = vmatpush1.msra.mxu0 0.0
    %225 = vmatprep.subr.mxu0 0.0
    %226 = vmatpush1.msra.mxu0 0.0
    %227 = vmatprep.subr.mxu0 0.0
    %228 = vmatpush1.msra.mxu0 0.0
    %229 = vmatprep.subr.mxu0 0.0
    %230 = vmatpush1.msra.mxu0 0.0
    %231 = vmatprep.subr.mxu0 0.0
    %232 = vmatpush1.msra.mxu0 0.0
    %233 = vmatprep.subr.mxu0 0.0
    %234 = vmatpush1.msra.mxu0 %v196
    %235 = vmatprep.subr.mxu0 0.0
    %236 = vmatpush2.msra.mxu0 0.0
    %237 = vmatprep.subr.mxu0 0.0
    %238 = vmatpush2.msra.mxu0 0.0
    %239 = vmatprep.subr.mxu0 0.0
    %240 = vmatpush2.msra.mxu0 0.0
    %241 = vmatprep.subr.mxu0 0.0
    %242 = vmatpush2.msra.mxu0 0.0
    %243 = vmatprep.subr.mxu0 0.0
    %244 = vmatpush2.msra.mxu0 0.0
    %245 = vmatprep.subr.mxu0 0.0
    %246 = vmatpush2.msra.mxu0 0.0
    %247 = vmatprep.subr.mxu0 0.0
    %248 = vmatpush2.msra.mxu0 0.0
    %249 = vmatprep.subr.mxu0 0.0
    %250 = vmatpush2.msra.mxu0 0.0
    %251 = vmatprep.subr.mxu0 0.0
    %252 = vmatpush2.msra.mxu0 0.0
    %253 = vmatprep.subr.mxu0 0.0
    %254 = vmatpush2.msra.mxu0 0.0
    %255 = vmatprep.subr.mxu0 0.0
    %256 = vmatpush2.msra.mxu0 0.0
    %257 = vmatprep.subr.mxu0 0.0
    %258 = vmatpush2.msra.mxu0 0.0
    %259 = vmatprep.subr.mxu0 0.0
    %260 = vmatpush2.msra.mxu0 0.0
    %261 = vmatprep.subr.mxu0 0.0
    %262 = vmatpush2.msra.mxu0 0.0
    %263 = vmatprep.subr.mxu0 0.0
    %264 = vmatpush2.msra.mxu0 0.0
    %265 = vmatprep.subr.mxu0 0.0
    %266 = vmatpush2.msra.mxu0 0.0
    %267 = vmatprep.mubr.f32.mxu0 0.0
    %268 = vmatmul.mubr.f32.gmra.mxu0 %v198
    %v269 = vpop.f32.mrf.mxu0
    %v270 = vadd.f32 0.0, %v269
    %v271 = vpop.f32.mrf.mxu0
    %272 = vmatprep.mubr.f32.mxu0 0.0
    %273 = vmatmul.mubr.f32.gmra.mxu0 %v201
    %v274 = vpop.f32.mrf.mxu0
    %v275 = vadd.f32 0.0, %v274
    %v276 = vpop.f32.mrf.mxu0
    %277 = vdwg.mxu0
    %v278 = vadd.f32 %v185, %v270
    %v279 = vadd.f32 %v190, %v275
    %v280 = vld [vmem:[%s0 + $0x6] sm:$0xff]
    %v281 = vld [vmem:[%s0 + $0xe] sm:$0xff]
    %s282 = scalar_lea.vmem %s1, 24
    %v283 = vld [vmem:[%s282] sm:$0xff]
    %v285 = vsel %vm30, %v280, 0
    %v288 = vsel %vm30, %v281, 0
    %290 = vmatprep.subr.mxu0 0.0
    %291 = vmatpush1.msra.mxu0 0.0
    %292 = vmatprep.subr.mxu0 0.0
    %293 = vmatpush1.msra.mxu0 0.0
    %294 = vmatprep.subr.mxu0 0.0
    %295 = vmatpush1.msra.mxu0 0.0
    %296 = vmatprep.subr.mxu0 0.0
    %297 = vmatpush1.msra.mxu0 0.0
    %298 = vmatprep.subr.mxu0 0.0
    %299 = vmatpush1.msra.mxu0 0.0
    %300 = vmatprep.subr.mxu0 0.0
    %301 = vmatpush1.msra.mxu0 0.0
    %302 = vmatprep.subr.mxu0 0.0
    %303 = vmatpush1.msra.mxu0 0.0
    %304 = vmatprep.subr.mxu0 0.0
    %305 = vmatpush1.msra.mxu0 0.0
    %306 = vmatprep.subr.mxu0 0.0
    %307 = vmatpush1.msra.mxu0 0.0
    %308 = vmatprep.subr.mxu0 0.0
    %309 = vmatpush1.msra.mxu0 0.0
    %310 = vmatprep.subr.mxu0 0.0
    %311 = vmatpush1.msra.mxu0 0.0
    %312 = vmatprep.subr.mxu0 0.0
    %313 = vmatpush1.msra.mxu0 0.0
    %314 = vmatprep.subr.mxu0 0.0
    %315 = vmatpush1.msra.mxu0 0.0
    %316 = vmatprep.subr.mxu0 0.0
    %317 = vmatpush1.msra.mxu0 0.0
    %318 = vmatprep.subr.mxu0 0.0
    %319 = vmatpush1.msra.mxu0 0.0
    %320 = vmatprep.subr.mxu0 0.0
    %321 = vmatpush1.msra.mxu0 %v283
    %322 = vmatprep.subr.mxu0 0.0
    %323 = vmatpush2.msra.mxu0 0.0
    %324 = vmatprep.subr.mxu0 0.0
    %325 = vmatpush2.msra.mxu0 0.0
    %326 = vmatprep.subr.mxu0 0.0
    %327 = vmatpush2.msra.mxu0 0.0
    %328 = vmatprep.subr.mxu0 0.0
    %329 = vmatpush2.msra.mxu0 0.0
    %330 = vmatprep.subr.mxu0 0.0
    %331 = vmatpush2.msra.mxu0 0.0
    %332 = vmatprep.subr.mxu0 0.0
    %333 = vmatpush2.msra.mxu0 0.0
    %334 = vmatprep.subr.mxu0 0.0
    %335 = vmatpush2.msra.mxu0 0.0
    %336 = vmatprep.subr.mxu0 0.0
    %337 = vmatpush2.msra.mxu0 0.0
    %338 = vmatprep.subr.mxu0 0.0
    %339 = vmatpush2.msra.mxu0 0.0
    %340 = vmatprep.subr.mxu0 0.0
    %341 = vmatpush2.msra.mxu0 0.0
    %342 = vmatprep.subr.mxu0 0.0
    %343 = vmatpush2.msra.mxu0 0.0
    %344 = vmatprep.subr.mxu0 0.0
    %345 = vmatpush2.msra.mxu0 0.0
    %346 = vmatprep.subr.mxu0 0.0
    %347 = vmatpush2.msra.mxu0 0.0
    %348 = vmatprep.subr.mxu0 0.0
    %349 = vmatpush2.msra.mxu0 0.0
    %350 = vmatprep.subr.mxu0 0.0
    %351 = vmatpush2.msra.mxu0 0.0
    %352 = vmatprep.subr.mxu0 0.0
    %353 = vmatpush2.msra.mxu0 0.0
    %354 = vmatprep.mubr.f32.mxu0 0.0
    %355 = vmatmul.mubr.f32.gmra.mxu0 %v285
    %v356 = vpop.f32.mrf.mxu0
    %v357 = vadd.f32 0.0, %v356
    %v358 = vpop.f32.mrf.mxu0
    %359 = vmatprep.mubr.f32.mxu0 0.0
    %360 = vmatmul.mubr.f32.gmra.mxu0 %v288
    %v361 = vpop.f32.mrf.mxu0
    %v362 = vadd.f32 0.0, %v361
    %v363 = vpop.f32.mrf.mxu0
    %364 = vdwg.mxu0
    %v365 = vadd.f32 %v278, %v357
    %v366 = vadd.f32 %v279, %v362
    %v367 = vld [vmem:[%s0 + $0x7] sm:$0xff]
    %v368 = vld [vmem:[%s0 + $0xf] sm:$0xff]
    %s369 = scalar_lea.vmem %s1, 32
    %v370 = vld [vmem:[%s369] sm:$0xff]
    %v372 = vsel %vm30, %v367, 0
    %v375 = vsel %vm30, %v368, 0
    %377 = vmatprep.subr.mxu0 0.0
    %378 = vmatpush1.msra.mxu0 0.0
    %379 = vmatprep.subr.mxu0 0.0
    %380 = vmatpush1.msra.mxu0 0.0
    %381 = vmatprep.subr.mxu0 0.0
    %382 = vmatpush1.msra.mxu0 0.0
    %383 = vmatprep.subr.mxu0 0.0
    %384 = vmatpush1.msra.mxu0 0.0
    %385 = vmatprep.subr.mxu0 0.0
    %386 = vmatpush1.msra.mxu0 0.0
    %387 = vmatprep.subr.mxu0 0.0
    %388 = vmatpush1.msra.mxu0 0.0
    %389 = vmatprep.subr.mxu0 0.0
    %390 = vmatpush1.msra.mxu0 0.0
    %391 = vmatprep.subr.mxu0 0.0
    %392 = vmatpush1.msra.mxu0 0.0
    %393 = vmatprep.subr.mxu0 0.0
    %394 = vmatpush1.msra.mxu0 0.0
    %395 = vmatprep.subr.mxu0 0.0
    %396 = vmatpush1.msra.mxu0 0.0
    %397 = vmatprep.subr.mxu0 0.0
    %398 = vmatpush1.msra.mxu0 0.0
    %399 = vmatprep.subr.mxu0 0.0
    %400 = vmatpush1.msra.mxu0 0.0
    %401 = vmatprep.subr.mxu0 0.0
    %402 = vmatpush1.msra.mxu0 0.0
    %403 = vmatprep.subr.mxu0 0.0
    %404 = vmatpush1.msra.mxu0 0.0
    %405 = vmatprep.subr.mxu0 0.0
    %406 = vmatpush1.msra.mxu0 0.0
    %407 = vmatprep.subr.mxu0 0.0
    %408 = vmatpush1.msra.mxu0 %v370
    %409 = vmatprep.subr.mxu0 0.0
    %410 = vmatpush2.msra.mxu0 0.0
    %411 = vmatprep.subr.mxu0 0.0
    %412 = vmatpush2.msra.mxu0 0.0
    %413 = vmatprep.subr.mxu0 0.0
    %414 = vmatpush2.msra.mxu0 0.0
    %415 = vmatprep.subr.mxu0 0.0
    %416 = vmatpush2.msra.mxu0 0.0
    %417 = vmatprep.subr.mxu0 0.0
    %418 = vmatpush2.msra.mxu0 0.0
    %419 = vmatprep.subr.mxu0 0.0
    %420 = vmatpush2.msra.mxu0 0.0
    %421 = vmatprep.subr.mxu0 0.0
    %422 = vmatpush2.msra.mxu0 0.0
    %423 = vmatprep.subr.mxu0 0.0
    %424 = vmatpush2.msra.mxu0 0.0
    %425 = vmatprep.subr.mxu0 0.0
    %426 = vmatpush2.msra.mxu0 0.0
    %427 = vmatprep.subr.mxu0 0.0
    %428 = vmatpush2.msra.mxu0 0.0
    %429 = vmatprep.subr.mxu0 0.0
    %430 = vmatpush2.msra.mxu0 0.0
    %431 = vmatprep.subr.mxu0 0.0
    %432 = vmatpush2.msra.mxu0 0.0
    %433 = vmatprep.subr.mxu0 0.0
    %434 = vmatpush2.msra.mxu0 0.0
    %435 = vmatprep.subr.mxu0 0.0
    %436 = vmatpush2.msra.mxu0 0.0
    %437 = vmatprep.subr.mxu0 0.0
    %438 = vmatpush2.msra.mxu0 0.0
    %439 = vmatprep.subr.mxu0 0.0
    %440 = vmatpush2.msra.mxu0 0.0
    %441 = vmatprep.mubr.f32.mxu0 0.0
    %442 = vmatmul.mubr.f32.gmra.mxu0 %v372
    %v443 = vpop.f32.mrf.mxu0
    %v444 = vadd.f32 0.0, %v443
    %v445 = vpop.f32.mrf.mxu0
    %446 = vmatprep.mubr.f32.mxu0 0.0
    %447 = vmatmul.mubr.f32.gmra.mxu0 %v375
    %v448 = vpop.f32.mrf.mxu0
    %v449 = vadd.f32 0.0, %v448
    %v450 = vpop.f32.mrf.mxu0
    %451 = vdwg.mxu0
    %v452 = vadd.f32 %v365, %v444
    %v453 = vadd.f32 %v366, %v449
    %v454 = vld [vmem:[%s0 + $0x8] sm:$0xff]
    %v455 = vld [vmem:[%s0 + $0x10] sm:$0xff]
    %s456 = scalar_lea.vmem %s1, 40
    %v457 = vld [vmem:[%s456] sm:$0xff]
    %v459 = vsel %vm30, %v454, 0
    %v462 = vsel %vm30, %v455, 0
    %464 = vmatprep.subr.mxu0 0.0
    %465 = vmatpush1.msra.mxu0 0.0
    %466 = vmatprep.subr.mxu0 0.0
    %467 = vmatpush1.msra.mxu0 0.0
    %468 = vmatprep.subr.mxu0 0.0
    %469 = vmatpush1.msra.mxu0 0.0
    %470 = vmatprep.subr.mxu0 0.0
    %471 = vmatpush1.msra.mxu0 0.0
    %472 = vmatprep.subr.mxu0 0.0
    %473 = vmatpush1.msra.mxu0 0.0
    %474 = vmatprep.subr.mxu0 0.0
    %475 = vmatpush1.msra.mxu0 0.0
    %476 = vmatprep.subr.mxu0 0.0
    %477 = vmatpush1.msra.mxu0 0.0
    %478 = vmatprep.subr.mxu0 0.0
    %479 = vmatpush1.msra.mxu0 0.0
    %480 = vmatprep.subr.mxu0 0.0
    %481 = vmatpush1.msra.mxu0 0.0
    %482 = vmatprep.subr.mxu0 0.0
    %483 = vmatpush1.msra.mxu0 0.0
    %484 = vmatprep.subr.mxu0 0.0
    %485 = vmatpush1.msra.mxu0 0.0
    %486 = vmatprep.subr.mxu0 0.0
    %487 = vmatpush1.msra.mxu0 0.0
    %488 = vmatprep.subr.mxu0 0.0
    %489 = vmatpush1.msra.mxu0 0.0
    %490 = vmatprep.subr.mxu0 0.0
    %491 = vmatpush1.msra.mxu0 0.0
    %492 = vmatprep.subr.mxu0 0.0
    %493 = vmatpush1.msra.mxu0 0.0
    %494 = vmatprep.subr.mxu0 0.0
    %495 = vmatpush1.msra.mxu0 %v457
    %496 = vmatprep.subr.mxu0 0.0
    %497 = vmatpush2.msra.mxu0 0.0
    %498 = vmatprep.subr.mxu0 0.0
    %499 = vmatpush2.msra.mxu0 0.0
    %500 = vmatprep.subr.mxu0 0.0
    %501 = vmatpush2.msra.mxu0 0.0
    %502 = vmatprep.subr.mxu0 0.0
    %503 = vmatpush2.msra.mxu0 0.0
    %504 = vmatprep.subr.mxu0 0.0
    %505 = vmatpush2.msra.mxu0 0.0
    %506 = vmatprep.subr.mxu0 0.0
    %507 = vmatpush2.msra.mxu0 0.0
    %508 = vmatprep.subr.mxu0 0.0
    %509 = vmatpush2.msra.mxu0 0.0
    %510 = vmatprep.subr.mxu0 0.0
    %511 = vmatpush2.msra.mxu0 0.0
    %512 = vmatprep.subr.mxu0 0.0
    %513 = vmatpush2.msra.mxu0 0.0
    %514 = vmatprep.subr.mxu0 0.0
    %515 = vmatpush2.msra.mxu0 0.0
    %516 = vmatprep.subr.mxu0 0.0
    %517 = vmatpush2.msra.mxu0 0.0
    %518 = vmatprep.subr.mxu0 0.0
    %519 = vmatpush2.msra.mxu0 0.0
    %520 = vmatprep.subr.mxu0 0.0
    %521 = vmatpush2.msra.mxu0 0.0
    %522 = vmatprep.subr.mxu0 0.0
    %523 = vmatpush2.msra.mxu0 0.0
    %524 = vmatprep.subr.mxu0 0.0
    %525 = vmatpush2.msra.mxu0 0.0
    %526 = vmatprep.subr.mxu0 0.0
    %527 = vmatpush2.msra.mxu0 0.0
    %528 = vmatprep.mubr.f32.mxu0 0.0
    %529 = vmatmul.mubr.f32.gmra.mxu0 %v459
    %v530 = vpop.f32.mrf.mxu0
    %v531 = vadd.f32 0.0, %v530
    %v532 = vpop.f32.mrf.mxu0
    %533 = vmatprep.mubr.f32.mxu0 0.0
    %534 = vmatmul.mubr.f32.gmra.mxu0 %v462
    %v535 = vpop.f32.mrf.mxu0
    %v536 = vadd.f32 0.0, %v535
    %v537 = vpop.f32.mrf.mxu0
    %538 = vdwg.mxu0
    %v539 = vadd.f32 %v452, %v531
    %v540 = vadd.f32 %v453, %v536
    %v541 = vld [vmem:[%s0 + $0x9] sm:$0xff]
    %v542 = vld [vmem:[%s0 + $0x11] sm:$0xff]
    %s543 = scalar_lea.vmem %s1, 48
    %v544 = vld [vmem:[%s543] sm:$0xff]
    %v546 = vsel %vm30, %v541, 0
    %v549 = vsel %vm30, %v542, 0
    %551 = vmatprep.subr.mxu0 0.0
    %552 = vmatpush1.msra.mxu0 0.0
    %553 = vmatprep.subr.mxu0 0.0
    %554 = vmatpush1.msra.mxu0 0.0
    %555 = vmatprep.subr.mxu0 0.0
    %556 = vmatpush1.msra.mxu0 0.0
    %557 = vmatprep.subr.mxu0 0.0
    %558 = vmatpush1.msra.mxu0 0.0
    %559 = vmatprep.subr.mxu0 0.0
    %560 = vmatpush1.msra.mxu0 0.0
    %561 = vmatprep.subr.mxu0 0.0
    %562 = vmatpush1.msra.mxu0 0.0
    %563 = vmatprep.subr.mxu0 0.0
    %564 = vmatpush1.msra.mxu0 0.0
    %565 = vmatprep.subr.mxu0 0.0
    %566 = vmatpush1.msra.mxu0 0.0
    %567 = vmatprep.subr.mxu0 0.0
    %568 = vmatpush1.msra.mxu0 0.0
    %569 = vmatprep.subr.mxu0 0.0
    %570 = vmatpush1.msra.mxu0 0.0
    %571 = vmatprep.subr.mxu0 0.0
    %572 = vmatpush1.msra.mxu0 0.0
    %573 = vmatprep.subr.mxu0 0.0
    %574 = vmatpush1.msra.mxu0 0.0
    %575 = vmatprep.subr.mxu0 0.0
    %576 = vmatpush1.msra.mxu0 0.0
    %577 = vmatprep.subr.mxu0 0.0
    %578 = vmatpush1.msra.mxu0 0.0
    %579 = vmatprep.subr.mxu0 0.0
    %580 = vmatpush1.msra.mxu0 0.0
    %581 = vmatprep.subr.mxu0 0.0
    %582 = vmatpush1.msra.mxu0 %v544
    %583 = vmatprep.subr.mxu0 0.0
    %584 = vmatpush2.msra.mxu0 0.0
    %585 = vmatprep.subr.mxu0 0.0
    %586 = vmatpush2.msra.mxu0 0.0
    %587 = vmatprep.subr.mxu0 0.0
    %588 = vmatpush2.msra.mxu0 0.0
    %589 = vmatprep.subr.mxu0 0.0
    %590 = vmatpush2.msra.mxu0 0.0
    %591 = vmatprep.subr.mxu0 0.0
    %592 = vmatpush2.msra.mxu0 0.0
    %593 = vmatprep.subr.mxu0 0.0
    %594 = vmatpush2.msra.mxu0 0.0
    %595 = vmatprep.subr.mxu0 0.0
    %596 = vmatpush2.msra.mxu0 0.0
    %597 = vmatprep.subr.mxu0 0.0
    %598 = vmatpush2.msra.mxu0 0.0
    %599 = vmatprep.subr.mxu0 0.0
    %600 = vmatpush2.msra.mxu0 0.0
    %601 = vmatprep.subr.mxu0 0.0
    %602 = vmatpush2.msra.mxu0 0.0
    %603 = vmatprep.subr.mxu0 0.0
    %604 = vmatpush2.msra.mxu0 0.0
    %605 = vmatprep.subr.mxu0 0.0
    %606 = vmatpush2.msra.mxu0 0.0
    %607 = vmatprep.subr.mxu0 0.0
    %608 = vmatpush2.msra.mxu0 0.0
    %609 = vmatprep.subr.mxu0 0.0
    %610 = vmatpush2.msra.mxu0 0.0
    %611 = vmatprep.subr.mxu0 0.0
    %612 = vmatpush2.msra.mxu0 0.0
    %613 = vmatprep.subr.mxu0 0.0
    %614 = vmatpush2.msra.mxu0 0.0
    %615 = vmatprep.mubr.f32.mxu0 0.0
    %616 = vmatmul.mubr.f32.gmra.mxu0 %v546
    %v617 = vpop.f32.mrf.mxu0
    %v618 = vadd.f32 0.0, %v617
    %v619 = vpop.f32.mrf.mxu0
    %620 = vmatprep.mubr.f32.mxu0 0.0
    %621 = vmatmul.mubr.f32.gmra.mxu0 %v549
    %v622 = vpop.f32.mrf.mxu0
    %v623 = vadd.f32 0.0, %v622
    %v624 = vpop.f32.mrf.mxu0
    %625 = vdwg.mxu0
    %v626 = vadd.f32 %v539, %v618
    %v627 = vadd.f32 %v540, %v623
    %v628 = vld [vmem:[%s2] sm:$0x1]
    %v630 = vlaneseq
    %v631 = vshrl.u32 %v630, 7
    %v632 = vsub.s32 0, %v631
    %v633 = vrot.slane %v628, %v632
    %v635 = vadd.f32 %v626, %v633
    %v636 = vadd.f32 %v627, %v633
    %vm637 = vcmp.ge.f32.partialorder %v635, 0.0
    %vm638 = vcmp.ge.f32.partialorder %v636, 0.0
    %v639 = vmul.f32 %v635, 0.01
    %v640 = vmul.f32 %v636, 0.01
    %v641 = vsel %vm637, %v635, %v639
    %v642 = vsel %vm638, %v636, %v640
    %v643 = vld [vmem:[%s0] sm:$0xff]
    %v644 = vld [vmem:[%s0 + $0x8] sm:$0xff]
    %s645 = scalar_lea.vmem %s1, 56
    %v646 = vld [vmem:[%s645] sm:$0xff]
    %v647 = vld [vmem:[%s0 + $0x2] sm:$0xff]
    %v648 = vld [vmem:[%s0 + $0xa] sm:$0xff]
    %s649 = scalar_lea.vmem %s1, 64
    %v650 = vld [vmem:[%s649] sm:$0xff]
    %v652 = vsel %vm30, %v647, 0
    %v655 = vsel %vm30, %v648, 0
    %657 = vmatprep.subr.mxu0 0.0
    %658 = vmatpush1.msra.mxu0 0.0
    %659 = vmatprep.subr.mxu0 0.0
    %660 = vmatpush1.msra.mxu0 0.0
    %661 = vmatprep.subr.mxu0 0.0
    %662 = vmatpush1.msra.mxu0 0.0
    %663 = vmatprep.subr.mxu0 0.0
    %664 = vmatpush1.msra.mxu0 0.0
    %665 = vmatprep.subr.mxu0 0.0
    %666 = vmatpush1.msra.mxu0 0.0
    %667 = vmatprep.subr.mxu0 0.0
    %668 = vmatpush1.msra.mxu0 0.0
    %669 = vmatprep.subr.mxu0 0.0
    %670 = vmatpush1.msra.mxu0 0.0
    %671 = vmatprep.subr.mxu0 0.0
    %672 = vmatpush1.msra.mxu0 0.0
    %673 = vmatprep.subr.mxu0 0.0
    %674 = vmatpush1.msra.mxu0 0.0
    %675 = vmatprep.subr.mxu0 0.0
    %676 = vmatpush1.msra.mxu0 0.0
    %677 = vmatprep.subr.mxu0 0.0
    %678 = vmatpush1.msra.mxu0 0.0
    %679 = vmatprep.subr.mxu0 0.0
    %680 = vmatpush1.msra.mxu0 0.0
    %681 = vmatprep.subr.mxu0 0.0
    %682 = vmatpush1.msra.mxu0 0.0
    %683 = vmatprep.subr.mxu0 0.0
    %684 = vmatpush1.msra.mxu0 0.0
    %685 = vmatprep.subr.mxu0 0.0
    %686 = vmatpush1.msra.mxu0 0.0
    %687 = vmatprep.subr.mxu0 0.0
    %688 = vmatpush1.msra.mxu0 %v650
    %689 = vmatprep.subr.mxu0 0.0
    %690 = vmatpush2.msra.mxu0 0.0
    %691 = vmatprep.subr.mxu0 0.0
    %692 = vmatpush2.msra.mxu0 0.0
    %693 = vmatprep.subr.mxu0 0.0
    %694 = vmatpush2.msra.mxu0 0.0
    %695 = vmatprep.subr.mxu0 0.0
    %696 = vmatpush2.msra.mxu0 0.0
    %697 = vmatprep.subr.mxu0 0.0
    %698 = vmatpush2.msra.mxu0 0.0
    %699 = vmatprep.subr.mxu0 0.0
    %700 = vmatpush2.msra.mxu0 0.0
    %701 = vmatprep.subr.mxu0 0.0
    %702 = vmatpush2.msra.mxu0 0.0
    %703 = vmatprep.subr.mxu0 0.0
    %704 = vmatpush2.msra.mxu0 0.0
    %705 = vmatprep.subr.mxu0 0.0
    %706 = vmatpush2.msra.mxu0 0.0
    %707 = vmatprep.subr.mxu0 0.0
    %708 = vmatpush2.msra.mxu0 0.0
    %709 = vmatprep.subr.mxu0 0.0
    %710 = vmatpush2.msra.mxu0 0.0
    %711 = vmatprep.subr.mxu0 0.0
    %712 = vmatpush2.msra.mxu0 0.0
    %713 = vmatprep.subr.mxu0 0.0
    %714 = vmatpush2.msra.mxu0 0.0
    %715 = vmatprep.subr.mxu0 0.0
    %716 = vmatpush2.msra.mxu0 0.0
    %717 = vmatprep.subr.mxu0 0.0
    %718 = vmatpush2.msra.mxu0 0.0
    %719 = vmatprep.subr.mxu0 0.0
    %720 = vmatpush2.msra.mxu0 0.0
    %721 = vmatprep.mubr.f32.mxu0 0.0
    %722 = vmatmul.mubr.f32.gmra.mxu0 %v652
    %v723 = vpop.f32.mrf.mxu0
    %v724 = vadd.f32 0.0, %v723
    %v725 = vpop.f32.mrf.mxu0
    %726 = vmatprep.mubr.f32.mxu0 0.0
    %727 = vmatmul.mubr.f32.gmra.mxu0 %v655
    %v728 = vpop.f32.mrf.mxu0
    %v729 = vadd.f32 0.0, %v728
    %v730 = vpop.f32.mrf.mxu0
    %731 = vdwg.mxu0
    %v733 = vsel %vm30, %v643, 0
    %v736 = vsel %vm30, %v644, 0
    %738 = vmatprep.subr.mxu0 0.0
    %739 = vmatpush1.msra.mxu0 0.0
    %740 = vmatprep.subr.mxu0 0.0
    %741 = vmatpush1.msra.mxu0 0.0
    %742 = vmatprep.subr.mxu0 0.0
    %743 = vmatpush1.msra.mxu0 0.0
    %744 = vmatprep.subr.mxu0 0.0
    %745 = vmatpush1.msra.mxu0 0.0
    %746 = vmatprep.subr.mxu0 0.0
    %747 = vmatpush1.msra.mxu0 0.0
    %748 = vmatprep.subr.mxu0 0.0
    %749 = vmatpush1.msra.mxu0 0.0
    %750 = vmatprep.subr.mxu0 0.0
    %751 = vmatpush1.msra.mxu0 0.0
    %752 = vmatprep.subr.mxu0 0.0
    %753 = vmatpush1.msra.mxu0 0.0
    %754 = vmatprep.subr.mxu0 0.0
    %755 = vmatpush1.msra.mxu0 0.0
    %756 = vmatprep.subr.mxu0 0.0
    %757 = vmatpush1.msra.mxu0 0.0
    %758 = vmatprep.subr.mxu0 0.0
    %759 = vmatpush1.msra.mxu0 0.0
    %760 = vmatprep.subr.mxu0 0.0
    %761 = vmatpush1.msra.mxu0 0.0
    %762 = vmatprep.subr.mxu0 0.0
    %763 = vmatpush1.msra.mxu0 0.0
    %764 = vmatprep.subr.mxu0 0.0
    %765 = vmatpush1.msra.mxu0 0.0
    %766 = vmatprep.subr.mxu0 0.0
    %767 = vmatpush1.msra.mxu0 0.0
    %768 = vmatprep.subr.mxu0 0.0
    %769 = vmatpush1.msra.mxu0 %v646
    %770 = vmatprep.subr.mxu0 0.0
    %771 = vmatpush2.msra.mxu0 0.0
    %772 = vmatprep.subr.mxu0 0.0
    %773 = vmatpush2.msra.mxu0 0.0
    %774 = vmatprep.subr.mxu0 0.0
    %775 = vmatpush2.msra.mxu0 0.0
    %776 = vmatprep.subr.mxu0 0.0
    %777 = vmatpush2.msra.mxu0 0.0
    %778 = vmatprep.subr.mxu0 0.0
    %779 = vmatpush2.msra.mxu0 0.0
    %780 = vmatprep.subr.mxu0 0.0
    %781 = vmatpush2.msra.mxu0 0.0
    %782 = vmatprep.subr.mxu0 0.0
    %783 = vmatpush2.msra.mxu0 0.0
    %784 = vmatprep.subr.mxu0 0.0
    %785 = vmatpush2.msra.mxu0 0.0
    %786 = vmatprep.subr.mxu0 0.0
    %787 = vmatpush2.msra.mxu0 0.0
    %788 = vmatprep.subr.mxu0 0.0
    %789 = vmatpush2.msra.mxu0 0.0
    %790 = vmatprep.subr.mxu0 0.0
    %791 = vmatpush2.msra.mxu0 0.0
    %792 = vmatprep.subr.mxu0 0.0
    %793 = vmatpush2.msra.mxu0 0.0
    %794 = vmatprep.subr.mxu0 0.0
    %795 = vmatpush2.msra.mxu0 0.0
    %796 = vmatprep.subr.mxu0 0.0
    %797 = vmatpush2.msra.mxu0 0.0
    %798 = vmatprep.subr.mxu0 0.0
    %799 = vmatpush2.msra.mxu0 0.0
    %800 = vmatprep.subr.mxu0 0.0
    %801 = vmatpush2.msra.mxu0 0.0
    %802 = vmatprep.mubr.f32.mxu0 0.0
    %803 = vmatmul.mubr.f32.gmra.mxu0 %v733
    %v804 = vpop.f32.mrf.mxu0
    %v805 = vadd.f32 %v724, %v804
    %v806 = vpop.f32.mrf.mxu0
    %807 = vmatprep.mubr.f32.mxu0 0.0
    %808 = vmatmul.mubr.f32.gmra.mxu0 %v736
    %v809 = vpop.f32.mrf.mxu0
    %v810 = vadd.f32 %v729, %v809
    %v811 = vpop.f32.mrf.mxu0
    %812 = vdwg.mxu0
    %s813 = scalar_lea.vmem %s1, 72
    %v814 = vld [vmem:[%s813] sm:$0xff]
    %815 = vmatprep.subr.mxu0 0.0
    %816 = vmatpush1.msra.mxu0 0.0
    %817 = vmatprep.subr.mxu0 0.0
    %818 = vmatpush1.msra.mxu0 0.0
    %819 = vmatprep.subr.mxu0 0.0
    %820 = vmatpush1.msra.mxu0 0.0
    %821 = vmatprep.subr.mxu0 0.0
    %822 = vmatpush1.msra.mxu0 0.0
    %823 = vmatprep.subr.mxu0 0.0
    %824 = vmatpush1.msra.mxu0 0.0
    %825 = vmatprep.subr.mxu0 0.0
    %826 = vmatpush1.msra.mxu0 0.0
    %827 = vmatprep.subr.mxu0 0.0
    %828 = vmatpush1.msra.mxu0 0.0
    %829 = vmatprep.subr.mxu0 0.0
    %830 = vmatpush1.msra.mxu0 0.0
    %831 = vmatprep.subr.mxu0 0.0
    %832 = vmatpush1.msra.mxu0 0.0
    %833 = vmatprep.subr.mxu0 0.0
    %834 = vmatpush1.msra.mxu0 0.0
    %835 = vmatprep.subr.mxu0 0.0
    %836 = vmatpush1.msra.mxu0 0.0
    %837 = vmatprep.subr.mxu0 0.0
    %838 = vmatpush1.msra.mxu0 0.0
    %839 = vmatprep.subr.mxu0 0.0
    %840 = vmatpush1.msra.mxu0 0.0
    %841 = vmatprep.subr.mxu0 0.0
    %842 = vmatpush1.msra.mxu0 0.0
    %843 = vmatprep.subr.mxu0 0.0
    %844 = vmatpush1.msra.mxu0 0.0
    %845 = vmatprep.subr.mxu0 0.0
    %846 = vmatpush1.msra.mxu0 %v814
    %847 = vmatprep.subr.mxu0 0.0
    %848 = vmatpush2.msra.mxu0 0.0
    %849 = vmatprep.subr.mxu0 0.0
    %850 = vmatpush2.msra.mxu0 0.0
    %851 = vmatprep.subr.mxu0 0.0
    %852 = vmatpush2.msra.mxu0 0.0
    %853 = vmatprep.subr.mxu0 0.0
    %854 = vmatpush2.msra.mxu0 0.0
    %855 = vmatprep.subr.mxu0 0.0
    %856 = vmatpush2.msra.mxu0 0.0
    %857 = vmatprep.subr.mxu0 0.0
    %858 = vmatpush2.msra.mxu0 0.0
    %859 = vmatprep.subr.mxu0 0.0
    %860 = vmatpush2.msra.mxu0 0.0
    %861 = vmatprep.subr.mxu0 0.0
    %862 = vmatpush2.msra.mxu0 0.0
    %863 = vmatprep.subr.mxu0 0.0
    %864 = vmatpush2.msra.mxu0 0.0
    %865 = vmatprep.subr.mxu0 0.0
    %866 = vmatpush2.msra.mxu0 0.0
    %867 = vmatprep.subr.mxu0 0.0
    %868 = vmatpush2.msra.mxu0 0.0
    %869 = vmatprep.subr.mxu0 0.0
    %870 = vmatpush2.msra.mxu0 0.0
    %871 = vmatprep.subr.mxu0 0.0
    %872 = vmatpush2.msra.mxu0 0.0
    %873 = vmatprep.subr.mxu0 0.0
    %874 = vmatpush2.msra.mxu0 0.0
    %875 = vmatprep.subr.mxu0 0.0
    %876 = vmatpush2.msra.mxu0 0.0
    %877 = vmatprep.subr.mxu0 0.0
    %878 = vmatpush2.msra.mxu0 0.0
    %879 = vmatprep.mubr.f32.mxu0 0.0
    %880 = vmatmul.mubr.f32.gmra.mxu0 %v32
    %v881 = vpop.f32.mrf.mxu0
    %v882 = vadd.f32 0.0, %v881
    %v883 = vpop.f32.mrf.mxu0
    %884 = vmatprep.mubr.f32.mxu0 0.0
    %885 = vmatmul.mubr.f32.gmra.mxu0 %v35
    %v886 = vpop.f32.mrf.mxu0
    %v887 = vadd.f32 0.0, %v886
    %v888 = vpop.f32.mrf.mxu0
    %889 = vdwg.mxu0
    %v890 = vadd.f32 %v805, %v882
    %v891 = vadd.f32 %v810, %v887
    %s892 = scalar_lea.vmem %s1, 80
    %v893 = vld [vmem:[%s892] sm:$0xff]
    %894 = vmatprep.subr.mxu0 0.0
    %895 = vmatpush1.msra.mxu0 0.0
    %896 = vmatprep.subr.mxu0 0.0
    %897 = vmatpush1.msra.mxu0 0.0
    %898 = vmatprep.subr.mxu0 0.0
    %899 = vmatpush1.msra.mxu0 0.0
    %900 = vmatprep.subr.mxu0 0.0
    %901 = vmatpush1.msra.mxu0 0.0
    %902 = vmatprep.subr.mxu0 0.0
    %903 = vmatpush1.msra.mxu0 0.0
    %904 = vmatprep.subr.mxu0 0.0
    %905 = vmatpush1.msra.mxu0 0.0
    %906 = vmatprep.subr.mxu0 0.0
    %907 = vmatpush1.msra.mxu0 0.0
    %908 = vmatprep.subr.mxu0 0.0
    %909 = vmatpush1.msra.mxu0 0.0
    %910 = vmatprep.subr.mxu0 0.0
    %911 = vmatpush1.msra.mxu0 0.0
    %912 = vmatprep.subr.mxu0 0.0
    %913 = vmatpush1.msra.mxu0 0.0
    %914 = vmatprep.subr.mxu0 0.0
    %915 = vmatpush1.msra.mxu0 0.0
    %916 = vmatprep.subr.mxu0 0.0
    %917 = vmatpush1.msra.mxu0 0.0
    %918 = vmatprep.subr.mxu0 0.0
    %919 = vmatpush1.msra.mxu0 0.0
    %920 = vmatprep.subr.mxu0 0.0
    %921 = vmatpush1.msra.mxu0 0.0
    %922 = vmatprep.subr.mxu0 0.0
    %923 = vmatpush1.msra.mxu0 0.0
    %924 = vmatprep.subr.mxu0 0.0
    %925 = vmatpush1.msra.mxu0 %v893
    %926 = vmatprep.subr.mxu0 0.0
    %927 = vmatpush2.msra.mxu0 0.0
    %928 = vmatprep.subr.mxu0 0.0
    %929 = vmatpush2.msra.mxu0 0.0
    %930 = vmatprep.subr.mxu0 0.0
    %931 = vmatpush2.msra.mxu0 0.0
    %932 = vmatprep.subr.mxu0 0.0
    %933 = vmatpush2.msra.mxu0 0.0
    %934 = vmatprep.subr.mxu0 0.0
    %935 = vmatpush2.msra.mxu0 0.0
    %936 = vmatprep.subr.mxu0 0.0
    %937 = vmatpush2.msra.mxu0 0.0
    %938 = vmatprep.subr.mxu0 0.0
    %939 = vmatpush2.msra.mxu0 0.0
    %940 = vmatprep.subr.mxu0 0.0
    %941 = vmatpush2.msra.mxu0 0.0
    %942 = vmatprep.subr.mxu0 0.0
    %943 = vmatpush2.msra.mxu0 0.0
    %944 = vmatprep.subr.mxu0 0.0
    %945 = vmatpush2.msra.mxu0 0.0
    %946 = vmatprep.subr.mxu0 0.0
    %947 = vmatpush2.msra.mxu0 0.0
    %948 = vmatprep.subr.mxu0 0.0
    %949 = vmatpush2.msra.mxu0 0.0
    %950 = vmatprep.subr.mxu0 0.0
    %951 = vmatpush2.msra.mxu0 0.0
    %952 = vmatprep.subr.mxu0 0.0
    %953 = vmatpush2.msra.mxu0 0.0
    %954 = vmatprep.subr.mxu0 0.0
    %955 = vmatpush2.msra.mxu0 0.0
    %956 = vmatprep.subr.mxu0 0.0
    %957 = vmatpush2.msra.mxu0 0.0
    %958 = vmatprep.mubr.f32.mxu0 0.0
    %959 = vmatmul.mubr.f32.gmra.mxu0 %v285
    %v960 = vpop.f32.mrf.mxu0
    %v961 = vadd.f32 0.0, %v960
    %v962 = vpop.f32.mrf.mxu0
    %963 = vmatprep.mubr.f32.mxu0 0.0
    %964 = vmatmul.mubr.f32.gmra.mxu0 %v288
    %v965 = vpop.f32.mrf.mxu0
    %v966 = vadd.f32 0.0, %v965
    %v967 = vpop.f32.mrf.mxu0
    %968 = vdwg.mxu0
    %v969 = vadd.f32 %v890, %v961
    %v970 = vadd.f32 %v891, %v966
    %s971 = scalar_lea.vmem %s1, 88
    %v972 = vld [vmem:[%s971] sm:$0xff]
    %973 = vmatprep.subr.mxu0 0.0
    %974 = vmatpush1.msra.mxu0 0.0
    %975 = vmatprep.subr.mxu0 0.0
    %976 = vmatpush1.msra.mxu0 0.0
    %977 = vmatprep.subr.mxu0 0.0
    %978 = vmatpush1.msra.mxu0 0.0
    %979 = vmatprep.subr.mxu0 0.0
    %980 = vmatpush1.msra.mxu0 0.0
    %981 = vmatprep.subr.mxu0 0.0
    %982 = vmatpush1.msra.mxu0 0.0
    %983 = vmatprep.subr.mxu0 0.0
    %984 = vmatpush1.msra.mxu0 0.0
    %985 = vmatprep.subr.mxu0 0.0
    %986 = vmatpush1.msra.mxu0 0.0
    %987 = vmatprep.subr.mxu0 0.0
    %988 = vmatpush1.msra.mxu0 0.0
    %989 = vmatprep.subr.mxu0 0.0
    %990 = vmatpush1.msra.mxu0 0.0
    %991 = vmatprep.subr.mxu0 0.0
    %992 = vmatpush1.msra.mxu0 0.0
    %993 = vmatprep.subr.mxu0 0.0
    %994 = vmatpush1.msra.mxu0 0.0
    %995 = vmatprep.subr.mxu0 0.0
    %996 = vmatpush1.msra.mxu0 0.0
    %997 = vmatprep.subr.mxu0 0.0
    %998 = vmatpush1.msra.mxu0 0.0
    %999 = vmatprep.subr.mxu0 0.0
    %1000 = vmatpush1.msra.mxu0 0.0
    %1001 = vmatprep.subr.mxu0 0.0
    %1002 = vmatpush1.msra.mxu0 0.0
    %1003 = vmatprep.subr.mxu0 0.0
    %1004 = vmatpush1.msra.mxu0 %v972
    %1005 = vmatprep.subr.mxu0 0.0
    %1006 = vmatpush2.msra.mxu0 0.0
    %1007 = vmatprep.subr.mxu0 0.0
    %1008 = vmatpush2.msra.mxu0 0.0
    %1009 = vmatprep.subr.mxu0 0.0
    %1010 = vmatpush2.msra.mxu0 0.0
    %1011 = vmatprep.subr.mxu0 0.0
    %1012 = vmatpush2.msra.mxu0 0.0
    %1013 = vmatprep.subr.mxu0 0.0
    %1014 = vmatpush2.msra.mxu0 0.0
    %1015 = vmatprep.subr.mxu0 0.0
    %1016 = vmatpush2.msra.mxu0 0.0
    %1017 = vmatprep.subr.mxu0 0.0
    %1018 = vmatpush2.msra.mxu0 0.0
    %1019 = vmatprep.subr.mxu0 0.0
    %1020 = vmatpush2.msra.mxu0 0.0
    %1021 = vmatprep.subr.mxu0 0.0
    %1022 = vmatpush2.msra.mxu0 0.0
    %1023 = vmatprep.subr.mxu0 0.0
    %1024 = vmatpush2.msra.mxu0 0.0
    %1025 = vmatprep.subr.mxu0 0.0
    %1026 = vmatpush2.msra.mxu0 0.0
    %1027 = vmatprep.subr.mxu0 0.0
    %1028 = vmatpush2.msra.mxu0 0.0
    %1029 = vmatprep.subr.mxu0 0.0
    %1030 = vmatpush2.msra.mxu0 0.0
    %1031 = vmatprep.subr.mxu0 0.0
    %1032 = vmatpush2.msra.mxu0 0.0
    %1033 = vmatprep.subr.mxu0 0.0
    %1034 = vmatpush2.msra.mxu0 0.0
    %1035 = vmatprep.subr.mxu0 0.0
    %1036 = vmatpush2.msra.mxu0 0.0
    %1037 = vmatprep.mubr.f32.mxu0 0.0
    %1038 = vmatmul.mubr.f32.gmra.mxu0 %v459
    %v1039 = vpop.f32.mrf.mxu0
    %v1040 = vadd.f32 0.0, %v1039
    %v1041 = vpop.f32.mrf.mxu0
    %1042 = vmatprep.mubr.f32.mxu0 0.0
    %1043 = vmatmul.mubr.f32.gmra.mxu0 %v462
    %v1044 = vpop.f32.mrf.mxu0
    %v1045 = vadd.f32 0.0, %v1044
    %v1046 = vpop.f32.mrf.mxu0
    %1047 = vdwg.mxu0
    %v1048 = vadd.f32 %v969, %v1040
    %v1049 = vadd.f32 %v970, %v1045
    %v1050 = vld [vmem:[%s0 + $0xa] sm:$0xff]
    %v1051 = vld [vmem:[%s0 + $0x12] sm:$0xff]
    %s1052 = scalar_lea.vmem %s1, 96
    %v1053 = vld [vmem:[%s1052] sm:$0xff]
    %v1055 = vsel %vm30, %v1050, 0
    %v1058 = vsel %vm30, %v1051, 0
    %1060 = vmatprep.subr.mxu0 0.0
    %1061 = vmatpush1.msra.mxu0 0.0
    %1062 = vmatprep.subr.mxu0 0.0
    %1063 = vmatpush1.msra.mxu0 0.0
    %1064 = vmatprep.subr.mxu0 0.0
    %1065 = vmatpush1.msra.mxu0 0.0
    %1066 = vmatprep.subr.mxu0 0.0
    %1067 = vmatpush1.msra.mxu0 0.0
    %1068 = vmatprep.subr.mxu0 0.0
    %1069 = vmatpush1.msra.mxu0 0.0
    %1070 = vmatprep.subr.mxu0 0.0
    %1071 = vmatpush1.msra.mxu0 0.0
    %1072 = vmatprep.subr.mxu0 0.0
    %1073 = vmatpush1.msra.mxu0 0.0
    %1074 = vmatprep.subr.mxu0 0.0
    %1075 = vmatpush1.msra.mxu0 0.0
    %1076 = vmatprep.subr.mxu0 0.0
    %1077 = vmatpush1.msra.mxu0 0.0
    %1078 = vmatprep.subr.mxu0 0.0
    %1079 = vmatpush1.msra.mxu0 0.0
    %1080 = vmatprep.subr.mxu0 0.0
    %1081 = vmatpush1.msra.mxu0 0.0
    %1082 = vmatprep.subr.mxu0 0.0
    %1083 = vmatpush1.msra.mxu0 0.0
    %1084 = vmatprep.subr.mxu0 0.0
    %1085 = vmatpush1.msra.mxu0 0.0
    %1086 = vmatprep.subr.mxu0 0.0
    %1087 = vmatpush1.msra.mxu0 0.0
    %1088 = vmatprep.subr.mxu0 0.0
    %1089 = vmatpush1.msra.mxu0 0.0
    %1090 = vmatprep.subr.mxu0 0.0
    %1091 = vmatpush1.msra.mxu0 %v1053
    %1092 = vmatprep.subr.mxu0 0.0
    %1093 = vmatpush2.msra.mxu0 0.0
    %1094 = vmatprep.subr.mxu0 0.0
    %1095 = vmatpush2.msra.mxu0 0.0
    %1096 = vmatprep.subr.mxu0 0.0
    %1097 = vmatpush2.msra.mxu0 0.0
    %1098 = vmatprep.subr.mxu0 0.0
    %1099 = vmatpush2.msra.mxu0 0.0
    %1100 = vmatprep.subr.mxu0 0.0
    %1101 = vmatpush2.msra.mxu0 0.0
    %1102 = vmatprep.subr.mxu0 0.0
    %1103 = vmatpush2.msra.mxu0 0.0
    %1104 = vmatprep.subr.mxu0 0.0
    %1105 = vmatpush2.msra.mxu0 0.0
    %1106 = vmatprep.subr.mxu0 0.0
    %1107 = vmatpush2.msra.mxu0 0.0
    %1108 = vmatprep.subr.mxu0 0.0
    %1109 = vmatpush2.msra.mxu0 0.0
    %1110 = vmatprep.subr.mxu0 0.0
    %1111 = vmatpush2.msra.mxu0 0.0
    %1112 = vmatprep.subr.mxu0 0.0
    %1113 = vmatpush2.msra.mxu0 0.0
    %1114 = vmatprep.subr.mxu0 0.0
    %1115 = vmatpush2.msra.mxu0 0.0
    %1116 = vmatprep.subr.mxu0 0.0
    %1117 = vmatpush2.msra.mxu0 0.0
    %1118 = vmatprep.subr.mxu0 0.0
    %1119 = vmatpush2.msra.mxu0 0.0
    %1120 = vmatprep.subr.mxu0 0.0
    %1121 = vmatpush2.msra.mxu0 0.0
    %1122 = vmatprep.subr.mxu0 0.0
    %1123 = vmatpush2.msra.mxu0 0.0
    %1124 = vmatprep.mubr.f32.mxu0 0.0
    %1125 = vmatmul.mubr.f32.gmra.mxu0 %v1055
    %v1126 = vpop.f32.mrf.mxu0
    %v1127 = vadd.f32 0.0, %v1126
    %v1128 = vpop.f32.mrf.mxu0
    %1129 = vmatprep.mubr.f32.mxu0 0.0
    %1130 = vmatmul.mubr.f32.gmra.mxu0 %v1058
    %v1131 = vpop.f32.mrf.mxu0
    %v1132 = vadd.f32 0.0, %v1131
    %v1133 = vpop.f32.mrf.mxu0
    %1134 = vdwg.mxu0
    %v1135 = vadd.f32 %v1048, %v1127
    %v1136 = vadd.f32 %v1049, %v1132
    %v1137 = vld [vmem:[%s0 + $0xc] sm:$0xff]
    %v1138 = vld [vmem:[%s0 + $0x14] sm:$0xff]
    %s1139 = scalar_lea.vmem %s1, 104
    %v1140 = vld [vmem:[%s1139] sm:$0xff]
    %v1142 = vsel %vm30, %v1137, 0
    %v1145 = vsel %vm30, %v1138, 0
    %1147 = vmatprep.subr.mxu0 0.0
    %1148 = vmatpush1.msra.mxu0 0.0
    %1149 = vmatprep.subr.mxu0 0.0
    %1150 = vmatpush1.msra.mxu0 0.0
    %1151 = vmatprep.subr.mxu0 0.0
    %1152 = vmatpush1.msra.mxu0 0.0
    %1153 = vmatprep.subr.mxu0 0.0
    %1154 = vmatpush1.msra.mxu0 0.0
    %1155 = vmatprep.subr.mxu0 0.0
    %1156 = vmatpush1.msra.mxu0 0.0
    %1157 = vmatprep.subr.mxu0 0.0
    %1158 = vmatpush1.msra.mxu0 0.0
    %1159 = vmatprep.subr.mxu0 0.0
    %1160 = vmatpush1.msra.mxu0 0.0
    %1161 = vmatprep.subr.mxu0 0.0
    %1162 = vmatpush1.msra.mxu0 0.0
    %1163 = vmatprep.subr.mxu0 0.0
    %1164 = vmatpush1.msra.mxu0 0.0
    %1165 = vmatprep.subr.mxu0 0.0
    %1166 = vmatpush1.msra.mxu0 0.0
    %1167 = vmatprep.subr.mxu0 0.0
    %1168 = vmatpush1.msra.mxu0 0.0
    %1169 = vmatprep.subr.mxu0 0.0
    %1170 = vmatpush1.msra.mxu0 0.0
    %1171 = vmatprep.subr.mxu0 0.0
    %1172 = vmatpush1.msra.mxu0 0.0
    %1173 = vmatprep.subr.mxu0 0.0
    %1174 = vmatpush1.msra.mxu0 0.0
    %1175 = vmatprep.subr.mxu0 0.0
    %1176 = vmatpush1.msra.mxu0 0.0
    %1177 = vmatprep.subr.mxu0 0.0
    %1178 = vmatpush1.msra.mxu0 %v1140
    %1179 = vmatprep.subr.mxu0 0.0
    %1180 = vmatpush2.msra.mxu0 0.0
    %1181 = vmatprep.subr.mxu0 0.0
    %1182 = vmatpush2.msra.mxu0 0.0
    %1183 = vmatprep.subr.mxu0 0.0
    %1184 = vmatpush2.msra.mxu0 0.0
    %1185 = vmatprep.subr.mxu0 0.0
    %1186 = vmatpush2.msra.mxu0 0.0
    %1187 = vmatprep.subr.mxu0 0.0
    %1188 = vmatpush2.msra.mxu0 0.0
    %1189 = vmatprep.subr.mxu0 0.0
    %1190 = vmatpush2.msra.mxu0 0.0
    %1191 = vmatprep.subr.mxu0 0.0
    %1192 = vmatpush2.msra.mxu0 0.0
    %1193 = vmatprep.subr.mxu0 0.0
    %1194 = vmatpush2.msra.mxu0 0.0
    %1195 = vmatprep.subr.mxu0 0.0
    %1196 = vmatpush2.msra.mxu0 0.0
    %1197 = vmatprep.subr.mxu0 0.0
    %1198 = vmatpush2.msra.mxu0 0.0
    %1199 = vmatprep.subr.mxu0 0.0
    %1200 = vmatpush2.msra.mxu0 0.0
    %1201 = vmatprep.subr.mxu0 0.0
    %1202 = vmatpush2.msra.mxu0 0.0
    %1203 = vmatprep.subr.mxu0 0.0
    %1204 = vmatpush2.msra.mxu0 0.0
    %1205 = vmatprep.subr.mxu0 0.0
    %1206 = vmatpush2.msra.mxu0 0.0
    %1207 = vmatprep.subr.mxu0 0.0
    %1208 = vmatpush2.msra.mxu0 0.0
    %1209 = vmatprep.subr.mxu0 0.0
    %1210 = vmatpush2.msra.mxu0 0.0
    %1211 = vmatprep.mubr.f32.mxu0 0.0
    %1212 = vmatmul.mubr.f32.gmra.mxu0 %v1142
    %v1213 = vpop.f32.mrf.mxu0
    %v1214 = vadd.f32 0.0, %v1213
    %v1215 = vpop.f32.mrf.mxu0
    %1216 = vmatprep.mubr.f32.mxu0 0.0
    %1217 = vmatmul.mubr.f32.gmra.mxu0 %v1145
    %v1218 = vpop.f32.mrf.mxu0
    %v1219 = vadd.f32 0.0, %v1218
    %v1220 = vpop.f32.mrf.mxu0
    %1221 = vdwg.mxu0
    %v1222 = vadd.f32 %v1135, %v1214
    %v1223 = vadd.f32 %v1136, %v1219
    %s1224 = scalar_lea.vmem %s2, 1
    %v1225 = vld [vmem:[%s1224] sm:$0x1]
    %v1227 = vlaneseq
    %v1228 = vshrl.u32 %v1227, 7
    %v1229 = vsub.s32 0, %v1228
    %v1230 = vrot.slane %v1225, %v1229
    %v1232 = vadd.f32 %v1222, %v1230
    %v1233 = vadd.f32 %v1223, %v1230
    %vm1234 = vcmp.ge.f32.partialorder %v1232, 0.0
    %vm1235 = vcmp.ge.f32.partialorder %v1233, 0.0
    %v1236 = vmul.f32 %v1232, 0.01
    %v1237 = vmul.f32 %v1233, 0.01
    %v1238 = vsel %vm1234, %v1232, %v1236
    %v1239 = vsel %vm1235, %v1233, %v1237
    %vm1242 = vcmask 1042432
    %v1243 = vrot.slane %v1238, 5
    %v1244 = vrot.slane %v1239, 5
    %v1245 = vsel %vm1242, %v1243, %v1244
    %v1248 = vsel %vm1242, 0.0, %v1243
    %v1249 = vsel %vm1242, %v1244, 0.0
    %s1250 = scalar_lea.vmem %s1, 112
    %v1251 = vld [vmem:[%s1250] sm:$0xff]
    %s1252 = scalar_lea.vmem %s1, 120
    %v1253 = vld [vmem:[%s1252] sm:$0xff]
    %vm1256 = vcmask 1046528
    %v1257 = vrot.slane %v1248, 1
    %v1258 = vrot.slane %v1245, 1
    %v1259 = vsel %vm1256, %v1257, %v1258
    %v1260 = vrot.slane %v1249, 1
    %v1261 = vsel %vm1256, %v1258, %v1260
    %v1262 = vsel %vm30, %v1259, 0
    %v1264 = vsel %vm30, %v1261, 0
    %1266 = vmatprep.subr.mxu0 0.0
    %1267 = vmatpush1.msra.mxu0 0.0
    %1268 = vmatprep.subr.mxu0 0.0
    %1269 = vmatpush1.msra.mxu0 0.0
    %1270 = vmatprep.subr.mxu0 0.0
    %1271 = vmatpush1.msra.mxu0 0.0
    %1272 = vmatprep.subr.mxu0 0.0
    %1273 = vmatpush1.msra.mxu0 0.0
    %1274 = vmatprep.subr.mxu0 0.0
    %1275 = vmatpush1.msra.mxu0 0.0
    %1276 = vmatprep.subr.mxu0 0.0
    %1277 = vmatpush1.msra.mxu0 0.0
    %1278 = vmatprep.subr.mxu0 0.0
    %1279 = vmatpush1.msra.mxu0 0.0
    %1280 = vmatprep.subr.mxu0 0.0
    %1281 = vmatpush1.msra.mxu0 0.0
    %1282 = vmatprep.subr.mxu0 0.0
    %1283 = vmatpush1.msra.mxu0 0.0
    %1284 = vmatprep.subr.mxu0 0.0
    %1285 = vmatpush1.msra.mxu0 0.0
    %1286 = vmatprep.subr.mxu0 0.0
    %1287 = vmatpush1.msra.mxu0 0.0
    %1288 = vmatprep.subr.mxu0 0.0
    %1289 = vmatpush1.msra.mxu0 0.0
    %1290 = vmatprep.subr.mxu0 0.0
    %1291 = vmatpush1.msra.mxu0 0.0
    %1292 = vmatprep.subr.mxu0 0.0
    %1293 = vmatpush1.msra.mxu0 0.0
    %1294 = vmatprep.subr.mxu0 0.0
    %1295 = vmatpush1.msra.mxu0 0.0
    %1296 = vmatprep.subr.mxu0 0.0
    %1297 = vmatpush1.msra.mxu0 %v1253
    %1298 = vmatprep.subr.mxu0 0.0
    %1299 = vmatpush2.msra.mxu0 0.0
    %1300 = vmatprep.subr.mxu0 0.0
    %1301 = vmatpush2.msra.mxu0 0.0
    %1302 = vmatprep.subr.mxu0 0.0
    %1303 = vmatpush2.msra.mxu0 0.0
    %1304 = vmatprep.subr.mxu0 0.0
    %1305 = vmatpush2.msra.mxu0 0.0
    %1306 = vmatprep.subr.mxu0 0.0
    %1307 = vmatpush2.msra.mxu0 0.0
    %1308 = vmatprep.subr.mxu0 0.0
    %1309 = vmatpush2.msra.mxu0 0.0
    %1310 = vmatprep.subr.mxu0 0.0
    %1311 = vmatpush2.msra.mxu0 0.0
    %1312 = vmatprep.subr.mxu0 0.0
    %1313 = vmatpush2.msra.mxu0 0.0
    %1314 = vmatprep.subr.mxu0 0.0
    %1315 = vmatpush2.msra.mxu0 0.0
    %1316 = vmatprep.subr.mxu0 0.0
    %1317 = vmatpush2.msra.mxu0 0.0
    %1318 = vmatprep.subr.mxu0 0.0
    %1319 = vmatpush2.msra.mxu0 0.0
    %1320 = vmatprep.subr.mxu0 0.0
    %1321 = vmatpush2.msra.mxu0 0.0
    %1322 = vmatprep.subr.mxu0 0.0
    %1323 = vmatpush2.msra.mxu0 0.0
    %1324 = vmatprep.subr.mxu0 0.0
    %1325 = vmatpush2.msra.mxu0 0.0
    %1326 = vmatprep.subr.mxu0 0.0
    %1327 = vmatpush2.msra.mxu0 0.0
    %1328 = vmatprep.subr.mxu0 0.0
    %1329 = vmatpush2.msra.mxu0 0.0
    %1330 = vmatprep.mubr.f32.mxu0 0.0
    %1331 = vmatmul.mubr.f32.gmra.mxu0 %v1262
    %v1332 = vpop.f32.mrf.mxu0
    %v1333 = vadd.f32 0.0, %v1332
    %v1334 = vpop.f32.mrf.mxu0
    %1335 = vmatprep.mubr.f32.mxu0 0.0
    %1336 = vmatmul.mubr.f32.gmra.mxu0 %v1264
    %v1337 = vpop.f32.mrf.mxu0
    %v1338 = vadd.f32 0.0, %v1337
    %v1339 = vpop.f32.mrf.mxu0
    %1340 = vdwg.mxu0
    %v1341 = vsel %vm30, %v1248, 0
    %v1343 = vsel %vm30, %v1245, 0
    %1345 = vmatprep.subr.mxu0 0.0
    %1346 = vmatpush1.msra.mxu0 0.0
    %1347 = vmatprep.subr.mxu0 0.0
    %1348 = vmatpush1.msra.mxu0 0.0
    %1349 = vmatprep.subr.mxu0 0.0
    %1350 = vmatpush1.msra.mxu0 0.0
    %1351 = vmatprep.subr.mxu0 0.0
    %1352 = vmatpush1.msra.mxu0 0.0
    %1353 = vmatprep.subr.mxu0 0.0
    %1354 = vmatpush1.msra.mxu0 0.0
    %1355 = vmatprep.subr.mxu0 0.0
    %1356 = vmatpush1.msra.mxu0 0.0
    %1357 = vmatprep.subr.mxu0 0.0
    %1358 = vmatpush1.msra.mxu0 0.0
    %1359 = vmatprep.subr.mxu0 0.0
    %1360 = vmatpush1.msra.mxu0 0.0
    %1361 = vmatprep.subr.mxu0 0.0
    %1362 = vmatpush1.msra.mxu0 0.0
    %1363 = vmatprep.subr.mxu0 0.0
    %1364 = vmatpush1.msra.mxu0 0.0
    %1365 = vmatprep.subr.mxu0 0.0
    %1366 = vmatpush1.msra.mxu0 0.0
    %1367 = vmatprep.subr.mxu0 0.0
    %1368 = vmatpush1.msra.mxu0 0.0
    %1369 = vmatprep.subr.mxu0 0.0
    %1370 = vmatpush1.msra.mxu0 0.0
    %1371 = vmatprep.subr.mxu0 0.0
    %1372 = vmatpush1.msra.mxu0 0.0
    %1373 = vmatprep.subr.mxu0 0.0
    %1374 = vmatpush1.msra.mxu0 0.0
    %1375 = vmatprep.subr.mxu0 0.0
    %1376 = vmatpush1.msra.mxu0 %v1251
    %1377 = vmatprep.subr.mxu0 0.0
    %1378 = vmatpush2.msra.mxu0 0.0
    %1379 = vmatprep.subr.mxu0 0.0
    %1380 = vmatpush2.msra.mxu0 0.0
    %1381 = vmatprep.subr.mxu0 0.0
    %1382 = vmatpush2.msra.mxu0 0.0
    %1383 = vmatprep.subr.mxu0 0.0
    %1384 = vmatpush2.msra.mxu0 0.0
    %1385 = vmatprep.subr.mxu0 0.0
    %1386 = vmatpush2.msra.mxu0 0.0
    %1387 = vmatprep.subr.mxu0 0.0
    %1388 = vmatpush2.msra.mxu0 0.0
    %1389 = vmatprep.subr.mxu0 0.0
    %1390 = vmatpush2.msra.mxu0 0.0
    %1391 = vmatprep.subr.mxu0 0.0
    %1392 = vmatpush2.msra.mxu0 0.0
    %1393 = vmatprep.subr.mxu0 0.0
    %1394 = vmatpush2.msra.mxu0 0.0
    %1395 = vmatprep.subr.mxu0 0.0
    %1396 = vmatpush2.msra.mxu0 0.0
    %1397 = vmatprep.subr.mxu0 0.0
    %1398 = vmatpush2.msra.mxu0 0.0
    %1399 = vmatprep.subr.mxu0 0.0
    %1400 = vmatpush2.msra.mxu0 0.0
    %1401 = vmatprep.subr.mxu0 0.0
    %1402 = vmatpush2.msra.mxu0 0.0
    %1403 = vmatprep.subr.mxu0 0.0
    %1404 = vmatpush2.msra.mxu0 0.0
    %1405 = vmatprep.subr.mxu0 0.0
    %1406 = vmatpush2.msra.mxu0 0.0
    %1407 = vmatprep.subr.mxu0 0.0
    %1408 = vmatpush2.msra.mxu0 0.0
    %1409 = vmatprep.mubr.f32.mxu0 0.0
    %1410 = vmatmul.mubr.f32.gmra.mxu0 %v1341
    %v1411 = vpop.f32.mrf.mxu0
    %v1412 = vadd.f32 %v1333, %v1411
    %v1413 = vpop.f32.mrf.mxu0
    %1414 = vmatprep.mubr.f32.mxu0 0.0
    %1415 = vmatmul.mubr.f32.gmra.mxu0 %v1343
    %v1416 = vpop.f32.mrf.mxu0
    %v1417 = vadd.f32 %v1338, %v1416
    %v1418 = vpop.f32.mrf.mxu0
    %1419 = vdwg.mxu0
    %s1420 = scalar_lea.vmem %s1, 128
    %v1421 = vld [vmem:[%s1420] sm:$0xff]
    %vm1422 = vcmask 1045504
    %v1423 = vrot.slane %v1248, 2
    %v1424 = vrot.slane %v1245, 2
    %v1425 = vsel %vm1422, %v1423, %v1424
    %v1426 = vrot.slane %v1249, 2
    %v1427 = vsel %vm1422, %v1424, %v1426
    %v1428 = vsel %vm30, %v1425, 0
    %v1430 = vsel %vm30, %v1427, 0
    %1432 = vmatprep.subr.mxu0 0.0
    %1433 = vmatpush1.msra.mxu0 0.0
    %1434 = vmatprep.subr.mxu0 0.0
    %1435 = vmatpush1.msra.mxu0 0.0
    %1436 = vmatprep.subr.mxu0 0.0
    %1437 = vmatpush1.msra.mxu0 0.0
    %1438 = vmatprep.subr.mxu0 0.0
    %1439 = vmatpush1.msra.mxu0 0.0
    %1440 = vmatprep.subr.mxu0 0.0
    %1441 = vmatpush1.msra.mxu0 0.0
    %1442 = vmatprep.subr.mxu0 0.0
    %1443 = vmatpush1.msra.mxu0 0.0
    %1444 = vmatprep.subr.mxu0 0.0
    %1445 = vmatpush1.msra.mxu0 0.0
    %1446 = vmatprep.subr.mxu0 0.0
    %1447 = vmatpush1.msra.mxu0 0.0
    %1448 = vmatprep.subr.mxu0 0.0
    %1449 = vmatpush1.msra.mxu0 0.0
    %1450 = vmatprep.subr.mxu0 0.0
    %1451 = vmatpush1.msra.mxu0 0.0
    %1452 = vmatprep.subr.mxu0 0.0
    %1453 = vmatpush1.msra.mxu0 0.0
    %1454 = vmatprep.subr.mxu0 0.0
    %1455 = vmatpush1.msra.mxu0 0.0
    %1456 = vmatprep.subr.mxu0 0.0
    %1457 = vmatpush1.msra.mxu0 0.0
    %1458 = vmatprep.subr.mxu0 0.0
    %1459 = vmatpush1.msra.mxu0 0.0
    %1460 = vmatprep.subr.mxu0 0.0
    %1461 = vmatpush1.msra.mxu0 0.0
    %1462 = vmatprep.subr.mxu0 0.0
    %1463 = vmatpush1.msra.mxu0 %v1421
    %1464 = vmatprep.subr.mxu0 0.0
    %1465 = vmatpush2.msra.mxu0 0.0
    %1466 = vmatprep.subr.mxu0 0.0
    %1467 = vmatpush2.msra.mxu0 0.0
    %1468 = vmatprep.subr.mxu0 0.0
    %1469 = vmatpush2.msra.mxu0 0.0
    %1470 = vmatprep.subr.mxu0 0.0
    %1471 = vmatpush2.msra.mxu0 0.0
    %1472 = vmatprep.subr.mxu0 0.0
    %1473 = vmatpush2.msra.mxu0 0.0
    %1474 = vmatprep.subr.mxu0 0.0
    %1475 = vmatpush2.msra.mxu0 0.0
    %1476 = vmatprep.subr.mxu0 0.0
    %1477 = vmatpush2.msra.mxu0 0.0
    %1478 = vmatprep.subr.mxu0 0.0
    %1479 = vmatpush2.msra.mxu0 0.0
    %1480 = vmatprep.subr.mxu0 0.0
    %1481 = vmatpush2.msra.mxu0 0.0
    %1482 = vmatprep.subr.mxu0 0.0
    %1483 = vmatpush2.msra.mxu0 0.0
    %1484 = vmatprep.subr.mxu0 0.0
    %1485 = vmatpush2.msra.mxu0 0.0
    %1486 = vmatprep.subr.mxu0 0.0
    %1487 = vmatpush2.msra.mxu0 0.0
    %1488 = vmatprep.subr.mxu0 0.0
    %1489 = vmatpush2.msra.mxu0 0.0
    %1490 = vmatprep.subr.mxu0 0.0
    %1491 = vmatpush2.msra.mxu0 0.0
    %1492 = vmatprep.subr.mxu0 0.0
    %1493 = vmatpush2.msra.mxu0 0.0
    %1494 = vmatprep.subr.mxu0 0.0
    %1495 = vmatpush2.msra.mxu0 0.0
    %1496 = vmatprep.mubr.f32.mxu0 0.0
    %1497 = vmatmul.mubr.f32.gmra.mxu0 %v1428
    %v1498 = vpop.f32.mrf.mxu0
    %v1499 = vadd.f32 0.0, %v1498
    %v1500 = vpop.f32.mrf.mxu0
    %1501 = vmatprep.mubr.f32.mxu0 0.0
    %1502 = vmatmul.mubr.f32.gmra.mxu0 %v1430
    %v1503 = vpop.f32.mrf.mxu0
    %v1504 = vadd.f32 0.0, %v1503
    %v1505 = vpop.f32.mrf.mxu0
    %1506 = vdwg.mxu0
    %v1507 = vadd.f32 %v1412, %v1499
    %v1508 = vadd.f32 %v1417, %v1504
    %s1509 = scalar_lea.vmem %s1, 136
    %v1510 = vld [vmem:[%s1509] sm:$0xff]
    %vm1511 = vcmask 1044480
    %v1512 = vrot.slane %v1248, 3
    %v1513 = vrot.slane %v1245, 3
    %v1514 = vsel %vm1511, %v1512, %v1513
    %v1515 = vrot.slane %v1249, 3
    %v1516 = vsel %vm1511, %v1513, %v1515
    %v1517 = vsel %vm30, %v1514, 0
    %v1519 = vsel %vm30, %v1516, 0
    %1521 = vmatprep.subr.mxu0 0.0
    %1522 = vmatpush1.msra.mxu0 0.0
    %1523 = vmatprep.subr.mxu0 0.0
    %1524 = vmatpush1.msra.mxu0 0.0
    %1525 = vmatprep.subr.mxu0 0.0
    %1526 = vmatpush1.msra.mxu0 0.0
    %1527 = vmatprep.subr.mxu0 0.0
    %1528 = vmatpush1.msra.mxu0 0.0
    %1529 = vmatprep.subr.mxu0 0.0
    %1530 = vmatpush1.msra.mxu0 0.0
    %1531 = vmatprep.subr.mxu0 0.0
    %1532 = vmatpush1.msra.mxu0 0.0
    %1533 = vmatprep.subr.mxu0 0.0
    %1534 = vmatpush1.msra.mxu0 0.0
    %1535 = vmatprep.subr.mxu0 0.0
    %1536 = vmatpush1.msra.mxu0 0.0
    %1537 = vmatprep.subr.mxu0 0.0
    %1538 = vmatpush1.msra.mxu0 0.0
    %1539 = vmatprep.subr.mxu0 0.0
    %1540 = vmatpush1.msra.mxu0 0.0
    %1541 = vmatprep.subr.mxu0 0.0
    %1542 = vmatpush1.msra.mxu0 0.0
    %1543 = vmatprep.subr.mxu0 0.0
    %1544 = vmatpush1.msra.mxu0 0.0
    %1545 = vmatprep.subr.mxu0 0.0
    %1546 = vmatpush1.msra.mxu0 0.0
    %1547 = vmatprep.subr.mxu0 0.0
    %1548 = vmatpush1.msra.mxu0 0.0
    %1549 = vmatprep.subr.mxu0 0.0
    %1550 = vmatpush1.msra.mxu0 0.0
    %1551 = vmatprep.subr.mxu0 0.0
    %1552 = vmatpush1.msra.mxu0 %v1510
    %1553 = vmatprep.subr.mxu0 0.0
    %1554 = vmatpush2.msra.mxu0 0.0
    %1555 = vmatprep.subr.mxu0 0.0
    %1556 = vmatpush2.msra.mxu0 0.0
    %1557 = vmatprep.subr.mxu0 0.0
    %1558 = vmatpush2.msra.mxu0 0.0
    %1559 = vmatprep.subr.mxu0 0.0
    %1560 = vmatpush2.msra.mxu0 0.0
    %1561 = vmatprep.subr.mxu0 0.0
    %1562 = vmatpush2.msra.mxu0 0.0
    %1563 = vmatprep.subr.mxu0 0.0
    %1564 = vmatpush2.msra.mxu0 0.0
    %1565 = vmatprep.subr.mxu0 0.0
    %1566 = vmatpush2.msra.mxu0 0.0
    %1567 = vmatprep.subr.mxu0 0.0
    %1568 = vmatpush2.msra.mxu0 0.0
    %1569 = vmatprep.subr.mxu0 0.0
    %1570 = vmatpush2.msra.mxu0 0.0
    %1571 = vmatprep.subr.mxu0 0.0
    %1572 = vmatpush2.msra.mxu0 0.0
    %1573 = vmatprep.subr.mxu0 0.0
    %1574 = vmatpush2.msra.mxu0 0.0
    %1575 = vmatprep.subr.mxu0 0.0
    %1576 = vmatpush2.msra.mxu0 0.0
    %1577 = vmatprep.subr.mxu0 0.0
    %1578 = vmatpush2.msra.mxu0 0.0
    %1579 = vmatprep.subr.mxu0 0.0
    %1580 = vmatpush2.msra.mxu0 0.0
    %1581 = vmatprep.subr.mxu0 0.0
    %1582 = vmatpush2.msra.mxu0 0.0
    %1583 = vmatprep.subr.mxu0 0.0
    %1584 = vmatpush2.msra.mxu0 0.0
    %1585 = vmatprep.mubr.f32.mxu0 0.0
    %1586 = vmatmul.mubr.f32.gmra.mxu0 %v1517
    %v1587 = vpop.f32.mrf.mxu0
    %v1588 = vadd.f32 0.0, %v1587
    %v1589 = vpop.f32.mrf.mxu0
    %1590 = vmatprep.mubr.f32.mxu0 0.0
    %1591 = vmatmul.mubr.f32.gmra.mxu0 %v1519
    %v1592 = vpop.f32.mrf.mxu0
    %v1593 = vadd.f32 0.0, %v1592
    %v1594 = vpop.f32.mrf.mxu0
    %1595 = vdwg.mxu0
    %v1596 = vadd.f32 %v1507, %v1588
    %v1597 = vadd.f32 %v1508, %v1593
    %s1598 = scalar_lea.vmem %s1, 144
    %v1599 = vld [vmem:[%s1598] sm:$0xff]
    %vm1600 = vcmask 1043456
    %v1601 = vrot.slane %v1248, 4
    %v1602 = vrot.slane %v1245, 4
    %v1603 = vsel %vm1600, %v1601, %v1602
    %v1604 = vrot.slane %v1249, 4
    %v1605 = vsel %vm1600, %v1602, %v1604
    %v1606 = vsel %vm30, %v1603, 0
    %v1608 = vsel %vm30, %v1605, 0
    %1610 = vmatprep.subr.mxu0 0.0
    %1611 = vmatpush1.msra.mxu0 0.0
    %1612 = vmatprep.subr.mxu0 0.0
    %1613 = vmatpush1.msra.mxu0 0.0
    %1614 = vmatprep.subr.mxu0 0.0
    %1615 = vmatpush1.msra.mxu0 0.0
    %1616 = vmatprep.subr.mxu0 0.0
    %1617 = vmatpush1.msra.mxu0 0.0
    %1618 = vmatprep.subr.mxu0 0.0
    %1619 = vmatpush1.msra.mxu0 0.0
    %1620 = vmatprep.subr.mxu0 0.0
    %1621 = vmatpush1.msra.mxu0 0.0
    %1622 = vmatprep.subr.mxu0 0.0
    %1623 = vmatpush1.msra.mxu0 0.0
    %1624 = vmatprep.subr.mxu0 0.0
    %1625 = vmatpush1.msra.mxu0 0.0
    %1626 = vmatprep.subr.mxu0 0.0
    %1627 = vmatpush1.msra.mxu0 0.0
    %1628 = vmatprep.subr.mxu0 0.0
    %1629 = vmatpush1.msra.mxu0 0.0
    %1630 = vmatprep.subr.mxu0 0.0
    %1631 = vmatpush1.msra.mxu0 0.0
    %1632 = vmatprep.subr.mxu0 0.0
    %1633 = vmatpush1.msra.mxu0 0.0
    %1634 = vmatprep.subr.mxu0 0.0
    %1635 = vmatpush1.msra.mxu0 0.0
    %1636 = vmatprep.subr.mxu0 0.0
    %1637 = vmatpush1.msra.mxu0 0.0
    %1638 = vmatprep.subr.mxu0 0.0
    %1639 = vmatpush1.msra.mxu0 0.0
    %1640 = vmatprep.subr.mxu0 0.0
    %1641 = vmatpush1.msra.mxu0 %v1599
    %1642 = vmatprep.subr.mxu0 0.0
    %1643 = vmatpush2.msra.mxu0 0.0
    %1644 = vmatprep.subr.mxu0 0.0
    %1645 = vmatpush2.msra.mxu0 0.0
    %1646 = vmatprep.subr.mxu0 0.0
    %1647 = vmatpush2.msra.mxu0 0.0
    %1648 = vmatprep.subr.mxu0 0.0
    %1649 = vmatpush2.msra.mxu0 0.0
    %1650 = vmatprep.subr.mxu0 0.0
    %1651 = vmatpush2.msra.mxu0 0.0
    %1652 = vmatprep.subr.mxu0 0.0
    %1653 = vmatpush2.msra.mxu0 0.0
    %1654 = vmatprep.subr.mxu0 0.0
    %1655 = vmatpush2.msra.mxu0 0.0
    %1656 = vmatprep.subr.mxu0 0.0
    %1657 = vmatpush2.msra.mxu0 0.0
    %1658 = vmatprep.subr.mxu0 0.0
    %1659 = vmatpush2.msra.mxu0 0.0
    %1660 = vmatprep.subr.mxu0 0.0
    %1661 = vmatpush2.msra.mxu0 0.0
    %1662 = vmatprep.subr.mxu0 0.0
    %1663 = vmatpush2.msra.mxu0 0.0
    %1664 = vmatprep.subr.mxu0 0.0
    %1665 = vmatpush2.msra.mxu0 0.0
    %1666 = vmatprep.subr.mxu0 0.0
    %1667 = vmatpush2.msra.mxu0 0.0
    %1668 = vmatprep.subr.mxu0 0.0
    %1669 = vmatpush2.msra.mxu0 0.0
    %1670 = vmatprep.subr.mxu0 0.0
    %1671 = vmatpush2.msra.mxu0 0.0
    %1672 = vmatprep.subr.mxu0 0.0
    %1673 = vmatpush2.msra.mxu0 0.0
    %1674 = vmatprep.mubr.f32.mxu0 0.0
    %1675 = vmatmul.mubr.f32.gmra.mxu0 %v1606
    %v1676 = vpop.f32.mrf.mxu0
    %v1677 = vadd.f32 0.0, %v1676
    %v1678 = vpop.f32.mrf.mxu0
    %1679 = vmatprep.mubr.f32.mxu0 0.0
    %1680 = vmatmul.mubr.f32.gmra.mxu0 %v1608
    %v1681 = vpop.f32.mrf.mxu0
    %v1682 = vadd.f32 0.0, %v1681
    %v1683 = vpop.f32.mrf.mxu0
    %1684 = vdwg.mxu0
    %v1685 = vadd.f32 %v1596, %v1677
    %v1686 = vadd.f32 %v1597, %v1682
    %s1687 = scalar_lea.vmem %s1, 152
    %v1688 = vld [vmem:[%s1687] sm:$0xff]
    %v1689 = vrot.slane %v1248, 5
    %v1690 = vrot.slane %v1245, 5
    %v1691 = vsel %vm1242, %v1689, %v1690
    %v1692 = vrot.slane %v1249, 5
    %v1693 = vsel %vm1242, %v1690, %v1692
    %v1694 = vsel %vm30, %v1691, 0
    %v1696 = vsel %vm30, %v1693, 0
    %1698 = vmatprep.subr.mxu0 0.0
    %1699 = vmatpush1.msra.mxu0 0.0
    %1700 = vmatprep.subr.mxu0 0.0
    %1701 = vmatpush1.msra.mxu0 0.0
    %1702 = vmatprep.subr.mxu0 0.0
    %1703 = vmatpush1.msra.mxu0 0.0
    %1704 = vmatprep.subr.mxu0 0.0
    %1705 = vmatpush1.msra.mxu0 0.0
    %1706 = vmatprep.subr.mxu0 0.0
    %1707 = vmatpush1.msra.mxu0 0.0
    %1708 = vmatprep.subr.mxu0 0.0
    %1709 = vmatpush1.msra.mxu0 0.0
    %1710 = vmatprep.subr.mxu0 0.0
    %1711 = vmatpush1.msra.mxu0 0.0
    %1712 = vmatprep.subr.mxu0 0.0
    %1713 = vmatpush1.msra.mxu0 0.0
    %1714 = vmatprep.subr.mxu0 0.0
    %1715 = vmatpush1.msra.mxu0 0.0
    %1716 = vmatprep.subr.mxu0 0.0
    %1717 = vmatpush1.msra.mxu0 0.0
    %1718 = vmatprep.subr.mxu0 0.0
    %1719 = vmatpush1.msra.mxu0 0.0
    %1720 = vmatprep.subr.mxu0 0.0
    %1721 = vmatpush1.msra.mxu0 0.0
    %1722 = vmatprep.subr.mxu0 0.0
    %1723 = vmatpush1.msra.mxu0 0.0
    %1724 = vmatprep.subr.mxu0 0.0
    %1725 = vmatpush1.msra.mxu0 0.0
    %1726 = vmatprep.subr.mxu0 0.0
    %1727 = vmatpush1.msra.mxu0 0.0
    %1728 = vmatprep.subr.mxu0 0.0
    %1729 = vmatpush1.msra.mxu0 %v1688
    %1730 = vmatprep.subr.mxu0 0.0
    %1731 = vmatpush2.msra.mxu0 0.0
    %1732 = vmatprep.subr.mxu0 0.0
    %1733 = vmatpush2.msra.mxu0 0.0
    %1734 = vmatprep.subr.mxu0 0.0
    %1735 = vmatpush2.msra.mxu0 0.0
    %1736 = vmatprep.subr.mxu0 0.0
    %1737 = vmatpush2.msra.mxu0 0.0
    %1738 = vmatprep.subr.mxu0 0.0
    %1739 = vmatpush2.msra.mxu0 0.0
    %1740 = vmatprep.subr.mxu0 0.0
    %1741 = vmatpush2.msra.mxu0 0.0
    %1742 = vmatprep.subr.mxu0 0.0
    %1743 = vmatpush2.msra.mxu0 0.0
    %1744 = vmatprep.subr.mxu0 0.0
    %1745 = vmatpush2.msra.mxu0 0.0
    %1746 = vmatprep.subr.mxu0 0.0
    %1747 = vmatpush2.msra.mxu0 0.0
    %1748 = vmatprep.subr.mxu0 0.0
    %1749 = vmatpush2.msra.mxu0 0.0
    %1750 = vmatprep.subr.mxu0 0.0
    %1751 = vmatpush2.msra.mxu0 0.0
    %1752 = vmatprep.subr.mxu0 0.0
    %1753 = vmatpush2.msra.mxu0 0.0
    %1754 = vmatprep.subr.mxu0 0.0
    %1755 = vmatpush2.msra.mxu0 0.0
    %1756 = vmatprep.subr.mxu0 0.0
    %1757 = vmatpush2.msra.mxu0 0.0
    %1758 = vmatprep.subr.mxu0 0.0
    %1759 = vmatpush2.msra.mxu0 0.0
    %1760 = vmatprep.subr.mxu0 0.0
    %1761 = vmatpush2.msra.mxu0 0.0
    %1762 = vmatprep.mubr.f32.mxu0 0.0
    %1763 = vmatmul.mubr.f32.gmra.mxu0 %v1694
    %v1764 = vpop.f32.mrf.mxu0
    %v1765 = vadd.f32 0.0, %v1764
    %v1766 = vpop.f32.mrf.mxu0
    %1767 = vmatprep.mubr.f32.mxu0 0.0
    %1768 = vmatmul.mubr.f32.gmra.mxu0 %v1696
    %v1769 = vpop.f32.mrf.mxu0
    %v1770 = vadd.f32 0.0, %v1769
    %v1771 = vpop.f32.mrf.mxu0
    %1772 = vdwg.mxu0
    %v1773 = vadd.f32 %v1685, %v1765
    %v1774 = vadd.f32 %v1686, %v1770
    %s1775 = scalar_lea.vmem %s1, 160
    %v1776 = vld [vmem:[%s1775] sm:$0xff]
    %vm1777 = vcmask 1041408
    %v1778 = vrot.slane %v1248, 6
    %v1779 = vrot.slane %v1245, 6
    %v1780 = vsel %vm1777, %v1778, %v1779
    %v1781 = vrot.slane %v1249, 6
    %v1782 = vsel %vm1777, %v1779, %v1781
    %v1783 = vsel %vm30, %v1780, 0
    %v1785 = vsel %vm30, %v1782, 0
    %1787 = vmatprep.subr.mxu0 0.0
    %1788 = vmatpush1.msra.mxu0 0.0
    %1789 = vmatprep.subr.mxu0 0.0
    %1790 = vmatpush1.msra.mxu0 0.0
    %1791 = vmatprep.subr.mxu0 0.0
    %1792 = vmatpush1.msra.mxu0 0.0
    %1793 = vmatprep.subr.mxu0 0.0
    %1794 = vmatpush1.msra.mxu0 0.0
    %1795 = vmatprep.subr.mxu0 0.0
    %1796 = vmatpush1.msra.mxu0 0.0
    %1797 = vmatprep.subr.mxu0 0.0
    %1798 = vmatpush1.msra.mxu0 0.0
    %1799 = vmatprep.subr.mxu0 0.0
    %1800 = vmatpush1.msra.mxu0 0.0
    %1801 = vmatprep.subr.mxu0 0.0
    %1802 = vmatpush1.msra.mxu0 0.0
    %1803 = vmatprep.subr.mxu0 0.0
    %1804 = vmatpush1.msra.mxu0 0.0
    %1805 = vmatprep.subr.mxu0 0.0
    %1806 = vmatpush1.msra.mxu0 0.0
    %1807 = vmatprep.subr.mxu0 0.0
    %1808 = vmatpush1.msra.mxu0 0.0
    %1809 = vmatprep.subr.mxu0 0.0
    %1810 = vmatpush1.msra.mxu0 0.0
    %1811 = vmatprep.subr.mxu0 0.0
    %1812 = vmatpush1.msra.mxu0 0.0
    %1813 = vmatprep.subr.mxu0 0.0
    %1814 = vmatpush1.msra.mxu0 0.0
    %1815 = vmatprep.subr.mxu0 0.0
    %1816 = vmatpush1.msra.mxu0 0.0
    %1817 = vmatprep.subr.mxu0 0.0
    %1818 = vmatpush1.msra.mxu0 %v1776
    %1819 = vmatprep.subr.mxu0 0.0
    %1820 = vmatpush2.msra.mxu0 0.0
    %1821 = vmatprep.subr.mxu0 0.0
    %1822 = vmatpush2.msra.mxu0 0.0
    %1823 = vmatprep.subr.mxu0 0.0
    %1824 = vmatpush2.msra.mxu0 0.0
    %1825 = vmatprep.subr.mxu0 0.0
    %1826 = vmatpush2.msra.mxu0 0.0
    %1827 = vmatprep.subr.mxu0 0.0
    %1828 = vmatpush2.msra.mxu0 0.0
    %1829 = vmatprep.subr.mxu0 0.0
    %1830 = vmatpush2.msra.mxu0 0.0
    %1831 = vmatprep.subr.mxu0 0.0
    %1832 = vmatpush2.msra.mxu0 0.0
    %1833 = vmatprep.subr.mxu0 0.0
    %1834 = vmatpush2.msra.mxu0 0.0
    %1835 = vmatprep.subr.mxu0 0.0
    %1836 = vmatpush2.msra.mxu0 0.0
    %1837 = vmatprep.subr.mxu0 0.0
    %1838 = vmatpush2.msra.mxu0 0.0
    %1839 = vmatprep.subr.mxu0 0.0
    %1840 = vmatpush2.msra.mxu0 0.0
    %1841 = vmatprep.subr.mxu0 0.0
    %1842 = vmatpush2.msra.mxu0 0.0
    %1843 = vmatprep.subr.mxu0 0.0
    %1844 = vmatpush2.msra.mxu0 0.0
    %1845 = vmatprep.subr.mxu0 0.0
    %1846 = vmatpush2.msra.mxu0 0.0
    %1847 = vmatprep.subr.mxu0 0.0
    %1848 = vmatpush2.msra.mxu0 0.0
    %1849 = vmatprep.subr.mxu0 0.0
    %1850 = vmatpush2.msra.mxu0 0.0
    %1851 = vmatprep.mubr.f32.mxu0 0.0
    %1852 = vmatmul.mubr.f32.gmra.mxu0 %v1783
    %v1853 = vpop.f32.mrf.mxu0
    %v1854 = vadd.f32 0.0, %v1853
    %v1855 = vpop.f32.mrf.mxu0
    %1856 = vmatprep.mubr.f32.mxu0 0.0
    %1857 = vmatmul.mubr.f32.gmra.mxu0 %v1785
    %v1858 = vpop.f32.mrf.mxu0
    %v1859 = vadd.f32 0.0, %v1858
    %v1860 = vpop.f32.mrf.mxu0
    %1861 = vdwg.mxu0
    %v1862 = vadd.f32 %v1773, %v1854
    %v1863 = vadd.f32 %v1774, %v1859
    %s1864 = scalar_lea.vmem %s2, 2
    %v1865 = vld [vmem:[%s1864] sm:$0x1]
    %v1867 = vlaneseq
    %v1868 = vshrl.u32 %v1867, 7
    %v1869 = vsub.s32 0, %v1868
    %v1870 = vrot.slane %v1865, %v1869
    %v1872 = vadd.f32 %v1862, %v1870
    %v1873 = vadd.f32 %v1863, %v1870
    %vm1874 = vcmp.ge.f32.partialorder %v1872, 0.0
    %vm1875 = vcmp.ge.f32.partialorder %v1873, 0.0
    %v1876 = vmul.f32 %v1872, 0.01
    %v1877 = vmul.f32 %v1873, 0.01
    %v1878 = vsel %vm1874, %v1872, %v1876
    %v1879 = vsel %vm1875, %v1873, %v1877
    %v1880 = vadd.f32 %v641, %v1878
    %v1881 = vadd.f32 %v642, %v1879
    %vm1882 = vcmask 130048
    %v1884 = vsel %vm1882, %v22, 0
    %1886 = vmatprep.subr.mxu0 0.0
    %1887 = vmatpush1.msra.mxu0 0.0
    %1888 = vmatprep.subr.mxu0 0.0
    %1889 = vmatpush1.msra.mxu0 0.0
    %1890 = vmatprep.subr.mxu0 0.0
    %1891 = vmatpush1.msra.mxu0 0.0
    %1892 = vmatprep.subr.mxu0 0.0
    %1893 = vmatpush1.msra.mxu0 0.0
    %1894 = vmatprep.subr.mxu0 0.0
    %1895 = vmatpush1.msra.mxu0 0.0
    %1896 = vmatprep.subr.mxu0 0.0
    %1897 = vmatpush1.msra.mxu0 0.0
    %1898 = vmatprep.subr.mxu0 0.0
    %1899 = vmatpush1.msra.mxu0 0.0
    %1900 = vmatprep.subr.mxu0 0.0
    %1901 = vmatpush1.msra.mxu0 0.0
    %1902 = vmatprep.subr.mxu0 0.0
    %1903 = vmatpush1.msra.mxu0 0.0
    %1904 = vmatprep.subr.mxu0 0.0
    %1905 = vmatpush1.msra.mxu0 0.0
    %1906 = vmatprep.subr.mxu0 0.0
    %1907 = vmatpush1.msra.mxu0 0.0
    %1908 = vmatprep.subr.mxu0 0.0
    %1909 = vmatpush1.msra.mxu0 0.0
    %1910 = vmatprep.subr.mxu0 0.0
    %1911 = vmatpush1.msra.mxu0 0.0
    %1912 = vmatprep.subr.mxu0 0.0
    %1913 = vmatpush1.msra.mxu0 0.0
    %1914 = vmatprep.subr.mxu0 0.0
    %1915 = vmatpush1.msra.mxu0 %v1881
    %1916 = vmatprep.subr.mxu0 0.0
    %1917 = vmatpush1.msra.mxu0 %v1880
    %1918 = vmatprep.subr.mxu0 0.0
    %1919 = vmatpush2.msra.mxu0 0.0
    %1920 = vmatprep.subr.mxu0 0.0
    %1921 = vmatpush2.msra.mxu0 0.0
    %1922 = vmatprep.subr.mxu0 0.0
    %1923 = vmatpush2.msra.mxu0 0.0
    %1924 = vmatprep.subr.mxu0 0.0
    %1925 = vmatpush2.msra.mxu0 0.0
    %1926 = vmatprep.subr.mxu0 0.0
    %1927 = vmatpush2.msra.mxu0 0.0
    %1928 = vmatprep.subr.mxu0 0.0
    %1929 = vmatpush2.msra.mxu0 0.0
    %1930 = vmatprep.subr.mxu0 0.0
    %1931 = vmatpush2.msra.mxu0 0.0
    %1932 = vmatprep.subr.mxu0 0.0
    %1933 = vmatpush2.msra.mxu0 0.0
    %1934 = vmatprep.subr.mxu0 0.0
    %1935 = vmatpush2.msra.mxu0 0.0
    %1936 = vmatprep.subr.mxu0 0.0
    %1937 = vmatpush2.msra.mxu0 0.0
    %1938 = vmatprep.subr.mxu0 0.0
    %1939 = vmatpush2.msra.mxu0 0.0
    %1940 = vmatprep.subr.mxu0 0.0
    %1941 = vmatpush2.msra.mxu0 0.0
    %1942 = vmatprep.subr.mxu0 0.0
    %1943 = vmatpush2.msra.mxu0 0.0
    %1944 = vmatprep.subr.mxu0 0.0
    %1945 = vmatpush2.msra.mxu0 0.0
    %1946 = vmatprep.subr.mxu0 0.0
    %1947 = vmatpush2.msra.mxu0 0.0
    %1948 = vmatprep.subr.mxu0 0.0
    %1949 = vmatpush2.msra.mxu0 0.0
    %1950 = vmatprep.mubr.f32.mxu0 0.0
    %1951 = vmatmul.mubr.f32.gmra.mxu0 %v1884
    %v1952 = vpop.f32.mrf.mxu0
    %v1953 = vadd.f32 0.0, %v1952
    %v1954 = vpop.f32.mrf.mxu0
    %1955 = vdwg.mxu0
    %v1956 = vld [vmem:[%s0 + $0x1f] sm:$0xff]
    %v1957 = vld [vmem:[%s0 + $0x27] sm:$0xff]
    %v1958 = vld [vmem:[%s0 + $0x20] sm:$0xff]
    %v1959 = vld [vmem:[%s0 + $0x28] sm:$0xff]
    %v1961 = vsel %vm30, %v1958, 0
    %v1964 = vsel %vm30, %v1959, 0
    %1966 = vmatprep.subr.mxu0 0.0
    %1967 = vmatpush1.msra.mxu0 0.0
    %1968 = vmatprep.subr.mxu0 0.0
    %1969 = vmatpush1.msra.mxu0 0.0
    %1970 = vmatprep.subr.mxu0 0.0
    %1971 = vmatpush1.msra.mxu0 0.0
    %1972 = vmatprep.subr.mxu0 0.0
    %1973 = vmatpush1.msra.mxu0 0.0
    %1974 = vmatprep.subr.mxu0 0.0
    %1975 = vmatpush1.msra.mxu0 0.0
    %1976 = vmatprep.subr.mxu0 0.0
    %1977 = vmatpush1.msra.mxu0 0.0
    %1978 = vmatprep.subr.mxu0 0.0
    %1979 = vmatpush1.msra.mxu0 0.0
    %1980 = vmatprep.subr.mxu0 0.0
    %1981 = vmatpush1.msra.mxu0 0.0
    %1982 = vmatprep.subr.mxu0 0.0
    %1983 = vmatpush1.msra.mxu0 0.0
    %1984 = vmatprep.subr.mxu0 0.0
    %1985 = vmatpush1.msra.mxu0 0.0
    %1986 = vmatprep.subr.mxu0 0.0
    %1987 = vmatpush1.msra.mxu0 0.0
    %1988 = vmatprep.subr.mxu0 0.0
    %1989 = vmatpush1.msra.mxu0 0.0
    %1990 = vmatprep.subr.mxu0 0.0
    %1991 = vmatpush1.msra.mxu0 0.0
    %1992 = vmatprep.subr.mxu0 0.0
    %1993 = vmatpush1.msra.mxu0 0.0
    %1994 = vmatprep.subr.mxu0 0.0
    %1995 = vmatpush1.msra.mxu0 0.0
    %1996 = vmatprep.subr.mxu0 0.0
    %1997 = vmatpush1.msra.mxu0 %v29
    %1998 = vmatprep.subr.mxu0 0.0
    %1999 = vmatpush2.msra.mxu0 0.0
    %2000 = vmatprep.subr.mxu0 0.0
    %2001 = vmatpush2.msra.mxu0 0.0
    %2002 = vmatprep.subr.mxu0 0.0
    %2003 = vmatpush2.msra.mxu0 0.0
    %2004 = vmatprep.subr.mxu0 0.0
    %2005 = vmatpush2.msra.mxu0 0.0
    %2006 = vmatprep.subr.mxu0 0.0
    %2007 = vmatpush2.msra.mxu0 0.0
    %2008 = vmatprep.subr.mxu0 0.0
    %2009 = vmatpush2.msra.mxu0 0.0
    %2010 = vmatprep.subr.mxu0 0.0
    %2011 = vmatpush2.msra.mxu0 0.0
    %2012 = vmatprep.subr.mxu0 0.0
    %2013 = vmatpush2.msra.mxu0 0.0
    %2014 = vmatprep.subr.mxu0 0.0
    %2015 = vmatpush2.msra.mxu0 0.0
    %2016 = vmatprep.subr.mxu0 0.0
    %2017 = vmatpush2.msra.mxu0 0.0
    %2018 = vmatprep.subr.mxu0 0.0
    %2019 = vmatpush2.msra.mxu0 0.0
    %2020 = vmatprep.subr.mxu0 0.0
    %2021 = vmatpush2.msra.mxu0 0.0
    %2022 = vmatprep.subr.mxu0 0.0
    %2023 = vmatpush2.msra.mxu0 0.0
    %2024 = vmatprep.subr.mxu0 0.0
    %2025 = vmatpush2.msra.mxu0 0.0
    %2026 = vmatprep.subr.mxu0 0.0
    %2027 = vmatpush2.msra.mxu0 0.0
    %2028 = vmatprep.subr.mxu0 0.0
    %2029 = vmatpush2.msra.mxu0 0.0
    %2030 = vmatprep.mubr.f32.mxu0 0.0
    %2031 = vmatmul.mubr.f32.gmra.mxu0 %v1961
    %v2032 = vpop.f32.mrf.mxu0
    %v2033 = vadd.f32 0.0, %v2032
    %v2034 = vpop.f32.mrf.mxu0
    %2035 = vmatprep.mubr.f32.mxu0 0.0
    %2036 = vmatmul.mubr.f32.gmra.mxu0 %v1964
    %v2037 = vpop.f32.mrf.mxu0
    %v2038 = vadd.f32 0.0, %v2037
    %v2039 = vpop.f32.mrf.mxu0
    %2040 = vdwg.mxu0
    %v2042 = vsel %vm30, %v1956, 0
    %v2045 = vsel %vm30, %v1957, 0
    %2047 = vmatprep.subr.mxu0 0.0
    %2048 = vmatpush1.msra.mxu0 0.0
    %2049 = vmatprep.subr.mxu0 0.0
    %2050 = vmatpush1.msra.mxu0 0.0
    %2051 = vmatprep.subr.mxu0 0.0
    %2052 = vmatpush1.msra.mxu0 0.0
    %2053 = vmatprep.subr.mxu0 0.0
    %2054 = vmatpush1.msra.mxu0 0.0
    %2055 = vmatprep.subr.mxu0 0.0
    %2056 = vmatpush1.msra.mxu0 0.0
    %2057 = vmatprep.subr.mxu0 0.0
    %2058 = vmatpush1.msra.mxu0 0.0
    %2059 = vmatprep.subr.mxu0 0.0
    %2060 = vmatpush1.msra.mxu0 0.0
    %2061 = vmatprep.subr.mxu0 0.0
    %2062 = vmatpush1.msra.mxu0 0.0
    %2063 = vmatprep.subr.mxu0 0.0
    %2064 = vmatpush1.msra.mxu0 0.0
    %2065 = vmatprep.subr.mxu0 0.0
    %2066 = vmatpush1.msra.mxu0 0.0
    %2067 = vmatprep.subr.mxu0 0.0
    %2068 = vmatpush1.msra.mxu0 0.0
    %2069 = vmatprep.subr.mxu0 0.0
    %2070 = vmatpush1.msra.mxu0 0.0
    %2071 = vmatprep.subr.mxu0 0.0
    %2072 = vmatpush1.msra.mxu0 0.0
    %2073 = vmatprep.subr.mxu0 0.0
    %2074 = vmatpush1.msra.mxu0 0.0
    %2075 = vmatprep.subr.mxu0 0.0
    %2076 = vmatpush1.msra.mxu0 0.0
    %2077 = vmatprep.subr.mxu0 0.0
    %2078 = vmatpush1.msra.mxu0 %v25
    %2079 = vmatprep.subr.mxu0 0.0
    %2080 = vmatpush2.msra.mxu0 0.0
    %2081 = vmatprep.subr.mxu0 0.0
    %2082 = vmatpush2.msra.mxu0 0.0
    %2083 = vmatprep.subr.mxu0 0.0
    %2084 = vmatpush2.msra.mxu0 0.0
    %2085 = vmatprep.subr.mxu0 0.0
    %2086 = vmatpush2.msra.mxu0 0.0
    %2087 = vmatprep.subr.mxu0 0.0
    %2088 = vmatpush2.msra.mxu0 0.0
    %2089 = vmatprep.subr.mxu0 0.0
    %2090 = vmatpush2.msra.mxu0 0.0
    %2091 = vmatprep.subr.mxu0 0.0
    %2092 = vmatpush2.msra.mxu0 0.0
    %2093 = vmatprep.subr.mxu0 0.0
    %2094 = vmatpush2.msra.mxu0 0.0
    %2095 = vmatprep.subr.mxu0 0.0
    %2096 = vmatpush2.msra.mxu0 0.0
    %2097 = vmatprep.subr.mxu0 0.0
    %2098 = vmatpush2.msra.mxu0 0.0
    %2099 = vmatprep.subr.mxu0 0.0
    %2100 = vmatpush2.msra.mxu0 0.0
    %2101 = vmatprep.subr.mxu0 0.0
    %2102 = vmatpush2.msra.mxu0 0.0
    %2103 = vmatprep.subr.mxu0 0.0
    %2104 = vmatpush2.msra.mxu0 0.0
    %2105 = vmatprep.subr.mxu0 0.0
    %2106 = vmatpush2.msra.mxu0 0.0
    %2107 = vmatprep.subr.mxu0 0.0
    %2108 = vmatpush2.msra.mxu0 0.0
    %2109 = vmatprep.subr.mxu0 0.0
    %2110 = vmatpush2.msra.mxu0 0.0
    %2111 = vmatprep.mubr.f32.mxu0 0.0
    %2112 = vmatmul.mubr.f32.gmra.mxu0 %v2042
    %v2113 = vpop.f32.mrf.mxu0
    %v2114 = vadd.f32 %v2033, %v2113
    %v2115 = vpop.f32.mrf.mxu0
    %2116 = vmatprep.mubr.f32.mxu0 0.0
    %2117 = vmatmul.mubr.f32.gmra.mxu0 %v2045
    %v2118 = vpop.f32.mrf.mxu0
    %v2119 = vadd.f32 %v2038, %v2118
    %v2120 = vpop.f32.mrf.mxu0
    %2121 = vdwg.mxu0
    %v2122 = vld [vmem:[%s0 + $0x21] sm:$0xff]
    %v2123 = vld [vmem:[%s0 + $0x29] sm:$0xff]
    %v2125 = vsel %vm30, %v2122, 0
    %v2128 = vsel %vm30, %v2123, 0
    %2130 = vmatprep.subr.mxu0 0.0
    %2131 = vmatpush1.msra.mxu0 0.0
    %2132 = vmatprep.subr.mxu0 0.0
    %2133 = vmatpush1.msra.mxu0 0.0
    %2134 = vmatprep.subr.mxu0 0.0
    %2135 = vmatpush1.msra.mxu0 0.0
    %2136 = vmatprep.subr.mxu0 0.0
    %2137 = vmatpush1.msra.mxu0 0.0
    %2138 = vmatprep.subr.mxu0 0.0
    %2139 = vmatpush1.msra.mxu0 0.0
    %2140 = vmatprep.subr.mxu0 0.0
    %2141 = vmatpush1.msra.mxu0 0.0
    %2142 = vmatprep.subr.mxu0 0.0
    %2143 = vmatpush1.msra.mxu0 0.0
    %2144 = vmatprep.subr.mxu0 0.0
    %2145 = vmatpush1.msra.mxu0 0.0
    %2146 = vmatprep.subr.mxu0 0.0
    %2147 = vmatpush1.msra.mxu0 0.0
    %2148 = vmatprep.subr.mxu0 0.0
    %2149 = vmatpush1.msra.mxu0 0.0
    %2150 = vmatprep.subr.mxu0 0.0
    %2151 = vmatpush1.msra.mxu0 0.0
    %2152 = vmatprep.subr.mxu0 0.0
    %2153 = vmatpush1.msra.mxu0 0.0
    %2154 = vmatprep.subr.mxu0 0.0
    %2155 = vmatpush1.msra.mxu0 0.0
    %2156 = vmatprep.subr.mxu0 0.0
    %2157 = vmatpush1.msra.mxu0 0.0
    %2158 = vmatprep.subr.mxu0 0.0
    %2159 = vmatpush1.msra.mxu0 0.0
    %2160 = vmatprep.subr.mxu0 0.0
    %2161 = vmatpush1.msra.mxu0 %v196
    %2162 = vmatprep.subr.mxu0 0.0
    %2163 = vmatpush2.msra.mxu0 0.0
    %2164 = vmatprep.subr.mxu0 0.0
    %2165 = vmatpush2.msra.mxu0 0.0
    %2166 = vmatprep.subr.mxu0 0.0
    %2167 = vmatpush2.msra.mxu0 0.0
    %2168 = vmatprep.subr.mxu0 0.0
    %2169 = vmatpush2.msra.mxu0 0.0
    %2170 = vmatprep.subr.mxu0 0.0
    %2171 = vmatpush2.msra.mxu0 0.0
    %2172 = vmatprep.subr.mxu0 0.0
    %2173 = vmatpush2.msra.mxu0 0.0
    %2174 = vmatprep.subr.mxu0 0.0
    %2175 = vmatpush2.msra.mxu0 0.0
    %2176 = vmatprep.subr.mxu0 0.0
    %2177 = vmatpush2.msra.mxu0 0.0
    %2178 = vmatprep.subr.mxu0 0.0
    %2179 = vmatpush2.msra.mxu0 0.0
    %2180 = vmatprep.subr.mxu0 0.0
    %2181 = vmatpush2.msra.mxu0 0.0
    %2182 = vmatprep.subr.mxu0 0.0
    %2183 = vmatpush2.msra.mxu0 0.0
    %2184 = vmatprep.subr.mxu0 0.0
    %2185 = vmatpush2.msra.mxu0 0.0
    %2186 = vmatprep.subr.mxu0 0.0
    %2187 = vmatpush2.msra.mxu0 0.0
    %2188 = vmatprep.subr.mxu0 0.0
    %2189 = vmatpush2.msra.mxu0 0.0
    %2190 = vmatprep.subr.mxu0 0.0
    %2191 = vmatpush2.msra.mxu0 0.0
    %2192 = vmatprep.subr.mxu0 0.0
    %2193 = vmatpush2.msra.mxu0 0.0
    %2194 = vmatprep.mubr.f32.mxu0 0.0
    %2195 = vmatmul.mubr.f32.gmra.mxu0 %v2125
    %v2196 = vpop.f32.mrf.mxu0
    %v2197 = vadd.f32 0.0, %v2196
    %v2198 = vpop.f32.mrf.mxu0
    %2199 = vmatprep.mubr.f32.mxu0 0.0
    %2200 = vmatmul.mubr.f32.gmra.mxu0 %v2128
    %v2201 = vpop.f32.mrf.mxu0
    %v2202 = vadd.f32 0.0, %v2201
    %v2203 = vpop.f32.mrf.mxu0
    %2204 = vdwg.mxu0
    %v2205 = vadd.f32 %v2114, %v2197
    %v2206 = vadd.f32 %v2119, %v2202
    %v2207 = vld [vmem:[%s0 + $0x22] sm:$0xff]
    %v2208 = vld [vmem:[%s0 + $0x2a] sm:$0xff]
    %v2210 = vsel %vm30, %v2207, 0
    %v2213 = vsel %vm30, %v2208, 0
    %2215 = vmatprep.subr.mxu0 0.0
    %2216 = vmatpush1.msra.mxu0 0.0
    %2217 = vmatprep.subr.mxu0 0.0
    %2218 = vmatpush1.msra.mxu0 0.0
    %2219 = vmatprep.subr.mxu0 0.0
    %2220 = vmatpush1.msra.mxu0 0.0
    %2221 = vmatprep.subr.mxu0 0.0
    %2222 = vmatpush1.msra.mxu0 0.0
    %2223 = vmatprep.subr.mxu0 0.0
    %2224 = vmatpush1.msra.mxu0 0.0
    %2225 = vmatprep.subr.mxu0 0.0
    %2226 = vmatpush1.msra.mxu0 0.0
    %2227 = vmatprep.subr.mxu0 0.0
    %2228 = vmatpush1.msra.mxu0 0.0
    %2229 = vmatprep.subr.mxu0 0.0
    %2230 = vmatpush1.msra.mxu0 0.0
    %2231 = vmatprep.subr.mxu0 0.0
    %2232 = vmatpush1.msra.mxu0 0.0
    %2233 = vmatprep.subr.mxu0 0.0
    %2234 = vmatpush1.msra.mxu0 0.0
    %2235 = vmatprep.subr.mxu0 0.0
    %2236 = vmatpush1.msra.mxu0 0.0
    %2237 = vmatprep.subr.mxu0 0.0
    %2238 = vmatpush1.msra.mxu0 0.0
    %2239 = vmatprep.subr.mxu0 0.0
    %2240 = vmatpush1.msra.mxu0 0.0
    %2241 = vmatprep.subr.mxu0 0.0
    %2242 = vmatpush1.msra.mxu0 0.0
    %2243 = vmatprep.subr.mxu0 0.0
    %2244 = vmatpush1.msra.mxu0 0.0
    %2245 = vmatprep.subr.mxu0 0.0
    %2246 = vmatpush1.msra.mxu0 %v283
    %2247 = vmatprep.subr.mxu0 0.0
    %2248 = vmatpush2.msra.mxu0 0.0
    %2249 = vmatprep.subr.mxu0 0.0
    %2250 = vmatpush2.msra.mxu0 0.0
    %2251 = vmatprep.subr.mxu0 0.0
    %2252 = vmatpush2.msra.mxu0 0.0
    %2253 = vmatprep.subr.mxu0 0.0
    %2254 = vmatpush2.msra.mxu0 0.0
    %2255 = vmatprep.subr.mxu0 0.0
    %2256 = vmatpush2.msra.mxu0 0.0
    %2257 = vmatprep.subr.mxu0 0.0
    %2258 = vmatpush2.msra.mxu0 0.0
    %2259 = vmatprep.subr.mxu0 0.0
    %2260 = vmatpush2.msra.mxu0 0.0
    %2261 = vmatprep.subr.mxu0 0.0
    %2262 = vmatpush2.msra.mxu0 0.0
    %2263 = vmatprep.subr.mxu0 0.0
    %2264 = vmatpush2.msra.mxu0 0.0
    %2265 = vmatprep.subr.mxu0 0.0
    %2266 = vmatpush2.msra.mxu0 0.0
    %2267 = vmatprep.subr.mxu0 0.0
    %2268 = vmatpush2.msra.mxu0 0.0
    %2269 = vmatprep.subr.mxu0 0.0
    %2270 = vmatpush2.msra.mxu0 0.0
    %2271 = vmatprep.subr.mxu0 0.0
    %2272 = vmatpush2.msra.mxu0 0.0
    %2273 = vmatprep.subr.mxu0 0.0
    %2274 = vmatpush2.msra.mxu0 0.0
    %2275 = vmatprep.subr.mxu0 0.0
    %2276 = vmatpush2.msra.mxu0 0.0
    %2277 = vmatprep.subr.mxu0 0.0
    %2278 = vmatpush2.msra.mxu0 0.0
    %2279 = vmatprep.mubr.f32.mxu0 0.0
    %2280 = vmatmul.mubr.f32.gmra.mxu0 %v2210
    %v2281 = vpop.f32.mrf.mxu0
    %v2282 = vadd.f32 0.0, %v2281
    %v2283 = vpop.f32.mrf.mxu0
    %2284 = vmatprep.mubr.f32.mxu0 0.0
    %2285 = vmatmul.mubr.f32.gmra.mxu0 %v2213
    %v2286 = vpop.f32.mrf.mxu0
    %v2287 = vadd.f32 0.0, %v2286
    %v2288 = vpop.f32.mrf.mxu0
    %2289 = vdwg.mxu0
    %v2290 = vadd.f32 %v2205, %v2282
    %v2291 = vadd.f32 %v2206, %v2287
    %v2292 = vld [vmem:[%s0 + $0x23] sm:$0xff]
    %v2293 = vld [vmem:[%s0 + $0x2b] sm:$0xff]
    %v2295 = vsel %vm30, %v2292, 0
    %v2298 = vsel %vm30, %v2293, 0
    %2300 = vmatprep.subr.mxu0 0.0
    %2301 = vmatpush1.msra.mxu0 0.0
    %2302 = vmatprep.subr.mxu0 0.0
    %2303 = vmatpush1.msra.mxu0 0.0
    %2304 = vmatprep.subr.mxu0 0.0
    %2305 = vmatpush1.msra.mxu0 0.0
    %2306 = vmatprep.subr.mxu0 0.0
    %2307 = vmatpush1.msra.mxu0 0.0
    %2308 = vmatprep.subr.mxu0 0.0
    %2309 = vmatpush1.msra.mxu0 0.0
    %2310 = vmatprep.subr.mxu0 0.0
    %2311 = vmatpush1.msra.mxu0 0.0
    %2312 = vmatprep.subr.mxu0 0.0
    %2313 = vmatpush1.msra.mxu0 0.0
    %2314 = vmatprep.subr.mxu0 0.0
    %2315 = vmatpush1.msra.mxu0 0.0
    %2316 = vmatprep.subr.mxu0 0.0
    %2317 = vmatpush1.msra.mxu0 0.0
    %2318 = vmatprep.subr.mxu0 0.0
    %2319 = vmatpush1.msra.mxu0 0.0
    %2320 = vmatprep.subr.mxu0 0.0
    %2321 = vmatpush1.msra.mxu0 0.0
    %2322 = vmatprep.subr.mxu0 0.0
    %2323 = vmatpush1.msra.mxu0 0.0
    %2324 = vmatprep.subr.mxu0 0.0
    %2325 = vmatpush1.msra.mxu0 0.0
    %2326 = vmatprep.subr.mxu0 0.0
    %2327 = vmatpush1.msra.mxu0 0.0
    %2328 = vmatprep.subr.mxu0 0.0
    %2329 = vmatpush1.msra.mxu0 0.0
    %2330 = vmatprep.subr.mxu0 0.0
    %2331 = vmatpush1.msra.mxu0 %v370
    %2332 = vmatprep.subr.mxu0 0.0
    %2333 = vmatpush2.msra.mxu0 0.0
    %2334 = vmatprep.subr.mxu0 0.0
    %2335 = vmatpush2.msra.mxu0 0.0
    %2336 = vmatprep.subr.mxu0 0.0
    %2337 = vmatpush2.msra.mxu0 0.0
    %2338 = vmatprep.subr.mxu0 0.0
    %2339 = vmatpush2.msra.mxu0 0.0
    %2340 = vmatprep.subr.mxu0 0.0
    %2341 = vmatpush2.msra.mxu0 0.0
    %2342 = vmatprep.subr.mxu0 0.0
    %2343 = vmatpush2.msra.mxu0 0.0
    %2344 = vmatprep.subr.mxu0 0.0
    %2345 = vmatpush2.msra.mxu0 0.0
    %2346 = vmatprep.subr.mxu0 0.0
    %2347 = vmatpush2.msra.mxu0 0.0
    %2348 = vmatprep.subr.mxu0 0.0
    %2349 = vmatpush2.msra.mxu0 0.0
    %2350 = vmatprep.subr.mxu0 0.0
    %2351 = vmatpush2.msra.mxu0 0.0
    %2352 = vmatprep.subr.mxu0 0.0
    %2353 = vmatpush2.msra.mxu0 0.0
    %2354 = vmatprep.subr.mxu0 0.0
    %2355 = vmatpush2.msra.mxu0 0.0
    %2356 = vmatprep.subr.mxu0 0.0
    %2357 = vmatpush2.msra.mxu0 0.0
    %2358 = vmatprep.subr.mxu0 0.0
    %2359 = vmatpush2.msra.mxu0 0.0
    %2360 = vmatprep.subr.mxu0 0.0
    %2361 = vmatpush2.msra.mxu0 0.0
    %2362 = vmatprep.subr.mxu0 0.0
    %2363 = vmatpush2.msra.mxu0 0.0
    %2364 = vmatprep.mubr.f32.mxu0 0.0
    %2365 = vmatmul.mubr.f32.gmra.mxu0 %v2295
    %v2366 = vpop.f32.mrf.mxu0
    %v2367 = vadd.f32 0.0, %v2366
    %v2368 = vpop.f32.mrf.mxu0
    %2369 = vmatprep.mubr.f32.mxu0 0.0
    %2370 = vmatmul.mubr.f32.gmra.mxu0 %v2298
    %v2371 = vpop.f32.mrf.mxu0
    %v2372 = vadd.f32 0.0, %v2371
    %v2373 = vpop.f32.mrf.mxu0
    %2374 = vdwg.mxu0
    %v2375 = vadd.f32 %v2290, %v2367
    %v2376 = vadd.f32 %v2291, %v2372
    %v2377 = vld [vmem:[%s0 + $0x24] sm:$0xff]
    %v2378 = vld [vmem:[%s0 + $0x2c] sm:$0xff]
    %v2380 = vsel %vm30, %v2377, 0
    %v2383 = vsel %vm30, %v2378, 0
    %2385 = vmatprep.subr.mxu0 0.0
    %2386 = vmatpush1.msra.mxu0 0.0
    %2387 = vmatprep.subr.mxu0 0.0
    %2388 = vmatpush1.msra.mxu0 0.0
    %2389 = vmatprep.subr.mxu0 0.0
    %2390 = vmatpush1.msra.mxu0 0.0
    %2391 = vmatprep.subr.mxu0 0.0
    %2392 = vmatpush1.msra.mxu0 0.0
    %2393 = vmatprep.subr.mxu0 0.0
    %2394 = vmatpush1.msra.mxu0 0.0
    %2395 = vmatprep.subr.mxu0 0.0
    %2396 = vmatpush1.msra.mxu0 0.0
    %2397 = vmatprep.subr.mxu0 0.0
    %2398 = vmatpush1.msra.mxu0 0.0
    %2399 = vmatprep.subr.mxu0 0.0
    %2400 = vmatpush1.msra.mxu0 0.0
    %2401 = vmatprep.subr.mxu0 0.0
    %2402 = vmatpush1.msra.mxu0 0.0
    %2403 = vmatprep.subr.mxu0 0.0
    %2404 = vmatpush1.msra.mxu0 0.0
    %2405 = vmatprep.subr.mxu0 0.0
    %2406 = vmatpush1.msra.mxu0 0.0
    %2407 = vmatprep.subr.mxu0 0.0
    %2408 = vmatpush1.msra.mxu0 0.0
    %2409 = vmatprep.subr.mxu0 0.0
    %2410 = vmatpush1.msra.mxu0 0.0
    %2411 = vmatprep.subr.mxu0 0.0
    %2412 = vmatpush1.msra.mxu0 0.0
    %2413 = vmatprep.subr.mxu0 0.0
    %2414 = vmatpush1.msra.mxu0 0.0
    %2415 = vmatprep.subr.mxu0 0.0
    %2416 = vmatpush1.msra.mxu0 %v457
    %2417 = vmatprep.subr.mxu0 0.0
    %2418 = vmatpush2.msra.mxu0 0.0
    %2419 = vmatprep.subr.mxu0 0.0
    %2420 = vmatpush2.msra.mxu0 0.0
    %2421 = vmatprep.subr.mxu0 0.0
    %2422 = vmatpush2.msra.mxu0 0.0
    %2423 = vmatprep.subr.mxu0 0.0
    %2424 = vmatpush2.msra.mxu0 0.0
    %2425 = vmatprep.subr.mxu0 0.0
    %2426 = vmatpush2.msra.mxu0 0.0
    %2427 = vmatprep.subr.mxu0 0.0
    %2428 = vmatpush2.msra.mxu0 0.0
    %2429 = vmatprep.subr.mxu0 0.0
    %2430 = vmatpush2.msra.mxu0 0.0
    %2431 = vmatprep.subr.mxu0 0.0
    %2432 = vmatpush2.msra.mxu0 0.0
    %2433 = vmatprep.subr.mxu0 0.0
    %2434 = vmatpush2.msra.mxu0 0.0
    %2435 = vmatprep.subr.mxu0 0.0
    %2436 = vmatpush2.msra.mxu0 0.0
    %2437 = vmatprep.subr.mxu0 0.0
    %2438 = vmatpush2.msra.mxu0 0.0
    %2439 = vmatprep.subr.mxu0 0.0
    %2440 = vmatpush2.msra.mxu0 0.0
    %2441 = vmatprep.subr.mxu0 0.0
    %2442 = vmatpush2.msra.mxu0 0.0
    %2443 = vmatprep.subr.mxu0 0.0
    %2444 = vmatpush2.msra.mxu0 0.0
    %2445 = vmatprep.subr.mxu0 0.0
    %2446 = vmatpush2.msra.mxu0 0.0
    %2447 = vmatprep.subr.mxu0 0.0
    %2448 = vmatpush2.msra.mxu0 0.0
    %2449 = vmatprep.mubr.f32.mxu0 0.0
    %2450 = vmatmul.mubr.f32.gmra.mxu0 %v2380
    %v2451 = vpop.f32.mrf.mxu0
    %v2452 = vadd.f32 0.0, %v2451
    %v2453 = vpop.f32.mrf.mxu0
    %2454 = vmatprep.mubr.f32.mxu0 0.0
    %2455 = vmatmul.mubr.f32.gmra.mxu0 %v2383
    %v2456 = vpop.f32.mrf.mxu0
    %v2457 = vadd.f32 0.0, %v2456
    %v2458 = vpop.f32.mrf.mxu0
    %2459 = vdwg.mxu0
    %v2460 = vadd.f32 %v2375, %v2452
    %v2461 = vadd.f32 %v2376, %v2457
    %v2462 = vld [vmem:[%s0 + $0x25] sm:$0xff]
    %v2463 = vld [vmem:[%s0 + $0x2d] sm:$0xff]
    %v2465 = vsel %vm30, %v2462, 0
    %v2468 = vsel %vm30, %v2463, 0
    %2470 = vmatprep.subr.mxu0 0.0
    %2471 = vmatpush1.msra.mxu0 0.0
    %2472 = vmatprep.subr.mxu0 0.0
    %2473 = vmatpush1.msra.mxu0 0.0
    %2474 = vmatprep.subr.mxu0 0.0
    %2475 = vmatpush1.msra.mxu0 0.0
    %2476 = vmatprep.subr.mxu0 0.0
    %2477 = vmatpush1.msra.mxu0 0.0
    %2478 = vmatprep.subr.mxu0 0.0
    %2479 = vmatpush1.msra.mxu0 0.0
    %2480 = vmatprep.subr.mxu0 0.0
    %2481 = vmatpush1.msra.mxu0 0.0
    %2482 = vmatprep.subr.mxu0 0.0
    %2483 = vmatpush1.msra.mxu0 0.0
    %2484 = vmatprep.subr.mxu0 0.0
    %2485 = vmatpush1.msra.mxu0 0.0
    %2486 = vmatprep.subr.mxu0 0.0
    %2487 = vmatpush1.msra.mxu0 0.0
    %2488 = vmatprep.subr.mxu0 0.0
    %2489 = vmatpush1.msra.mxu0 0.0
    %2490 = vmatprep.subr.mxu0 0.0
    %2491 = vmatpush1.msra.mxu0 0.0
    %2492 = vmatprep.subr.mxu0 0.0
    %2493 = vmatpush1.msra.mxu0 0.0
    %2494 = vmatprep.subr.mxu0 0.0
    %2495 = vmatpush1.msra.mxu0 0.0
    %2496 = vmatprep.subr.mxu0 0.0
    %2497 = vmatpush1.msra.mxu0 0.0
    %2498 = vmatprep.subr.mxu0 0.0
    %2499 = vmatpush1.msra.mxu0 0.0
    %2500 = vmatprep.subr.mxu0 0.0
    %2501 = vmatpush1.msra.mxu0 %v544
    %2502 = vmatprep.subr.mxu0 0.0
    %2503 = vmatpush2.msra.mxu0 0.0
    %2504 = vmatprep.subr.mxu0 0.0
    %2505 = vmatpush2.msra.mxu0 0.0
    %2506 = vmatprep.subr.mxu0 0.0
    %2507 = vmatpush2.msra.mxu0 0.0
    %2508 = vmatprep.subr.mxu0 0.0
    %2509 = vmatpush2.msra.mxu0 0.0
    %2510 = vmatprep.subr.mxu0 0.0
    %2511 = vmatpush2.msra.mxu0 0.0
    %2512 = vmatprep.subr.mxu0 0.0
    %2513 = vmatpush2.msra.mxu0 0.0
    %2514 = vmatprep.subr.mxu0 0.0
    %2515 = vmatpush2.msra.mxu0 0.0
    %2516 = vmatprep.subr.mxu0 0.0
    %2517 = vmatpush2.msra.mxu0 0.0
    %2518 = vmatprep.subr.mxu0 0.0
    %2519 = vmatpush2.msra.mxu0 0.0
    %2520 = vmatprep.subr.mxu0 0.0
    %2521 = vmatpush2.msra.mxu0 0.0
    %2522 = vmatprep.subr.mxu0 0.0
    %2523 = vmatpush2.msra.mxu0 0.0
    %2524 = vmatprep.subr.mxu0 0.0
    %2525 = vmatpush2.msra.mxu0 0.0
    %2526 = vmatprep.subr.mxu0 0.0
    %2527 = vmatpush2.msra.mxu0 0.0
    %2528 = vmatprep.subr.mxu0 0.0
    %2529 = vmatpush2.msra.mxu0 0.0
    %2530 = vmatprep.subr.mxu0 0.0
    %2531 = vmatpush2.msra.mxu0 0.0
    %2532 = vmatprep.subr.mxu0 0.0
    %2533 = vmatpush2.msra.mxu0 0.0
    %2534 = vmatprep.mubr.f32.mxu0 0.0
    %2535 = vmatmul.mubr.f32.gmra.mxu0 %v2465
    %v2536 = vpop.f32.mrf.mxu0
    %v2537 = vadd.f32 0.0, %v2536
    %v2538 = vpop.f32.mrf.mxu0
    %2539 = vmatprep.mubr.f32.mxu0 0.0
    %2540 = vmatmul.mubr.f32.gmra.mxu0 %v2468
    %v2541 = vpop.f32.mrf.mxu0
    %v2542 = vadd.f32 0.0, %v2541
    %v2543 = vpop.f32.mrf.mxu0
    %2544 = vdwg.mxu0
    %v2545 = vadd.f32 %v2460, %v2537
    %v2546 = vadd.f32 %v2461, %v2542
    %v2547 = vadd.f32 %v2545, %v633
    %v2548 = vadd.f32 %v2546, %v633
    %vm2549 = vcmp.ge.f32.partialorder %v2547, 0.0
    %vm2550 = vcmp.ge.f32.partialorder %v2548, 0.0
    %v2551 = vmul.f32 %v2547, 0.01
    %v2552 = vmul.f32 %v2548, 0.01
    %v2553 = vsel %vm2549, %v2547, %v2551
    %v2554 = vsel %vm2550, %v2548, %v2552
    %v2555 = vld [vmem:[%s0 + $0x1c] sm:$0xff]
    %v2556 = vld [vmem:[%s0 + $0x24] sm:$0xff]
    %v2557 = vld [vmem:[%s0 + $0x1e] sm:$0xff]
    %v2558 = vld [vmem:[%s0 + $0x26] sm:$0xff]
    %v2560 = vsel %vm30, %v2557, 0
    %v2563 = vsel %vm30, %v2558, 0
    %2565 = vmatprep.subr.mxu0 0.0
    %2566 = vmatpush1.msra.mxu0 0.0
    %2567 = vmatprep.subr.mxu0 0.0
    %2568 = vmatpush1.msra.mxu0 0.0
    %2569 = vmatprep.subr.mxu0 0.0
    %2570 = vmatpush1.msra.mxu0 0.0
    %2571 = vmatprep.subr.mxu0 0.0
    %2572 = vmatpush1.msra.mxu0 0.0
    %2573 = vmatprep.subr.mxu0 0.0
    %2574 = vmatpush1.msra.mxu0 0.0
    %2575 = vmatprep.subr.mxu0 0.0
    %2576 = vmatpush1.msra.mxu0 0.0
    %2577 = vmatprep.subr.mxu0 0.0
    %2578 = vmatpush1.msra.mxu0 0.0
    %2579 = vmatprep.subr.mxu0 0.0
    %2580 = vmatpush1.msra.mxu0 0.0
    %2581 = vmatprep.subr.mxu0 0.0
    %2582 = vmatpush1.msra.mxu0 0.0
    %2583 = vmatprep.subr.mxu0 0.0
    %2584 = vmatpush1.msra.mxu0 0.0
    %2585 = vmatprep.subr.mxu0 0.0
    %2586 = vmatpush1.msra.mxu0 0.0
    %2587 = vmatprep.subr.mxu0 0.0
    %2588 = vmatpush1.msra.mxu0 0.0
    %2589 = vmatprep.subr.mxu0 0.0
    %2590 = vmatpush1.msra.mxu0 0.0
    %2591 = vmatprep.subr.mxu0 0.0
    %2592 = vmatpush1.msra.mxu0 0.0
    %2593 = vmatprep.subr.mxu0 0.0
    %2594 = vmatpush1.msra.mxu0 0.0
    %2595 = vmatprep.subr.mxu0 0.0
    %2596 = vmatpush1.msra.mxu0 %v650
    %2597 = vmatprep.subr.mxu0 0.0
    %2598 = vmatpush2.msra.mxu0 0.0
    %2599 = vmatprep.subr.mxu0 0.0
    %2600 = vmatpush2.msra.mxu0 0.0
    %2601 = vmatprep.subr.mxu0 0.0
    %2602 = vmatpush2.msra.mxu0 0.0
    %2603 = vmatprep.subr.mxu0 0.0
    %2604 = vmatpush2.msra.mxu0 0.0
    %2605 = vmatprep.subr.mxu0 0.0
    %2606 = vmatpush2.msra.mxu0 0.0
    %2607 = vmatprep.subr.mxu0 0.0
    %2608 = vmatpush2.msra.mxu0 0.0
    %2609 = vmatprep.subr.mxu0 0.0
    %2610 = vmatpush2.msra.mxu0 0.0
    %2611 = vmatprep.subr.mxu0 0.0
    %2612 = vmatpush2.msra.mxu0 0.0
    %2613 = vmatprep.subr.mxu0 0.0
    %2614 = vmatpush2.msra.mxu0 0.0
    %2615 = vmatprep.subr.mxu0 0.0
    %2616 = vmatpush2.msra.mxu0 0.0
    %2617 = vmatprep.subr.mxu0 0.0
    %2618 = vmatpush2.msra.mxu0 0.0
    %2619 = vmatprep.subr.mxu0 0.0
    %2620 = vmatpush2.msra.mxu0 0.0
    %2621 = vmatprep.subr.mxu0 0.0
    %2622 = vmatpush2.msra.mxu0 0.0
    %2623 = vmatprep.subr.mxu0 0.0
    %2624 = vmatpush2.msra.mxu0 0.0
    %2625 = vmatprep.subr.mxu0 0.0
    %2626 = vmatpush2.msra.mxu0 0.0
    %2627 = vmatprep.subr.mxu0 0.0
    %2628 = vmatpush2.msra.mxu0 0.0
    %2629 = vmatprep.mubr.f32.mxu0 0.0
    %2630 = vmatmul.mubr.f32.gmra.mxu0 %v2560
    %v2631 = vpop.f32.mrf.mxu0
    %v2632 = vadd.f32 0.0, %v2631
    %v2633 = vpop.f32.mrf.mxu0
    %2634 = vmatprep.mubr.f32.mxu0 0.0
    %2635 = vmatmul.mubr.f32.gmra.mxu0 %v2563
    %v2636 = vpop.f32.mrf.mxu0
    %v2637 = vadd.f32 0.0, %v2636
    %v2638 = vpop.f32.mrf.mxu0
    %2639 = vdwg.mxu0
    %v2641 = vsel %vm30, %v2555, 0
    %v2644 = vsel %vm30, %v2556, 0
    %2646 = vmatprep.subr.mxu0 0.0
    %2647 = vmatpush1.msra.mxu0 0.0
    %2648 = vmatprep.subr.mxu0 0.0
    %2649 = vmatpush1.msra.mxu0 0.0
    %2650 = vmatprep.subr.mxu0 0.0
    %2651 = vmatpush1.msra.mxu0 0.0
    %2652 = vmatprep.subr.mxu0 0.0
    %2653 = vmatpush1.msra.mxu0 0.0
    %2654 = vmatprep.subr.mxu0 0.0
    %2655 = vmatpush1.msra.mxu0 0.0
    %2656 = vmatprep.subr.mxu0 0.0
    %2657 = vmatpush1.msra.mxu0 0.0
    %2658 = vmatprep.subr.mxu0 0.0
    %2659 = vmatpush1.msra.mxu0 0.0
    %2660 = vmatprep.subr.mxu0 0.0
    %2661 = vmatpush1.msra.mxu0 0.0
    %2662 = vmatprep.subr.mxu0 0.0
    %2663 = vmatpush1.msra.mxu0 0.0
    %2664 = vmatprep.subr.mxu0 0.0
    %2665 = vmatpush1.msra.mxu0 0.0
    %2666 = vmatprep.subr.mxu0 0.0
    %2667 = vmatpush1.msra.mxu0 0.0
    %2668 = vmatprep.subr.mxu0 0.0
    %2669 = vmatpush1.msra.mxu0 0.0
    %2670 = vmatprep.subr.mxu0 0.0
    %2671 = vmatpush1.msra.mxu0 0.0
    %2672 = vmatprep.subr.mxu0 0.0
    %2673 = vmatpush1.msra.mxu0 0.0
    %2674 = vmatprep.subr.mxu0 0.0
    %2675 = vmatpush1.msra.mxu0 0.0
    %2676 = vmatprep.subr.mxu0 0.0
    %2677 = vmatpush1.msra.mxu0 %v646
    %2678 = vmatprep.subr.mxu0 0.0
    %2679 = vmatpush2.msra.mxu0 0.0
    %2680 = vmatprep.subr.mxu0 0.0
    %2681 = vmatpush2.msra.mxu0 0.0
    %2682 = vmatprep.subr.mxu0 0.0
    %2683 = vmatpush2.msra.mxu0 0.0
    %2684 = vmatprep.subr.mxu0 0.0
    %2685 = vmatpush2.msra.mxu0 0.0
    %2686 = vmatprep.subr.mxu0 0.0
    %2687 = vmatpush2.msra.mxu0 0.0
    %2688 = vmatprep.subr.mxu0 0.0
    %2689 = vmatpush2.msra.mxu0 0.0
    %2690 = vmatprep.subr.mxu0 0.0
    %2691 = vmatpush2.msra.mxu0 0.0
    %2692 = vmatprep.subr.mxu0 0.0
    %2693 = vmatpush2.msra.mxu0 0.0
    %2694 = vmatprep.subr.mxu0 0.0
    %2695 = vmatpush2.msra.mxu0 0.0
    %2696 = vmatprep.subr.mxu0 0.0
    %2697 = vmatpush2.msra.mxu0 0.0
    %2698 = vmatprep.subr.mxu0 0.0
    %2699 = vmatpush2.msra.mxu0 0.0
    %2700 = vmatprep.subr.mxu0 0.0
    %2701 = vmatpush2.msra.mxu0 0.0
    %2702 = vmatprep.subr.mxu0 0.0
    %2703 = vmatpush2.msra.mxu0 0.0
    %2704 = vmatprep.subr.mxu0 0.0
    %2705 = vmatpush2.msra.mxu0 0.0
    %2706 = vmatprep.subr.mxu0 0.0
    %2707 = vmatpush2.msra.mxu0 0.0
    %2708 = vmatprep.subr.mxu0 0.0
    %2709 = vmatpush2.msra.mxu0 0.0
    %2710 = vmatprep.mubr.f32.mxu0 0.0
    %2711 = vmatmul.mubr.f32.gmra.mxu0 %v2641
    %v2712 = vpop.f32.mrf.mxu0
    %v2713 = vadd.f32 %v2632, %v2712
    %v2714 = vpop.f32.mrf.mxu0
    %2715 = vmatprep.mubr.f32.mxu0 0.0
    %2716 = vmatmul.mubr.f32.gmra.mxu0 %v2644
    %v2717 = vpop.f32.mrf.mxu0
    %v2718 = vadd.f32 %v2637, %v2717
    %v2719 = vpop.f32.mrf.mxu0
    %2720 = vdwg.mxu0
    %2721 = vmatprep.subr.mxu0 0.0
    %2722 = vmatpush1.msra.mxu0 0.0
    %2723 = vmatprep.subr.mxu0 0.0
    %2724 = vmatpush1.msra.mxu0 0.0
    %2725 = vmatprep.subr.mxu0 0.0
    %2726 = vmatpush1.msra.mxu0 0.0
    %2727 = vmatprep.subr.mxu0 0.0
    %2728 = vmatpush1.msra.mxu0 0.0
    %2729 = vmatprep.subr.mxu0 0.0
    %2730 = vmatpush1.msra.mxu0 0.0
    %2731 = vmatprep.subr.mxu0 0.0
    %2732 = vmatpush1.msra.mxu0 0.0
    %2733 = vmatprep.subr.mxu0 0.0
    %2734 = vmatpush1.msra.mxu0 0.0
    %2735 = vmatprep.subr.mxu0 0.0
    %2736 = vmatpush1.msra.mxu0 0.0
    %2737 = vmatprep.subr.mxu0 0.0
    %2738 = vmatpush1.msra.mxu0 0.0
    %2739 = vmatprep.subr.mxu0 0.0
    %2740 = vmatpush1.msra.mxu0 0.0
    %2741 = vmatprep.subr.mxu0 0.0
    %2742 = vmatpush1.msra.mxu0 0.0
    %2743 = vmatprep.subr.mxu0 0.0
    %2744 = vmatpush1.msra.mxu0 0.0
    %2745 = vmatprep.subr.mxu0 0.0
    %2746 = vmatpush1.msra.mxu0 0.0
    %2747 = vmatprep.subr.mxu0 0.0
    %2748 = vmatpush1.msra.mxu0 0.0
    %2749 = vmatprep.subr.mxu0 0.0
    %2750 = vmatpush1.msra.mxu0 0.0
    %2751 = vmatprep.subr.mxu0 0.0
    %2752 = vmatpush1.msra.mxu0 %v814
    %2753 = vmatprep.subr.mxu0 0.0
    %2754 = vmatpush2.msra.mxu0 0.0
    %2755 = vmatprep.subr.mxu0 0.0
    %2756 = vmatpush2.msra.mxu0 0.0
    %2757 = vmatprep.subr.mxu0 0.0
    %2758 = vmatpush2.msra.mxu0 0.0
    %2759 = vmatprep.subr.mxu0 0.0
    %2760 = vmatpush2.msra.mxu0 0.0
    %2761 = vmatprep.subr.mxu0 0.0
    %2762 = vmatpush2.msra.mxu0 0.0
    %2763 = vmatprep.subr.mxu0 0.0
    %2764 = vmatpush2.msra.mxu0 0.0
    %2765 = vmatprep.subr.mxu0 0.0
    %2766 = vmatpush2.msra.mxu0 0.0
    %2767 = vmatprep.subr.mxu0 0.0
    %2768 = vmatpush2.msra.mxu0 0.0
    %2769 = vmatprep.subr.mxu0 0.0
    %2770 = vmatpush2.msra.mxu0 0.0
    %2771 = vmatprep.subr.mxu0 0.0
    %2772 = vmatpush2.msra.mxu0 0.0
    %2773 = vmatprep.subr.mxu0 0.0
    %2774 = vmatpush2.msra.mxu0 0.0
    %2775 = vmatprep.subr.mxu0 0.0
    %2776 = vmatpush2.msra.mxu0 0.0
    %2777 = vmatprep.subr.mxu0 0.0
    %2778 = vmatpush2.msra.mxu0 0.0
    %2779 = vmatprep.subr.mxu0 0.0
    %2780 = vmatpush2.msra.mxu0 0.0
    %2781 = vmatprep.subr.mxu0 0.0
    %2782 = vmatpush2.msra.mxu0 0.0
    %2783 = vmatprep.subr.mxu0 0.0
    %2784 = vmatpush2.msra.mxu0 0.0
    %2785 = vmatprep.mubr.f32.mxu0 0.0
    %2786 = vmatmul.mubr.f32.gmra.mxu0 %v1961
    %v2787 = vpop.f32.mrf.mxu0
    %v2788 = vadd.f32 0.0, %v2787
    %v2789 = vpop.f32.mrf.mxu0
    %2790 = vmatprep.mubr.f32.mxu0 0.0
    %2791 = vmatmul.mubr.f32.gmra.mxu0 %v1964
    %v2792 = vpop.f32.mrf.mxu0
    %v2793 = vadd.f32 0.0, %v2792
    %v2794 = vpop.f32.mrf.mxu0
    %2795 = vdwg.mxu0
    %v2796 = vadd.f32 %v2713, %v2788
    %v2797 = vadd.f32 %v2718, %v2793
    %2798 = vmatprep.subr.mxu0 0.0
    %2799 = vmatpush1.msra.mxu0 0.0
    %2800 = vmatprep.subr.mxu0 0.0
    %2801 = vmatpush1.msra.mxu0 0.0
    %2802 = vmatprep.subr.mxu0 0.0
    %2803 = vmatpush1.msra.mxu0 0.0
    %2804 = vmatprep.subr.mxu0 0.0
    %2805 = vmatpush1.msra.mxu0 0.0
    %2806 = vmatprep.subr.mxu0 0.0
    %2807 = vmatpush1.msra.mxu0 0.0
    %2808 = vmatprep.subr.mxu0 0.0
    %2809 = vmatpush1.msra.mxu0 0.0
    %2810 = vmatprep.subr.mxu0 0.0
    %2811 = vmatpush1.msra.mxu0 0.0
    %2812 = vmatprep.subr.mxu0 0.0
    %2813 = vmatpush1.msra.mxu0 0.0
    %2814 = vmatprep.subr.mxu0 0.0
    %2815 = vmatpush1.msra.mxu0 0.0
    %2816 = vmatprep.subr.mxu0 0.0
    %2817 = vmatpush1.msra.mxu0 0.0
    %2818 = vmatprep.subr.mxu0 0.0
    %2819 = vmatpush1.msra.mxu0 0.0
    %2820 = vmatprep.subr.mxu0 0.0
    %2821 = vmatpush1.msra.mxu0 0.0
    %2822 = vmatprep.subr.mxu0 0.0
    %2823 = vmatpush1.msra.mxu0 0.0
    %2824 = vmatprep.subr.mxu0 0.0
    %2825 = vmatpush1.msra.mxu0 0.0
    %2826 = vmatprep.subr.mxu0 0.0
    %2827 = vmatpush1.msra.mxu0 0.0
    %2828 = vmatprep.subr.mxu0 0.0
    %2829 = vmatpush1.msra.mxu0 %v893
    %2830 = vmatprep.subr.mxu0 0.0
    %2831 = vmatpush2.msra.mxu0 0.0
    %2832 = vmatprep.subr.mxu0 0.0
    %2833 = vmatpush2.msra.mxu0 0.0
    %2834 = vmatprep.subr.mxu0 0.0
    %2835 = vmatpush2.msra.mxu0 0.0
    %2836 = vmatprep.subr.mxu0 0.0
    %2837 = vmatpush2.msra.mxu0 0.0
    %2838 = vmatprep.subr.mxu0 0.0
    %2839 = vmatpush2.msra.mxu0 0.0
    %2840 = vmatprep.subr.mxu0 0.0
    %2841 = vmatpush2.msra.mxu0 0.0
    %2842 = vmatprep.subr.mxu0 0.0
    %2843 = vmatpush2.msra.mxu0 0.0
    %2844 = vmatprep.subr.mxu0 0.0
    %2845 = vmatpush2.msra.mxu0 0.0
    %2846 = vmatprep.subr.mxu0 0.0
    %2847 = vmatpush2.msra.mxu0 0.0
    %2848 = vmatprep.subr.mxu0 0.0
    %2849 = vmatpush2.msra.mxu0 0.0
    %2850 = vmatprep.subr.mxu0 0.0
    %2851 = vmatpush2.msra.mxu0 0.0
    %2852 = vmatprep.subr.mxu0 0.0
    %2853 = vmatpush2.msra.mxu0 0.0
    %2854 = vmatprep.subr.mxu0 0.0
    %2855 = vmatpush2.msra.mxu0 0.0
    %2856 = vmatprep.subr.mxu0 0.0
    %2857 = vmatpush2.msra.mxu0 0.0
    %2858 = vmatprep.subr.mxu0 0.0
    %2859 = vmatpush2.msra.mxu0 0.0
    %2860 = vmatprep.subr.mxu0 0.0
    %2861 = vmatpush2.msra.mxu0 0.0
    %2862 = vmatprep.mubr.f32.mxu0 0.0
    %2863 = vmatmul.mubr.f32.gmra.mxu0 %v2210
    %v2864 = vpop.f32.mrf.mxu0
    %v2865 = vadd.f32 0.0, %v2864
    %v2866 = vpop.f32.mrf.mxu0
    %2867 = vmatprep.mubr.f32.mxu0 0.0
    %2868 = vmatmul.mubr.f32.gmra.mxu0 %v2213
    %v2869 = vpop.f32.mrf.mxu0
    %v2870 = vadd.f32 0.0, %v2869
    %v2871 = vpop.f32.mrf.mxu0
    %2872 = vdwg.mxu0
    %v2873 = vadd.f32 %v2796, %v2865
    %v2874 = vadd.f32 %v2797, %v2870
    %2875 = vmatprep.subr.mxu0 0.0
    %2876 = vmatpush1.msra.mxu0 0.0
    %2877 = vmatprep.subr.mxu0 0.0
    %2878 = vmatpush1.msra.mxu0 0.0
    %2879 = vmatprep.subr.mxu0 0.0
    %2880 = vmatpush1.msra.mxu0 0.0
    %2881 = vmatprep.subr.mxu0 0.0
    %2882 = vmatpush1.msra.mxu0 0.0
    %2883 = vmatprep.subr.mxu0 0.0
    %2884 = vmatpush1.msra.mxu0 0.0
    %2885 = vmatprep.subr.mxu0 0.0
    %2886 = vmatpush1.msra.mxu0 0.0
    %2887 = vmatprep.subr.mxu0 0.0
    %2888 = vmatpush1.msra.mxu0 0.0
    %2889 = vmatprep.subr.mxu0 0.0
    %2890 = vmatpush1.msra.mxu0 0.0
    %2891 = vmatprep.subr.mxu0 0.0
    %2892 = vmatpush1.msra.mxu0 0.0
    %2893 = vmatprep.subr.mxu0 0.0
    %2894 = vmatpush1.msra.mxu0 0.0
    %2895 = vmatprep.subr.mxu0 0.0
    %2896 = vmatpush1.msra.mxu0 0.0
    %2897 = vmatprep.subr.mxu0 0.0
    %2898 = vmatpush1.msra.mxu0 0.0
    %2899 = vmatprep.subr.mxu0 0.0
    %2900 = vmatpush1.msra.mxu0 0.0
    %2901 = vmatprep.subr.mxu0 0.0
    %2902 = vmatpush1.msra.mxu0 0.0
    %2903 = vmatprep.subr.mxu0 0.0
    %2904 = vmatpush1.msra.mxu0 0.0
    %2905 = vmatprep.subr.mxu0 0.0
    %2906 = vmatpush1.msra.mxu0 %v972
    %2907 = vmatprep.subr.mxu0 0.0
    %2908 = vmatpush2.msra.mxu0 0.0
    %2909 = vmatprep.subr.mxu0 0.0
    %2910 = vmatpush2.msra.mxu0 0.0
    %2911 = vmatprep.subr.mxu0 0.0
    %2912 = vmatpush2.msra.mxu0 0.0
    %2913 = vmatprep.subr.mxu0 0.0
    %2914 = vmatpush2.msra.mxu0 0.0
    %2915 = vmatprep.subr.mxu0 0.0
    %2916 = vmatpush2.msra.mxu0 0.0
    %2917 = vmatprep.subr.mxu0 0.0
    %2918 = vmatpush2.msra.mxu0 0.0
    %2919 = vmatprep.subr.mxu0 0.0
    %2920 = vmatpush2.msra.mxu0 0.0
    %2921 = vmatprep.subr.mxu0 0.0
    %2922 = vmatpush2.msra.mxu0 0.0
    %2923 = vmatprep.subr.mxu0 0.0
    %2924 = vmatpush2.msra.mxu0 0.0
    %2925 = vmatprep.subr.mxu0 0.0
    %2926 = vmatpush2.msra.mxu0 0.0
    %2927 = vmatprep.subr.mxu0 0.0
    %2928 = vmatpush2.msra.mxu0 0.0
    %2929 = vmatprep.subr.mxu0 0.0
    %2930 = vmatpush2.msra.mxu0 0.0
    %2931 = vmatprep.subr.mxu0 0.0
    %2932 = vmatpush2.msra.mxu0 0.0
    %2933 = vmatprep.subr.mxu0 0.0
    %2934 = vmatpush2.msra.mxu0 0.0
    %2935 = vmatprep.subr.mxu0 0.0
    %2936 = vmatpush2.msra.mxu0 0.0
    %2937 = vmatprep.subr.mxu0 0.0
    %2938 = vmatpush2.msra.mxu0 0.0
    %2939 = vmatprep.mubr.f32.mxu0 0.0
    %2940 = vmatmul.mubr.f32.gmra.mxu0 %v2380
    %v2941 = vpop.f32.mrf.mxu0
    %v2942 = vadd.f32 0.0, %v2941
    %v2943 = vpop.f32.mrf.mxu0
    %2944 = vmatprep.mubr.f32.mxu0 0.0
    %2945 = vmatmul.mubr.f32.gmra.mxu0 %v2383
    %v2946 = vpop.f32.mrf.mxu0
    %v2947 = vadd.f32 0.0, %v2946
    %v2948 = vpop.f32.mrf.mxu0
    %2949 = vdwg.mxu0
    %v2950 = vadd.f32 %v2873, %v2942
    %v2951 = vadd.f32 %v2874, %v2947
    %v2952 = vld [vmem:[%s0 + $0x26] sm:$0xff]
    %v2953 = vld [vmem:[%s0 + $0x2e] sm:$0xff]
    %v2955 = vsel %vm30, %v2952, 0
    %v2958 = vsel %vm30, %v2953, 0
    %2960 = vmatprep.subr.mxu0 0.0
    %2961 = vmatpush1.msra.mxu0 0.0
    %2962 = vmatprep.subr.mxu0 0.0
    %2963 = vmatpush1.msra.mxu0 0.0
    %2964 = vmatprep.subr.mxu0 0.0
    %2965 = vmatpush1.msra.mxu0 0.0
    %2966 = vmatprep.subr.mxu0 0.0
    %2967 = vmatpush1.msra.mxu0 0.0
    %2968 = vmatprep.subr.mxu0 0.0
    %2969 = vmatpush1.msra.mxu0 0.0
    %2970 = vmatprep.subr.mxu0 0.0
    %2971 = vmatpush1.msra.mxu0 0.0
    %2972 = vmatprep.subr.mxu0 0.0
    %2973 = vmatpush1.msra.mxu0 0.0
    %2974 = vmatprep.subr.mxu0 0.0
    %2975 = vmatpush1.msra.mxu0 0.0
    %2976 = vmatprep.subr.mxu0 0.0
    %2977 = vmatpush1.msra.mxu0 0.0
    %2978 = vmatprep.subr.mxu0 0.0
    %2979 = vmatpush1.msra.mxu0 0.0
    %2980 = vmatprep.subr.mxu0 0.0
    %2981 = vmatpush1.msra.mxu0 0.0
    %2982 = vmatprep.subr.mxu0 0.0
    %2983 = vmatpush1.msra.mxu0 0.0
    %2984 = vmatprep.subr.mxu0 0.0
    %2985 = vmatpush1.msra.mxu0 0.0
    %2986 = vmatprep.subr.mxu0 0.0
    %2987 = vmatpush1.msra.mxu0 0.0
    %2988 = vmatprep.subr.mxu0 0.0
    %2989 = vmatpush1.msra.mxu0 0.0
    %2990 = vmatprep.subr.mxu0 0.0
    %2991 = vmatpush1.msra.mxu0 %v1053
    %2992 = vmatprep.subr.mxu0 0.0
    %2993 = vmatpush2.msra.mxu0 0.0
    %2994 = vmatprep.subr.mxu0 0.0
    %2995 = vmatpush2.msra.mxu0 0.0
    %2996 = vmatprep.subr.mxu0 0.0
    %2997 = vmatpush2.msra.mxu0 0.0
    %2998 = vmatprep.subr.mxu0 0.0
    %2999 = vmatpush2.msra.mxu0 0.0
    %3000 = vmatprep.subr.mxu0 0.0
    %3001 = vmatpush2.msra.mxu0 0.0
    %3002 = vmatprep.subr.mxu0 0.0
    %3003 = vmatpush2.msra.mxu0 0.0
    %3004 = vmatprep.subr.mxu0 0.0
    %3005 = vmatpush2.msra.mxu0 0.0
    %3006 = vmatprep.subr.mxu0 0.0
    %3007 = vmatpush2.msra.mxu0 0.0
    %3008 = vmatprep.subr.mxu0 0.0
    %3009 = vmatpush2.msra.mxu0 0.0
    %3010 = vmatprep.subr.mxu0 0.0
    %3011 = vmatpush2.msra.mxu0 0.0
    %3012 = vmatprep.subr.mxu0 0.0
    %3013 = vmatpush2.msra.mxu0 0.0
    %3014 = vmatprep.subr.mxu0 0.0
    %3015 = vmatpush2.msra.mxu0 0.0
    %3016 = vmatprep.subr.mxu0 0.0
    %3017 = vmatpush2.msra.mxu0 0.0
    %3018 = vmatprep.subr.mxu0 0.0
    %3019 = vmatpush2.msra.mxu0 0.0
    %3020 = vmatprep.subr.mxu0 0.0
    %3021 = vmatpush2.msra.mxu0 0.0
    %3022 = vmatprep.subr.mxu0 0.0
    %3023 = vmatpush2.msra.mxu0 0.0
    %3024 = vmatprep.mubr.f32.mxu0 0.0
    %3025 = vmatmul.mubr.f32.gmra.mxu0 %v2955
    %v3026 = vpop.f32.mrf.mxu0
    %v3027 = vadd.f32 0.0, %v3026
    %v3028 = vpop.f32.mrf.mxu0
    %3029 = vmatprep.mubr.f32.mxu0 0.0
    %3030 = vmatmul.mubr.f32.gmra.mxu0 %v2958
    %v3031 = vpop.f32.mrf.mxu0
    %v3032 = vadd.f32 0.0, %v3031
    %v3033 = vpop.f32.mrf.mxu0
    %3034 = vdwg.mxu0
    %v3035 = vadd.f32 %v2950, %v3027
    %v3036 = vadd.f32 %v2951, %v3032
    %v3037 = vld [vmem:[%s0 + $0x28] sm:$0xff]
    %v3038 = vld [vmem:[%s0 + $0x30] sm:$0xff]
    %v3040 = vsel %vm30, %v3037, 0
    %v3043 = vsel %vm30, %v3038, 0
    %3045 = vmatprep.subr.mxu0 0.0
    %3046 = vmatpush1.msra.mxu0 0.0
    %3047 = vmatprep.subr.mxu0 0.0
    %3048 = vmatpush1.msra.mxu0 0.0
    %3049 = vmatprep.subr.mxu0 0.0
    %3050 = vmatpush1.msra.mxu0 0.0
    %3051 = vmatprep.subr.mxu0 0.0
    %3052 = vmatpush1.msra.mxu0 0.0
    %3053 = vmatprep.subr.mxu0 0.0
    %3054 = vmatpush1.msra.mxu0 0.0
    %3055 = vmatprep.subr.mxu0 0.0
    %3056 = vmatpush1.msra.mxu0 0.0
    %3057 = vmatprep.subr.mxu0 0.0
    %3058 = vmatpush1.msra.mxu0 0.0
    %3059 = vmatprep.subr.mxu0 0.0
    %3060 = vmatpush1.msra.mxu0 0.0
    %3061 = vmatprep.subr.mxu0 0.0
    %3062 = vmatpush1.msra.mxu0 0.0
    %3063 = vmatprep.subr.mxu0 0.0
    %3064 = vmatpush1.msra.mxu0 0.0
    %3065 = vmatprep.subr.mxu0 0.0
    %3066 = vmatpush1.msra.mxu0 0.0
    %3067 = vmatprep.subr.mxu0 0.0
    %3068 = vmatpush1.msra.mxu0 0.0
    %3069 = vmatprep.subr.mxu0 0.0
    %3070 = vmatpush1.msra.mxu0 0.0
    %3071 = vmatprep.subr.mxu0 0.0
    %3072 = vmatpush1.msra.mxu0 0.0
    %3073 = vmatprep.subr.mxu0 0.0
    %3074 = vmatpush1.msra.mxu0 0.0
    %3075 = vmatprep.subr.mxu0 0.0
    %3076 = vmatpush1.msra.mxu0 %v1140
    %3077 = vmatprep.subr.mxu0 0.0
    %3078 = vmatpush2.msra.mxu0 0.0
    %3079 = vmatprep.subr.mxu0 0.0
    %3080 = vmatpush2.msra.mxu0 0.0
    %3081 = vmatprep.subr.mxu0 0.0
    %3082 = vmatpush2.msra.mxu0 0.0
    %3083 = vmatprep.subr.mxu0 0.0
    %3084 = vmatpush2.msra.mxu0 0.0
    %3085 = vmatprep.subr.mxu0 0.0
    %3086 = vmatpush2.msra.mxu0 0.0
    %3087 = vmatprep.subr.mxu0 0.0
    %3088 = vmatpush2.msra.mxu0 0.0
    %3089 = vmatprep.subr.mxu0 0.0
    %3090 = vmatpush2.msra.mxu0 0.0
    %3091 = vmatprep.subr.mxu0 0.0
    %3092 = vmatpush2.msra.mxu0 0.0
    %3093 = vmatprep.subr.mxu0 0.0
    %3094 = vmatpush2.msra.mxu0 0.0
    %3095 = vmatprep.subr.mxu0 0.0
    %3096 = vmatpush2.msra.mxu0 0.0
    %3097 = vmatprep.subr.mxu0 0.0
    %3098 = vmatpush2.msra.mxu0 0.0
    %3099 = vmatprep.subr.mxu0 0.0
    %3100 = vmatpush2.msra.mxu0 0.0
    %3101 = vmatprep.subr.mxu0 0.0
    %3102 = vmatpush2.msra.mxu0 0.0
    %3103 = vmatprep.subr.mxu0 0.0
    %3104 = vmatpush2.msra.mxu0 0.0
    %3105 = vmatprep.subr.mxu0 0.0
    %3106 = vmatpush2.msra.mxu0 0.0
    %3107 = vmatprep.subr.mxu0 0.0
    %3108 = vmatpush2.msra.mxu0 0.0
    %3109 = vmatprep.mubr.f32.mxu0 0.0
    %3110 = vmatmul.mubr.f32.gmra.mxu0 %v3040
    %v3111 = vpop.f32.mrf.mxu0
    %v3112 = vadd.f32 0.0, %v3111
    %v3113 = vpop.f32.mrf.mxu0
    %3114 = vmatprep.mubr.f32.mxu0 0.0
    %3115 = vmatmul.mubr.f32.gmra.mxu0 %v3043
    %v3116 = vpop.f32.mrf.mxu0
    %v3117 = vadd.f32 0.0, %v3116
    %v3118 = vpop.f32.mrf.mxu0
    %3119 = vdwg.mxu0
    %v3120 = vadd.f32 %v3035, %v3112
    %v3121 = vadd.f32 %v3036, %v3117
    %v3122 = vadd.f32 %v3120, %v1230
    %v3123 = vadd.f32 %v3121, %v1230
    %vm3124 = vcmp.ge.f32.partialorder %v3122, 0.0
    %vm3125 = vcmp.ge.f32.partialorder %v3123, 0.0
    %v3126 = vmul.f32 %v3122, 0.01
    %v3127 = vmul.f32 %v3123, 0.01
    %v3128 = vsel %vm3124, %v3122, %v3126
    %v3129 = vsel %vm3125, %v3123, %v3127
    %v3132 = vrot.slane %v3128, 5
    %v3133 = vrot.slane %v3129, 5
    %v3134 = vsel %vm1242, %v3132, %v3133
    %v3137 = vsel %vm1242, 0.0, %v3132
    %v3138 = vsel %vm1242, %v3133, 0.0
    %v3141 = vrot.slane %v3137, 1
    %v3142 = vrot.slane %v3134, 1
    %v3143 = vsel %vm1256, %v3141, %v3142
    %v3144 = vrot.slane %v3138, 1
    %v3145 = vsel %vm1256, %v3142, %v3144
    %v3146 = vsel %vm30, %v3143, 0
    %v3148 = vsel %vm30, %v3145, 0
    %3150 = vmatprep.subr.mxu0 0.0
    %3151 = vmatpush1.msra.mxu0 0.0
    %3152 = vmatprep.subr.mxu0 0.0
    %3153 = vmatpush1.msra.mxu0 0.0
    %3154 = vmatprep.subr.mxu0 0.0
    %3155 = vmatpush1.msra.mxu0 0.0
    %3156 = vmatprep.subr.mxu0 0.0
    %3157 = vmatpush1.msra.mxu0 0.0
    %3158 = vmatprep.subr.mxu0 0.0
    %3159 = vmatpush1.msra.mxu0 0.0
    %3160 = vmatprep.subr.mxu0 0.0
    %3161 = vmatpush1.msra.mxu0 0.0
    %3162 = vmatprep.subr.mxu0 0.0
    %3163 = vmatpush1.msra.mxu0 0.0
    %3164 = vmatprep.subr.mxu0 0.0
    %3165 = vmatpush1.msra.mxu0 0.0
    %3166 = vmatprep.subr.mxu0 0.0
    %3167 = vmatpush1.msra.mxu0 0.0
    %3168 = vmatprep.subr.mxu0 0.0
    %3169 = vmatpush1.msra.mxu0 0.0
    %3170 = vmatprep.subr.mxu0 0.0
    %3171 = vmatpush1.msra.mxu0 0.0
    %3172 = vmatprep.subr.mxu0 0.0
    %3173 = vmatpush1.msra.mxu0 0.0
    %3174 = vmatprep.subr.mxu0 0.0
    %3175 = vmatpush1.msra.mxu0 0.0
    %3176 = vmatprep.subr.mxu0 0.0
    %3177 = vmatpush1.msra.mxu0 0.0
    %3178 = vmatprep.subr.mxu0 0.0
    %3179 = vmatpush1.msra.mxu0 0.0
    %3180 = vmatprep.subr.mxu0 0.0
    %3181 = vmatpush1.msra.mxu0 %v1253
    %3182 = vmatprep.subr.mxu0 0.0
    %3183 = vmatpush2.msra.mxu0 0.0
    %3184 = vmatprep.subr.mxu0 0.0
    %3185 = vmatpush2.msra.mxu0 0.0
    %3186 = vmatprep.subr.mxu0 0.0
    %3187 = vmatpush2.msra.mxu0 0.0
    %3188 = vmatprep.subr.mxu0 0.0
    %3189 = vmatpush2.msra.mxu0 0.0
    %3190 = vmatprep.subr.mxu0 0.0
    %3191 = vmatpush2.msra.mxu0 0.0
    %3192 = vmatprep.subr.mxu0 0.0
    %3193 = vmatpush2.msra.mxu0 0.0
    %3194 = vmatprep.subr.mxu0 0.0
    %3195 = vmatpush2.msra.mxu0 0.0
    %3196 = vmatprep.subr.mxu0 0.0
    %3197 = vmatpush2.msra.mxu0 0.0
    %3198 = vmatprep.subr.mxu0 0.0
    %3199 = vmatpush2.msra.mxu0 0.0
    %3200 = vmatprep.subr.mxu0 0.0
    %3201 = vmatpush2.msra.mxu0 0.0
    %3202 = vmatprep.subr.mxu0 0.0
    %3203 = vmatpush2.msra.mxu0 0.0
    %3204 = vmatprep.subr.mxu0 0.0
    %3205 = vmatpush2.msra.mxu0 0.0
    %3206 = vmatprep.subr.mxu0 0.0
    %3207 = vmatpush2.msra.mxu0 0.0
    %3208 = vmatprep.subr.mxu0 0.0
    %3209 = vmatpush2.msra.mxu0 0.0
    %3210 = vmatprep.subr.mxu0 0.0
    %3211 = vmatpush2.msra.mxu0 0.0
    %3212 = vmatprep.subr.mxu0 0.0
    %3213 = vmatpush2.msra.mxu0 0.0
    %3214 = vmatprep.mubr.f32.mxu0 0.0
    %3215 = vmatmul.mubr.f32.gmra.mxu0 %v3146
    %v3216 = vpop.f32.mrf.mxu0
    %v3217 = vadd.f32 0.0, %v3216
    %v3218 = vpop.f32.mrf.mxu0
    %3219 = vmatprep.mubr.f32.mxu0 0.0
    %3220 = vmatmul.mubr.f32.gmra.mxu0 %v3148
    %v3221 = vpop.f32.mrf.mxu0
    %v3222 = vadd.f32 0.0, %v3221
    %v3223 = vpop.f32.mrf.mxu0
    %3224 = vdwg.mxu0
    %v3225 = vsel %vm30, %v3137, 0
    %v3227 = vsel %vm30, %v3134, 0
    %3229 = vmatprep.subr.mxu0 0.0
    %3230 = vmatpush1.msra.mxu0 0.0
    %3231 = vmatprep.subr.mxu0 0.0
    %3232 = vmatpush1.msra.mxu0 0.0
    %3233 = vmatprep.subr.mxu0 0.0
    %3234 = vmatpush1.msra.mxu0 0.0
    %3235 = vmatprep.subr.mxu0 0.0
    %3236 = vmatpush1.msra.mxu0 0.0
    %3237 = vmatprep.subr.mxu0 0.0
    %3238 = vmatpush1.msra.mxu0 0.0
    %3239 = vmatprep.subr.mxu0 0.0
    %3240 = vmatpush1.msra.mxu0 0.0
    %3241 = vmatprep.subr.mxu0 0.0
    %3242 = vmatpush1.msra.mxu0 0.0
    %3243 = vmatprep.subr.mxu0 0.0
    %3244 = vmatpush1.msra.mxu0 0.0
    %3245 = vmatprep.subr.mxu0 0.0
    %3246 = vmatpush1.msra.mxu0 0.0
    %3247 = vmatprep.subr.mxu0 0.0
    %3248 = vmatpush1.msra.mxu0 0.0
    %3249 = vmatprep.subr.mxu0 0.0
    %3250 = vmatpush1.msra.mxu0 0.0
    %3251 = vmatprep.subr.mxu0 0.0
    %3252 = vmatpush1.msra.mxu0 0.0
    %3253 = vmatprep.subr.mxu0 0.0
    %3254 = vmatpush1.msra.mxu0 0.0
    %3255 = vmatprep.subr.mxu0 0.0
    %3256 = vmatpush1.msra.mxu0 0.0
    %3257 = vmatprep.subr.mxu0 0.0
    %3258 = vmatpush1.msra.mxu0 0.0
    %3259 = vmatprep.subr.mxu0 0.0
    %3260 = vmatpush1.msra.mxu0 %v1251
    %3261 = vmatprep.subr.mxu0 0.0
    %3262 = vmatpush2.msra.mxu0 0.0
    %3263 = vmatprep.subr.mxu0 0.0
    %3264 = vmatpush2.msra.mxu0 0.0
    %3265 = vmatprep.subr.mxu0 0.0
    %3266 = vmatpush2.msra.mxu0 0.0
    %3267 = vmatprep.subr.mxu0 0.0
    %3268 = vmatpush2.msra.mxu0 0.0
    %3269 = vmatprep.subr.mxu0 0.0
    %3270 = vmatpush2.msra.mxu0 0.0
    %3271 = vmatprep.subr.mxu0 0.0
    %3272 = vmatpush2.msra.mxu0 0.0
    %3273 = vmatprep.subr.mxu0 0.0
    %3274 = vmatpush2.msra.mxu0 0.0
    %3275 = vmatprep.subr.mxu0 0.0
    %3276 = vmatpush2.msra.mxu0 0.0
    %3277 = vmatprep.subr.mxu0 0.0
    %3278 = vmatpush2.msra.mxu0 0.0
    %3279 = vmatprep.subr.mxu0 0.0
    %3280 = vmatpush2.msra.mxu0 0.0
    %3281 = vmatprep.subr.mxu0 0.0
    %3282 = vmatpush2.msra.mxu0 0.0
    %3283 = vmatprep.subr.mxu0 0.0
    %3284 = vmatpush2.msra.mxu0 0.0
    %3285 = vmatprep.subr.mxu0 0.0
    %3286 = vmatpush2.msra.mxu0 0.0
    %3287 = vmatprep.subr.mxu0 0.0
    %3288 = vmatpush2.msra.mxu0 0.0
    %3289 = vmatprep.subr.mxu0 0.0
    %3290 = vmatpush2.msra.mxu0 0.0
    %3291 = vmatprep.subr.mxu0 0.0
    %3292 = vmatpush2.msra.mxu0 0.0
    %3293 = vmatprep.mubr.f32.mxu0 0.0
    %3294 = vmatmul.mubr.f32.gmra.mxu0 %v3225
    %v3295 = vpop.f32.mrf.mxu0
    %v3296 = vadd.f32 %v3217, %v3295
    %v3297 = vpop.f32.mrf.mxu0
    %3298 = vmatprep.mubr.f32.mxu0 0.0
    %3299 = vmatmul.mubr.f32.gmra.mxu0 %v3227
    %v3300 = vpop.f32.mrf.mxu0
    %v3301 = vadd.f32 %v3222, %v3300
    %v3302 = vpop.f32.mrf.mxu0
    %3303 = vdwg.mxu0
    %v3304 = vrot.slane %v3137, 2
    %v3305 = vrot.slane %v3134, 2
    %v3306 = vsel %vm1422, %v3304, %v3305
    %v3307 = vrot.slane %v3138, 2
    %v3308 = vsel %vm1422, %v3305, %v3307
    %v3309 = vsel %vm30, %v3306, 0
    %v3311 = vsel %vm30, %v3308, 0
    %3313 = vmatprep.subr.mxu0 0.0
    %3314 = vmatpush1.msra.mxu0 0.0
    %3315 = vmatprep.subr.mxu0 0.0
    %3316 = vmatpush1.msra.mxu0 0.0
    %3317 = vmatprep.subr.mxu0 0.0
    %3318 = vmatpush1.msra.mxu0 0.0
    %3319 = vmatprep.subr.mxu0 0.0
    %3320 = vmatpush1.msra.mxu0 0.0
    %3321 = vmatprep.subr.mxu0 0.0
    %3322 = vmatpush1.msra.mxu0 0.0
    %3323 = vmatprep.subr.mxu0 0.0
    %3324 = vmatpush1.msra.mxu0 0.0
    %3325 = vmatprep.subr.mxu0 0.0
    %3326 = vmatpush1.msra.mxu0 0.0
    %3327 = vmatprep.subr.mxu0 0.0
    %3328 = vmatpush1.msra.mxu0 0.0
    %3329 = vmatprep.subr.mxu0 0.0
    %3330 = vmatpush1.msra.mxu0 0.0
    %3331 = vmatprep.subr.mxu0 0.0
    %3332 = vmatpush1.msra.mxu0 0.0
    %3333 = vmatprep.subr.mxu0 0.0
    %3334 = vmatpush1.msra.mxu0 0.0
    %3335 = vmatprep.subr.mxu0 0.0
    %3336 = vmatpush1.msra.mxu0 0.0
    %3337 = vmatprep.subr.mxu0 0.0
    %3338 = vmatpush1.msra.mxu0 0.0
    %3339 = vmatprep.subr.mxu0 0.0
    %3340 = vmatpush1.msra.mxu0 0.0
    %3341 = vmatprep.subr.mxu0 0.0
    %3342 = vmatpush1.msra.mxu0 0.0
    %3343 = vmatprep.subr.mxu0 0.0
    %3344 = vmatpush1.msra.mxu0 %v1421
    %3345 = vmatprep.subr.mxu0 0.0
    %3346 = vmatpush2.msra.mxu0 0.0
    %3347 = vmatprep.subr.mxu0 0.0
    %3348 = vmatpush2.msra.mxu0 0.0
    %3349 = vmatprep.subr.mxu0 0.0
    %3350 = vmatpush2.msra.mxu0 0.0
    %3351 = vmatprep.subr.mxu0 0.0
    %3352 = vmatpush2.msra.mxu0 0.0
    %3353 = vmatprep.subr.mxu0 0.0
    %3354 = vmatpush2.msra.mxu0 0.0
    %3355 = vmatprep.subr.mxu0 0.0
    %3356 = vmatpush2.msra.mxu0 0.0
    %3357 = vmatprep.subr.mxu0 0.0
    %3358 = vmatpush2.msra.mxu0 0.0
    %3359 = vmatprep.subr.mxu0 0.0
    %3360 = vmatpush2.msra.mxu0 0.0
    %3361 = vmatprep.subr.mxu0 0.0
    %3362 = vmatpush2.msra.mxu0 0.0
    %3363 = vmatprep.subr.mxu0 0.0
    %3364 = vmatpush2.msra.mxu0 0.0
    %3365 = vmatprep.subr.mxu0 0.0
    %3366 = vmatpush2.msra.mxu0 0.0
    %3367 = vmatprep.subr.mxu0 0.0
    %3368 = vmatpush2.msra.mxu0 0.0
    %3369 = vmatprep.subr.mxu0 0.0
    %3370 = vmatpush2.msra.mxu0 0.0
    %3371 = vmatprep.subr.mxu0 0.0
    %3372 = vmatpush2.msra.mxu0 0.0
    %3373 = vmatprep.subr.mxu0 0.0
    %3374 = vmatpush2.msra.mxu0 0.0
    %3375 = vmatprep.subr.mxu0 0.0
    %3376 = vmatpush2.msra.mxu0 0.0
    %3377 = vmatprep.mubr.f32.mxu0 0.0
    %3378 = vmatmul.mubr.f32.gmra.mxu0 %v3309
    %v3379 = vpop.f32.mrf.mxu0
    %v3380 = vadd.f32 0.0, %v3379
    %v3381 = vpop.f32.mrf.mxu0
    %3382 = vmatprep.mubr.f32.mxu0 0.0
    %3383 = vmatmul.mubr.f32.gmra.mxu0 %v3311
    %v3384 = vpop.f32.mrf.mxu0
    %v3385 = vadd.f32 0.0, %v3384
    %v3386 = vpop.f32.mrf.mxu0
    %3387 = vdwg.mxu0
    %v3388 = vadd.f32 %v3296, %v3380
    %v3389 = vadd.f32 %v3301, %v3385
    %v3390 = vrot.slane %v3137, 3
    %v3391 = vrot.slane %v3134, 3
    %v3392 = vsel %vm1511, %v3390, %v3391
    %v3393 = vrot.slane %v3138, 3
    %v3394 = vsel %vm1511, %v3391, %v3393
    %v3395 = vsel %vm30, %v3392, 0
    %v3397 = vsel %vm30, %v3394, 0
    %3399 = vmatprep.subr.mxu0 0.0
    %3400 = vmatpush1.msra.mxu0 0.0
    %3401 = vmatprep.subr.mxu0 0.0
    %3402 = vmatpush1.msra.mxu0 0.0
    %3403 = vmatprep.subr.mxu0 0.0
    %3404 = vmatpush1.msra.mxu0 0.0
    %3405 = vmatprep.subr.mxu0 0.0
    %3406 = vmatpush1.msra.mxu0 0.0
    %3407 = vmatprep.subr.mxu0 0.0
    %3408 = vmatpush1.msra.mxu0 0.0
    %3409 = vmatprep.subr.mxu0 0.0
    %3410 = vmatpush1.msra.mxu0 0.0
    %3411 = vmatprep.subr.mxu0 0.0
    %3412 = vmatpush1.msra.mxu0 0.0
    %3413 = vmatprep.subr.mxu0 0.0
    %3414 = vmatpush1.msra.mxu0 0.0
    %3415 = vmatprep.subr.mxu0 0.0
    %3416 = vmatpush1.msra.mxu0 0.0
    %3417 = vmatprep.subr.mxu0 0.0
    %3418 = vmatpush1.msra.mxu0 0.0
    %3419 = vmatprep.subr.mxu0 0.0
    %3420 = vmatpush1.msra.mxu0 0.0
    %3421 = vmatprep.subr.mxu0 0.0
    %3422 = vmatpush1.msra.mxu0 0.0
    %3423 = vmatprep.subr.mxu0 0.0
    %3424 = vmatpush1.msra.mxu0 0.0
    %3425 = vmatprep.subr.mxu0 0.0
    %3426 = vmatpush1.msra.mxu0 0.0
    %3427 = vmatprep.subr.mxu0 0.0
    %3428 = vmatpush1.msra.mxu0 0.0
    %3429 = vmatprep.subr.mxu0 0.0
    %3430 = vmatpush1.msra.mxu0 %v1510
    %3431 = vmatprep.subr.mxu0 0.0
    %3432 = vmatpush2.msra.mxu0 0.0
    %3433 = vmatprep.subr.mxu0 0.0
    %3434 = vmatpush2.msra.mxu0 0.0
    %3435 = vmatprep.subr.mxu0 0.0
    %3436 = vmatpush2.msra.mxu0 0.0
    %3437 = vmatprep.subr.mxu0 0.0
    %3438 = vmatpush2.msra.mxu0 0.0
    %3439 = vmatprep.subr.mxu0 0.0
    %3440 = vmatpush2.msra.mxu0 0.0
    %3441 = vmatprep.subr.mxu0 0.0
    %3442 = vmatpush2.msra.mxu0 0.0
    %3443 = vmatprep.subr.mxu0 0.0
    %3444 = vmatpush2.msra.mxu0 0.0
    %3445 = vmatprep.subr.mxu0 0.0
    %3446 = vmatpush2.msra.mxu0 0.0
    %3447 = vmatprep.subr.mxu0 0.0
    %3448 = vmatpush2.msra.mxu0 0.0
    %3449 = vmatprep.subr.mxu0 0.0
    %3450 = vmatpush2.msra.mxu0 0.0
    %3451 = vmatprep.subr.mxu0 0.0
    %3452 = vmatpush2.msra.mxu0 0.0
    %3453 = vmatprep.subr.mxu0 0.0
    %3454 = vmatpush2.msra.mxu0 0.0
    %3455 = vmatprep.subr.mxu0 0.0
    %3456 = vmatpush2.msra.mxu0 0.0
    %3457 = vmatprep.subr.mxu0 0.0
    %3458 = vmatpush2.msra.mxu0 0.0
    %3459 = vmatprep.subr.mxu0 0.0
    %3460 = vmatpush2.msra.mxu0 0.0
    %3461 = vmatprep.subr.mxu0 0.0
    %3462 = vmatpush2.msra.mxu0 0.0
    %3463 = vmatprep.mubr.f32.mxu0 0.0
    %3464 = vmatmul.mubr.f32.gmra.mxu0 %v3395
    %v3465 = vpop.f32.mrf.mxu0
    %v3466 = vadd.f32 0.0, %v3465
    %v3467 = vpop.f32.mrf.mxu0
    %3468 = vmatprep.mubr.f32.mxu0 0.0
    %3469 = vmatmul.mubr.f32.gmra.mxu0 %v3397
    %v3470 = vpop.f32.mrf.mxu0
    %v3471 = vadd.f32 0.0, %v3470
    %v3472 = vpop.f32.mrf.mxu0
    %3473 = vdwg.mxu0
    %v3474 = vadd.f32 %v3388, %v3466
    %v3475 = vadd.f32 %v3389, %v3471
    %v3476 = vrot.slane %v3137, 4
    %v3477 = vrot.slane %v3134, 4
    %v3478 = vsel %vm1600, %v3476, %v3477
    %v3479 = vrot.slane %v3138, 4
    %v3480 = vsel %vm1600, %v3477, %v3479
    %v3481 = vsel %vm30, %v3478, 0
    %v3483 = vsel %vm30, %v3480, 0
    %3485 = vmatprep.subr.mxu0 0.0
    %3486 = vmatpush1.msra.mxu0 0.0
    %3487 = vmatprep.subr.mxu0 0.0
    %3488 = vmatpush1.msra.mxu0 0.0
    %3489 = vmatprep.subr.mxu0 0.0
    %3490 = vmatpush1.msra.mxu0 0.0
    %3491 = vmatprep.subr.mxu0 0.0
    %3492 = vmatpush1.msra.mxu0 0.0
    %3493 = vmatprep.subr.mxu0 0.0
    %3494 = vmatpush1.msra.mxu0 0.0
    %3495 = vmatprep.subr.mxu0 0.0
    %3496 = vmatpush1.msra.mxu0 0.0
    %3497 = vmatprep.subr.mxu0 0.0
    %3498 = vmatpush1.msra.mxu0 0.0
    %3499 = vmatprep.subr.mxu0 0.0
    %3500 = vmatpush1.msra.mxu0 0.0
    %3501 = vmatprep.subr.mxu0 0.0
    %3502 = vmatpush1.msra.mxu0 0.0
    %3503 = vmatprep.subr.mxu0 0.0
    %3504 = vmatpush1.msra.mxu0 0.0
    %3505 = vmatprep.subr.mxu0 0.0
    %3506 = vmatpush1.msra.mxu0 0.0
    %3507 = vmatprep.subr.mxu0 0.0
    %3508 = vmatpush1.msra.mxu0 0.0
    %3509 = vmatprep.subr.mxu0 0.0
    %3510 = vmatpush1.msra.mxu0 0.0
    %3511 = vmatprep.subr.mxu0 0.0
    %3512 = vmatpush1.msra.mxu0 0.0
    %3513 = vmatprep.subr.mxu0 0.0
    %3514 = vmatpush1.msra.mxu0 0.0
    %3515 = vmatprep.subr.mxu0 0.0
    %3516 = vmatpush1.msra.mxu0 %v1599
    %3517 = vmatprep.subr.mxu0 0.0
    %3518 = vmatpush2.msra.mxu0 0.0
    %3519 = vmatprep.subr.mxu0 0.0
    %3520 = vmatpush2.msra.mxu0 0.0
    %3521 = vmatprep.subr.mxu0 0.0
    %3522 = vmatpush2.msra.mxu0 0.0
    %3523 = vmatprep.subr.mxu0 0.0
    %3524 = vmatpush2.msra.mxu0 0.0
    %3525 = vmatprep.subr.mxu0 0.0
    %3526 = vmatpush2.msra.mxu0 0.0
    %3527 = vmatprep.subr.mxu0 0.0
    %3528 = vmatpush2.msra.mxu0 0.0
    %3529 = vmatprep.subr.mxu0 0.0
    %3530 = vmatpush2.msra.mxu0 0.0
    %3531 = vmatprep.subr.mxu0 0.0
    %3532 = vmatpush2.msra.mxu0 0.0
    %3533 = vmatprep.subr.mxu0 0.0
    %3534 = vmatpush2.msra.mxu0 0.0
    %3535 = vmatprep.subr.mxu0 0.0
    %3536 = vmatpush2.msra.mxu0 0.0
    %3537 = vmatprep.subr.mxu0 0.0
    %3538 = vmatpush2.msra.mxu0 0.0
    %3539 = vmatprep.subr.mxu0 0.0
    %3540 = vmatpush2.msra.mxu0 0.0
    %3541 = vmatprep.subr.mxu0 0.0
    %3542 = vmatpush2.msra.mxu0 0.0
    %3543 = vmatprep.subr.mxu0 0.0
    %3544 = vmatpush2.msra.mxu0 0.0
    %3545 = vmatprep.subr.mxu0 0.0
    %3546 = vmatpush2.msra.mxu0 0.0
    %3547 = vmatprep.subr.mxu0 0.0
    %3548 = vmatpush2.msra.mxu0 0.0
    %3549 = vmatprep.mubr.f32.mxu0 0.0
    %3550 = vmatmul.mubr.f32.gmra.mxu0 %v3481
    %v3551 = vpop.f32.mrf.mxu0
    %v3552 = vadd.f32 0.0, %v3551
    %v3553 = vpop.f32.mrf.mxu0
    %3554 = vmatprep.mubr.f32.mxu0 0.0
    %3555 = vmatmul.mubr.f32.gmra.mxu0 %v3483
    %v3556 = vpop.f32.mrf.mxu0
    %v3557 = vadd.f32 0.0, %v3556
    %v3558 = vpop.f32.mrf.mxu0
    %3559 = vdwg.mxu0
    %v3560 = vadd.f32 %v3474, %v3552
    %v3561 = vadd.f32 %v3475, %v3557
    %v3562 = vrot.slane %v3137, 5
    %v3563 = vrot.slane %v3134, 5
    %v3564 = vsel %vm1242, %v3562, %v3563
    %v3565 = vrot.slane %v3138, 5
    %v3566 = vsel %vm1242, %v3563, %v3565
    %v3567 = vsel %vm30, %v3564, 0
    %v3569 = vsel %vm30, %v3566, 0
    %3571 = vmatprep.subr.mxu0 0.0
    %3572 = vmatpush1.msra.mxu0 0.0
    %3573 = vmatprep.subr.mxu0 0.0
    %3574 = vmatpush1.msra.mxu0 0.0
    %3575 = vmatprep.subr.mxu0 0.0
    %3576 = vmatpush1.msra.mxu0 0.0
    %3577 = vmatprep.subr.mxu0 0.0
    %3578 = vmatpush1.msra.mxu0 0.0
    %3579 = vmatprep.subr.mxu0 0.0
    %3580 = vmatpush1.msra.mxu0 0.0
    %3581 = vmatprep.subr.mxu0 0.0
    %3582 = vmatpush1.msra.mxu0 0.0
    %3583 = vmatprep.subr.mxu0 0.0
    %3584 = vmatpush1.msra.mxu0 0.0
    %3585 = vmatprep.subr.mxu0 0.0
    %3586 = vmatpush1.msra.mxu0 0.0
    %3587 = vmatprep.subr.mxu0 0.0
    %3588 = vmatpush1.msra.mxu0 0.0
    %3589 = vmatprep.subr.mxu0 0.0
    %3590 = vmatpush1.msra.mxu0 0.0
    %3591 = vmatprep.subr.mxu0 0.0
    %3592 = vmatpush1.msra.mxu0 0.0
    %3593 = vmatprep.subr.mxu0 0.0
    %3594 = vmatpush1.msra.mxu0 0.0
    %3595 = vmatprep.subr.mxu0 0.0
    %3596 = vmatpush1.msra.mxu0 0.0
    %3597 = vmatprep.subr.mxu0 0.0
    %3598 = vmatpush1.msra.mxu0 0.0
    %3599 = vmatprep.subr.mxu0 0.0
    %3600 = vmatpush1.msra.mxu0 0.0
    %3601 = vmatprep.subr.mxu0 0.0
    %3602 = vmatpush1.msra.mxu0 %v1688
    %3603 = vmatprep.subr.mxu0 0.0
    %3604 = vmatpush2.msra.mxu0 0.0
    %3605 = vmatprep.subr.mxu0 0.0
    %3606 = vmatpush2.msra.mxu0 0.0
    %3607 = vmatprep.subr.mxu0 0.0
    %3608 = vmatpush2.msra.mxu0 0.0
    %3609 = vmatprep.subr.mxu0 0.0
    %3610 = vmatpush2.msra.mxu0 0.0
    %3611 = vmatprep.subr.mxu0 0.0
    %3612 = vmatpush2.msra.mxu0 0.0
    %3613 = vmatprep.subr.mxu0 0.0
    %3614 = vmatpush2.msra.mxu0 0.0
    %3615 = vmatprep.subr.mxu0 0.0
    %3616 = vmatpush2.msra.mxu0 0.0
    %3617 = vmatprep.subr.mxu0 0.0
    %3618 = vmatpush2.msra.mxu0 0.0
    %3619 = vmatprep.subr.mxu0 0.0
    %3620 = vmatpush2.msra.mxu0 0.0
    %3621 = vmatprep.subr.mxu0 0.0
    %3622 = vmatpush2.msra.mxu0 0.0
    %3623 = vmatprep.subr.mxu0 0.0
    %3624 = vmatpush2.msra.mxu0 0.0
    %3625 = vmatprep.subr.mxu0 0.0
    %3626 = vmatpush2.msra.mxu0 0.0
    %3627 = vmatprep.subr.mxu0 0.0
    %3628 = vmatpush2.msra.mxu0 0.0
    %3629 = vmatprep.subr.mxu0 0.0
    %3630 = vmatpush2.msra.mxu0 0.0
    %3631 = vmatprep.subr.mxu0 0.0
    %3632 = vmatpush2.msra.mxu0 0.0
    %3633 = vmatprep.subr.mxu0 0.0
    %3634 = vmatpush2.msra.mxu0 0.0
    %3635 = vmatprep.mubr.f32.mxu0 0.0
    %3636 = vmatmul.mubr.f32.gmra.mxu0 %v3567
    %v3637 = vpop.f32.mrf.mxu0
    %v3638 = vadd.f32 0.0, %v3637
    %v3639 = vpop.f32.mrf.mxu0
    %3640 = vmatprep.mubr.f32.mxu0 0.0
    %3641 = vmatmul.mubr.f32.gmra.mxu0 %v3569
    %v3642 = vpop.f32.mrf.mxu0
    %v3643 = vadd.f32 0.0, %v3642
    %v3644 = vpop.f32.mrf.mxu0
    %3645 = vdwg.mxu0
    %v3646 = vadd.f32 %v3560, %v3638
    %v3647 = vadd.f32 %v3561, %v3643
    %v3648 = vrot.slane %v3137, 6
    %v3649 = vrot.slane %v3134, 6
    %v3650 = vsel %vm1777, %v3648, %v3649
    %v3651 = vrot.slane %v3138, 6
    %v3652 = vsel %vm1777, %v3649, %v3651
    %v3653 = vsel %vm30, %v3650, 0
    %v3655 = vsel %vm30, %v3652, 0
    %3657 = vmatprep.subr.mxu0 0.0
    %3658 = vmatpush1.msra.mxu0 0.0
    %3659 = vmatprep.subr.mxu0 0.0
    %3660 = vmatpush1.msra.mxu0 0.0
    %3661 = vmatprep.subr.mxu0 0.0
    %3662 = vmatpush1.msra.mxu0 0.0
    %3663 = vmatprep.subr.mxu0 0.0
    %3664 = vmatpush1.msra.mxu0 0.0
    %3665 = vmatprep.subr.mxu0 0.0
    %3666 = vmatpush1.msra.mxu0 0.0
    %3667 = vmatprep.subr.mxu0 0.0
    %3668 = vmatpush1.msra.mxu0 0.0
    %3669 = vmatprep.subr.mxu0 0.0
    %3670 = vmatpush1.msra.mxu0 0.0
    %3671 = vmatprep.subr.mxu0 0.0
    %3672 = vmatpush1.msra.mxu0 0.0
    %3673 = vmatprep.subr.mxu0 0.0
    %3674 = vmatpush1.msra.mxu0 0.0
    %3675 = vmatprep.subr.mxu0 0.0
    %3676 = vmatpush1.msra.mxu0 0.0
    %3677 = vmatprep.subr.mxu0 0.0
    %3678 = vmatpush1.msra.mxu0 0.0
    %3679 = vmatprep.subr.mxu0 0.0
    %3680 = vmatpush1.msra.mxu0 0.0
    %3681 = vmatprep.subr.mxu0 0.0
    %3682 = vmatpush1.msra.mxu0 0.0
    %3683 = vmatprep.subr.mxu0 0.0
    %3684 = vmatpush1.msra.mxu0 0.0
    %3685 = vmatprep.subr.mxu0 0.0
    %3686 = vmatpush1.msra.mxu0 0.0
    %3687 = vmatprep.subr.mxu0 0.0
    %3688 = vmatpush1.msra.mxu0 %v1776
    %3689 = vmatprep.subr.mxu0 0.0
    %3690 = vmatpush2.msra.mxu0 0.0
    %3691 = vmatprep.subr.mxu0 0.0
    %3692 = vmatpush2.msra.mxu0 0.0
    %3693 = vmatprep.subr.mxu0 0.0
    %3694 = vmatpush2.msra.mxu0 0.0
    %3695 = vmatprep.subr.mxu0 0.0
    %3696 = vmatpush2.msra.mxu0 0.0
    %3697 = vmatprep.subr.mxu0 0.0
    %3698 = vmatpush2.msra.mxu0 0.0
    %3699 = vmatprep.subr.mxu0 0.0
    %3700 = vmatpush2.msra.mxu0 0.0
    %3701 = vmatprep.subr.mxu0 0.0
    %3702 = vmatpush2.msra.mxu0 0.0
    %3703 = vmatprep.subr.mxu0 0.0
    %3704 = vmatpush2.msra.mxu0 0.0
    %3705 = vmatprep.subr.mxu0 0.0
    %3706 = vmatpush2.msra.mxu0 0.0
    %3707 = vmatprep.subr.mxu0 0.0
    %3708 = vmatpush2.msra.mxu0 0.0
    %3709 = vmatprep.subr.mxu0 0.0
    %3710 = vmatpush2.msra.mxu0 0.0
    %3711 = vmatprep.subr.mxu0 0.0
    %3712 = vmatpush2.msra.mxu0 0.0
    %3713 = vmatprep.subr.mxu0 0.0
    %3714 = vmatpush2.msra.mxu0 0.0
    %3715 = vmatprep.subr.mxu0 0.0
    %3716 = vmatpush2.msra.mxu0 0.0
    %3717 = vmatprep.subr.mxu0 0.0
    %3718 = vmatpush2.msra.mxu0 0.0
    %3719 = vmatprep.subr.mxu0 0.0
    %3720 = vmatpush2.msra.mxu0 0.0
    %3721 = vmatprep.mubr.f32.mxu0 0.0
    %3722 = vmatmul.mubr.f32.gmra.mxu0 %v3653
    %v3723 = vpop.f32.mrf.mxu0
    %v3724 = vadd.f32 0.0, %v3723
    %v3725 = vpop.f32.mrf.mxu0
    %3726 = vmatprep.mubr.f32.mxu0 0.0
    %3727 = vmatmul.mubr.f32.gmra.mxu0 %v3655
    %v3728 = vpop.f32.mrf.mxu0
    %v3729 = vadd.f32 0.0, %v3728
    %v3730 = vpop.f32.mrf.mxu0
    %3731 = vdwg.mxu0
    %v3732 = vadd.f32 %v3646, %v3724
    %v3733 = vadd.f32 %v3647, %v3729
    %v3734 = vadd.f32 %v3732, %v1870
    %v3735 = vadd.f32 %v3733, %v1870
    %vm3736 = vcmp.ge.f32.partialorder %v3734, 0.0
    %vm3737 = vcmp.ge.f32.partialorder %v3735, 0.0
    %v3738 = vmul.f32 %v3734, 0.01
    %v3739 = vmul.f32 %v3735, 0.01
    %v3740 = vsel %vm3736, %v3734, %v3738
    %v3741 = vsel %vm3737, %v3735, %v3739
    %v3742 = vadd.f32 %v2553, %v3740
    %v3743 = vadd.f32 %v2554, %v3741
    %3744 = vmatprep.subr.mxu0 0.0
    %3745 = vmatpush1.msra.mxu0 0.0
    %3746 = vmatprep.subr.mxu0 0.0
    %3747 = vmatpush1.msra.mxu0 0.0
    %3748 = vmatprep.subr.mxu0 0.0
    %3749 = vmatpush1.msra.mxu0 0.0
    %3750 = vmatprep.subr.mxu0 0.0
    %3751 = vmatpush1.msra.mxu0 0.0
    %3752 = vmatprep.subr.mxu0 0.0
    %3753 = vmatpush1.msra.mxu0 0.0
    %3754 = vmatprep.subr.mxu0 0.0
    %3755 = vmatpush1.msra.mxu0 0.0
    %3756 = vmatprep.subr.mxu0 0.0
    %3757 = vmatpush1.msra.mxu0 0.0
    %3758 = vmatprep.subr.mxu0 0.0
    %3759 = vmatpush1.msra.mxu0 0.0
    %3760 = vmatprep.subr.mxu0 0.0
    %3761 = vmatpush1.msra.mxu0 0.0
    %3762 = vmatprep.subr.mxu0 0.0
    %3763 = vmatpush1.msra.mxu0 0.0
    %3764 = vmatprep.subr.mxu0 0.0
    %3765 = vmatpush1.msra.mxu0 0.0
    %3766 = vmatprep.subr.mxu0 0.0
    %3767 = vmatpush1.msra.mxu0 0.0
    %3768 = vmatprep.subr.mxu0 0.0
    %3769 = vmatpush1.msra.mxu0 0.0
    %3770 = vmatprep.subr.mxu0 0.0
    %3771 = vmatpush1.msra.mxu0 0.0
    %3772 = vmatprep.subr.mxu0 0.0
    %3773 = vmatpush1.msra.mxu0 %v3743
    %3774 = vmatprep.subr.mxu0 0.0
    %3775 = vmatpush1.msra.mxu0 %v3742
    %3776 = vmatprep.subr.mxu0 0.0
    %3777 = vmatpush2.msra.mxu0 0.0
    %3778 = vmatprep.subr.mxu0 0.0
    %3779 = vmatpush2.msra.mxu0 0.0
    %3780 = vmatprep.subr.mxu0 0.0
    %3781 = vmatpush2.msra.mxu0 0.0
    %3782 = vmatprep.subr.mxu0 0.0
    %3783 = vmatpush2.msra.mxu0 0.0
    %3784 = vmatprep.subr.mxu0 0.0
    %3785 = vmatpush2.msra.mxu0 0.0
    %3786 = vmatprep.subr.mxu0 0.0
    %3787 = vmatpush2.msra.mxu0 0.0
    %3788 = vmatprep.subr.mxu0 0.0
    %3789 = vmatpush2.msra.mxu0 0.0
    %3790 = vmatprep.subr.mxu0 0.0
    %3791 = vmatpush2.msra.mxu0 0.0
    %3792 = vmatprep.subr.mxu0 0.0
    %3793 = vmatpush2.msra.mxu0 0.0
    %3794 = vmatprep.subr.mxu0 0.0
    %3795 = vmatpush2.msra.mxu0 0.0
    %3796 = vmatprep.subr.mxu0 0.0
    %3797 = vmatpush2.msra.mxu0 0.0
    %3798 = vmatprep.subr.mxu0 0.0
    %3799 = vmatpush2.msra.mxu0 0.0
    %3800 = vmatprep.subr.mxu0 0.0
    %3801 = vmatpush2.msra.mxu0 0.0
    %3802 = vmatprep.subr.mxu0 0.0
    %3803 = vmatpush2.msra.mxu0 0.0
    %3804 = vmatprep.subr.mxu0 0.0
    %3805 = vmatpush2.msra.mxu0 0.0
    %3806 = vmatprep.subr.mxu0 0.0
    %3807 = vmatpush2.msra.mxu0 0.0
    %3808 = vmatprep.mubr.f32.mxu0 0.0
    %3809 = vmatmul.mubr.f32.gmra.mxu0 %v1884
    %v3810 = vpop.f32.mrf.mxu0
    %v3811 = vadd.f32 0.0, %v3810
    %v3812 = vpop.f32.mrf.mxu0
    %3813 = vdwg.mxu0
    %v3815 = vrot.slane %v3811, 4
    %v3817 = vsel %vm1600, %v1953, %v3815
    %3818 = vst.msk [vmem:[#allocation2] sm:$0xff] %vm30, %v3817
    // Predicated region
    $region14: #{dilation_block.1} parent=1 // pred_check
      _
    $region15: #{dilation_block.1} parent=1 // pred_check_branch
      %3820 = sbr.rel (0) target = $region17
    $region16: #{dilation_block.1} parent=1 // pred_region
      %s3822 = ssub.s32 128, 128
      %3823 = vsyncadd [#allocation3], %s3822
      %s3825 = sshll.u32 [#allocation2], 4
      %s3826 = int_to_ptr.vmem [resolvable:$true] %s3825
      %3828 = dma.vmem_to_hbm [thread:$0]  %s3826, 128, %s3, [#allocation3]
    $region17: #{dilation_block.1} parent=1 // pred_fallthru
      _
    // Predicated region
    $region18: #{dilation_block.1} parent=1 // pred_check
      _
    $region19: #{dilation_block.1} parent=1 // pred_check_branch
      %3830 = sbr.rel (0) target = $region21
    $region20: #{dilation_block.1} parent=1 // pred_region
      %3831 = dma.done [#allocation3], 128
    $region21: #{dilation_block.1} parent=1 // pred_fallthru
      _
    %3832 = vsyncpa [#allocation3], 1

</llo_original>
